<compile_context>
chip_gen: v7x
topology: tpu7x:2x2x1
jax: 0.10.0
libtpu: 0.0.40
codegen_flags: <defaults>
</compile_context>

<pallas_src>
import numpy as np
import jax
import jax.numpy as jnp
from jax.experimental import pallas as pl
from jax.experimental.pallas import tpu as pltpu

# ----------------------------- problem constants -----------------------------
N_WIRES = 9
N_LAYERS = 9
DIM = 2 ** N_WIRES  # 512 statevector amplitudes

BATCH = 2
IN_C, IN_H, IN_W = 4, 4, 4
INPUT_DIM = IN_C * IN_H * IN_W   # flatten_input=True
HIDDEN = 32                      # hidden_sizes = (32,)
OUTPUT_DIM = 8                   # output_dim > 0 branch


def _bitpos(wire):
    # wire 0 <-> most-significant bit of the 9-bit basis index
    return N_WIRES - 1 - wire


# -------------------- host-built constant tables ------------------------------
def build_quantum_tables(qw_np, w3_np):
    """Precompute:
      wt   : (512, 1024) bf16 = [Re(W) | Im(W)],  W = diag(phase) @ U_ent^T
             where U_ent is the full BasicEntanglerLayers unitary (depends only
             on the fixed weights qw) and phase[j] = (-i)^popcount(j) is the
             constant phase of the AngleEmbedding product state.
      zw   : (512, 8) f32 = zsigns @ w3   (fused <Z_i> readout + final Linear)
      bits : (9, 512) f32, bits[q, idx] = bit value of wire q in basis index idx
    """
    qw = np.asarray(qw_np, np.float64)
    w3 = np.asarray(w3_np, np.float64)

    def rx2(theta):
        c, s = np.cos(theta / 2.0), np.sin(theta / 2.0)
        return np.array([[c, -1j * s], [-1j * s, c]], np.complex128)

    def cnot_mat(c, t):
        U = np.zeros((DIM, DIM), np.complex128)
        cm, tm = 1 << _bitpos(c), 1 << _bitpos(t)
        for b in range(DIM):
            b2 = b ^ tm if (b & cm) else b
            U[b2, b] = 1.0
        return U

    # Ring of CNOTs: CNOT(0,1), CNOT(1,2), ..., CNOT(8,0) (applied in order).
    u_ring = np.eye(DIM, dtype=np.complex128)
    for c in range(N_WIRES):
        u_ring = cnot_mat(c, (c + 1) % N_WIRES) @ u_ring

    # Full entangler: per layer, per-wire RX then the CNOT ring.
    U = np.eye(DIM, dtype=np.complex128)
    for l in range(N_LAYERS):
        R = np.array([[1.0 + 0j]])
        for q in range(N_WIRES):          # wire 0 is the MSB -> kron in order
            R = np.kron(R, rx2(qw[l, q]))
        U = (u_ring @ R) @ U

    basis = np.arange(DIM)
    popcount = np.array([bin(b).count("1") for b in basis]) % 4
    phase_tbl = np.array([1.0, -1.0j, -1.0, 1.0j], np.complex128)
    phase = phase_tbl[popcount]                       # (-i)^popcount, exact

    W = phase[:, None] * U.T                          # (512, 512) complex
    # bf16 entangler table: halves the dominant HBM->VMEM read, one MXU pass.
    wt = np.concatenate([W.real, W.imag], axis=1)     # (512, 1024) f64

    zsigns = np.stack(
        [1.0 - 2.0 * ((basis >> _bitpos(w)) & 1) for w in range(N_WIRES)], axis=1
    ).astype(np.float64)                              # (512, 9)
    zw = (zsigns @ w3).astype(np.float32)             # (512, 8)

    bits = np.stack(
        [((basis >> _bitpos(q)) & 1).astype(np.float32) for q in range(N_WIRES)],
        axis=0)                                       # (9, 512)

    return (jnp.asarray(wt, dtype=jnp.bfloat16),
            jnp.asarray(zw),
            jnp.asarray(bits))


# ------------------------------- Pallas kernel --------------------------------
def quantum_mlp_kernel(x_ref, w1_ref, b1_ref, w2_ref, b2_ref, wt_ref, zw_ref,
                       bits_ref, b3_ref, out_ref):
    # MLP front: Linear + ReLU + Linear -> embedding angles (B, 9).
    # These matmuls are tiny (B x 64 x 32, B x 32 x 9); keep them exact so the
    # trig arguments are accurate.  Cost is negligible vs. the wt DMA.
    x = x_ref[...]
    h = jnp.maximum(
        jnp.dot(x, w1_ref[...], preferred_element_type=jnp.float32,
                precision=jax.lax.Precision.HIGHEST) + b1_ref[...], 0.0)
    ang = jnp.dot(h, w2_ref[...], preferred_element_type=jnp.float32,
                  precision=jax.lax.Precision.HIGHEST) + b2_ref[...]

    # In-kernel trig (EUP slot), f32: cos/sin of half-angles.
    c = jnp.cos(0.5 * ang)            # (B, 9)
    s = jnp.sin(0.5 * ang)            # (B, 9)

    # AngleEmbedding product-state magnitude (f32 VPU work):
    #   mag[b, idx] = prod_q ( c[b,q] if bit_q(idx)==0 else s[b,q] )
    bits = bits_ref[...]              # (9, 512) constant bit table
    B = x_ref.shape[0]
    mag = jnp.ones((B, DIM), jnp.float32)
    for q in range(N_WIRES):
        cq = c[:, q:q + 1]            # (B, 1)
        sq = s[:, q:q + 1]            # (B, 1)
        bitq = bits[q:q + 1, :]       # (1, 512)
        mag = mag * (cq + (sq - cq) * bitq)

    # Entangler (phase folded in): single bf16 MXU pass, f32 accumulation.
    y = jnp.dot(mag.astype(jnp.bfloat16), wt_ref[...],
                preferred_element_type=jnp.float32)   # (B, 2*DIM)
    re = y[:, :DIM]
    im = y[:, DIM:]
    probs = re * re + im * im         # |psi|^2, (B, 512), f32

    # Fused <Z_i> readout + final Linear(9, 8) in one tiny matmul.
    out_ref[...] = jnp.dot(probs, zw_ref[...],
                           preferred_element_type=jnp.float32) + b3_ref[...]


# ------------------------------- wrapper ---------------------------------------
def quantum_mlp_forward(obs, params, tables):
    w1, b1, w2, b2, _qw, _w3, b3 = params
    wt, zw, bits = tables

    x_flat = obs.reshape(obs.shape[0], -1)            # flatten(1)  (glue)
    B = x_flat.shape[0]
    vmem = pl.BlockSpec(memory_space=pltpu.MemorySpace.VMEM)
    return pl.pallas_call(
        quantum_mlp_kernel,
        out_shape=jax.ShapeDtypeStruct((B, OUTPUT_DIM), jnp.float32),
        in_specs=[vmem] * 9,
        out_specs=vmem,
        compiler_params=pltpu.CompilerParams(vmem_limit_bytes=4 * 1024 * 1024),
    )(x_flat, w1, b1, w2, b2, wt, zw, bits, b3)


# ---------------------------- numpy reference ----------------------------------
# Independent gate-by-gate statevector simulation (validates the algebraic
# shortcuts used inside the kernel / host table builder).
def reference_forward(obs_np, params_np):
    w1, b1, w2, b2, qw, w3, b3 = [np.asarray(p, np.float64) for p in params_np]
    obs = obs_np.reshape(obs_np.shape[0], -1).astype(np.float64)
    h = np.maximum(obs @ w1 + b1, 0.0)
    ang = h @ w2 + b2
    B = obs.shape[0]

    psi = np.zeros((B, DIM), np.complex128)
    psi[:, 0] = 1.0

    def rx(psi, theta, q):
        a = psi.reshape((B,) + (2,) * N_WIRES)
        sel0 = [slice(None)] * (N_WIRES + 1); sel0[1 + q] = 0
        sel1 = [slice(None)] * (N_WIRES + 1); sel1[1 + q] = 1
        a0, a1 = a[tuple(sel0)], a[tuple(sel1)]
        th = np.broadcast_to(np.asarray(theta, np.float64), (B,))
        th = th.reshape((B,) + (1,) * (N_WIRES - 1))
        c, s = np.cos(th / 2), np.sin(th / 2)
        n0 = c * a0 - 1j * s * a1
        n1 = -1j * s * a0 + c * a1
        return np.stack([n0, n1], axis=1 + q).reshape(B, DIM)

    for q in range(N_WIRES):
        psi = rx(psi, ang[:, q], q)

    basis = np.arange(DIM)
    for _l in range(N_LAYERS):
        for q in range(N_WIRES):
            psi = rx(psi, qw[_l, q], q)
        for c_w in range(N_WIRES):
            t_w = (c_w + 1) % N_WIRES
            cm, tm = 1 << _bitpos(c_w), 1 << _bitpos(t_w)
            idx = np.where(basis & cm, basis ^ tm, basis)
            psi = psi[:, idx]

    probs = np.abs(psi) ** 2
    zs = np.stack([1.0 - 2.0 * ((basis >> _bitpos(w)) & 1) for w in range(N_WIRES)],
                  axis=1).astype(np.float64)
    expz = probs @ zs
    return expz @ w3 + b3


# ------------------------------------ main --------------------------------------
if __name__ == "__main__":
    key = jax.random.PRNGKey(0)
    k_x, k_w1, k_b1, k_w2, k_b2, k_qw, k_w3, k_b3 = jax.random.split(key, 8)

    obs = jax.random.normal(k_x, (BATCH, IN_C, IN_H, IN_W), dtype=jnp.float32)

    # Deterministic synthetic parameters (shapes follow the module's __init__).
    w1 = jax.random.normal(k_w1, (INPUT_DIM, HIDDEN), jnp.float32) / np.sqrt(INPUT_DIM)
    b1 = 0.01 * jax.random.normal(k_b1, (1, HIDDEN), jnp.float32)
    w2 = jax.random.normal(k_w2, (HIDDEN, N_WIRES), jnp.float32) / np.sqrt(HIDDEN)
    b2 = 0.01 * jax.random.normal(k_b2, (1, N_WIRES), jnp.float32)
    qw = jax.random.uniform(k_qw, (N_LAYERS, N_WIRES), jnp.float32,
                            minval=0.0, maxval=2.0 * np.pi)   # TorchLayer weights
    w3 = jax.random.normal(k_w3, (N_WIRES, OUTPUT_DIM), jnp.float32) / np.sqrt(N_WIRES)
    b3 = 0.01 * jax.random.normal(k_b3, (1, OUTPUT_DIM), jnp.float32)

    params = (w1, b1, w2, b2, qw, w3, b3)

    # Host-precomputed constant tables (depend only on fixed parameters qw, w3).
    tables = build_quantum_tables(np.asarray(qw), np.asarray(w3))

    out = quantum_mlp_forward(obs, params, tables)
    out = jax.block_until_ready(out)

    ref = reference_forward(np.asarray(obs), [np.asarray(p) for p in params])
    max_err = float(np.max(np.abs(np.asarray(out, np.float64) - ref)))
    if max_err > 5e-2:
        raise RuntimeError(f"kernel mismatch vs reference: max |err| = {max_err}")

    print("KERNEL_OK")
</pallas_src>

<mosaic_0001>
module attributes {stable_mosaic.version = 11 : i64} {
  func.func @quantum_mlp_kernel(%arg0: memref<2x64xf32, #tpu.memory_space<vmem>>, %arg1: memref<64x32xf32, #tpu.memory_space<vmem>>, %arg2: memref<1x32xf32, #tpu.memory_space<vmem>>, %arg3: memref<32x9xf32, #tpu.memory_space<vmem>>, %arg4: memref<1x9xf32, #tpu.memory_space<vmem>>, %arg5: memref<512x1024xbf16, #tpu.memory_space<vmem>>, %arg6: memref<512x8xf32, #tpu.memory_space<vmem>>, %arg7: memref<9x512xf32, #tpu.memory_space<vmem>>, %arg8: memref<1x8xf32, #tpu.memory_space<vmem>>, %arg9: memref<2x8xf32, #tpu.memory_space<vmem>>) attributes {dimension_semantics = [], scalar_prefetch = 0 : i64, scratch_operands = 0 : i64, tpu.core_type = #tpu.core_type<tc>} {
    %c0 = arith.constant 0 : index
    %c0_0 = arith.constant 0 : index
    %0 = vector.load %arg0[%c0, %c0_0] : memref<2x64xf32, #tpu.memory_space<vmem>>, vector<2x64xf32>
    %c0_1 = arith.constant 0 : index
    %c0_2 = arith.constant 0 : index
    %1 = vector.load %arg1[%c0_1, %c0_2] : memref<64x32xf32, #tpu.memory_space<vmem>>, vector<64x32xf32>
    %cst = arith.constant dense<0.000000e+00> : vector<2x32xf32>
    %2 = tpu.matmul %0, %1, %cst {dimension_numbers = #tpu.dot_dimension_numbers<[1], [0], [0], [1], [0, 0, 1, 1], [], []>, precision = #tpu.contract_precision<fp32>} : vector<2x64xf32>, vector<64x32xf32>, vector<2x32xf32> -> vector<2x32xf32>
    %c0_3 = arith.constant 0 : index
    %c0_4 = arith.constant 0 : index
    %3 = vector.load %arg2[%c0_3, %c0_4] : memref<1x32xf32, #tpu.memory_space<vmem>>, vector<1x32xf32>
    %4 = vector.broadcast %3 : vector<1x32xf32> to vector<2x32xf32>
    %5 = arith.addf %2, %4 : vector<2x32xf32>
    %cst_5 = arith.constant 0.000000e+00 : f32
    %6 = vector.broadcast %cst_5 : f32 to vector<2x32xf32>
    %7 = arith.maximumf %5, %6 : vector<2x32xf32>
    %c0_6 = arith.constant 0 : index
    %c0_7 = arith.constant 0 : index
    %8 = vector.load %arg3[%c0_6, %c0_7] : memref<32x9xf32, #tpu.memory_space<vmem>>, vector<32x9xf32>
    %cst_8 = arith.constant dense<0.000000e+00> : vector<2x9xf32>
    %9 = tpu.matmul %7, %8, %cst_8 {dimension_numbers = #tpu.dot_dimension_numbers<[1], [0], [0], [1], [0, 0, 1, 1], [], []>, precision = #tpu.contract_precision<fp32>} : vector<2x32xf32>, vector<32x9xf32>, vector<2x9xf32> -> vector<2x9xf32>
    %c0_9 = arith.constant 0 : index
    %c0_10 = arith.constant 0 : index
    %10 = vector.load %arg4[%c0_9, %c0_10] : memref<1x9xf32, #tpu.memory_space<vmem>>, vector<1x9xf32>
    %11 = vector.broadcast %10 : vector<1x9xf32> to vector<2x9xf32>
    %12 = arith.addf %9, %11 : vector<2x9xf32>
    %cst_11 = arith.constant 5.000000e-01 : f32
    %13 = vector.broadcast %cst_11 : f32 to vector<2x9xf32>
    %14 = arith.mulf %13, %12 : vector<2x9xf32>
    %15 = math.cos %14 : vector<2x9xf32>
    %cst_12 = arith.constant 5.000000e-01 : f32
    %16 = vector.broadcast %cst_12 : f32 to vector<2x9xf32>
    %17 = arith.mulf %16, %12 : vector<2x9xf32>
    %18 = math.sin %17 : vector<2x9xf32>
    %c0_13 = arith.constant 0 : index
    %c0_14 = arith.constant 0 : index
    %19 = vector.load %arg7[%c0_13, %c0_14] : memref<9x512xf32, #tpu.memory_space<vmem>>, vector<9x512xf32>
    %cst_15 = arith.constant 1.000000e+00 : f32
    %20 = vector.broadcast %cst_15 : f32 to vector<2x512xf32>
    %21 = vector.extract_strided_slice %15 {offsets = [0, 0], sizes = [2, 1], strides = [1, 1]} : vector<2x9xf32> to vector<2x1xf32>
    %22 = vector.extract_strided_slice %18 {offsets = [0, 0], sizes = [2, 1], strides = [1, 1]} : vector<2x9xf32> to vector<2x1xf32>
    %23 = vector.extract_strided_slice %19 {offsets = [0, 0], sizes = [1, 512], strides = [1, 1]} : vector<9x512xf32> to vector<1x512xf32>
    %24 = arith.subf %22, %21 : vector<2x1xf32>
    %25 = vector.broadcast %24 : vector<2x1xf32> to vector<2x512xf32>
    %26 = vector.broadcast %23 : vector<1x512xf32> to vector<2x512xf32>
    %27 = arith.mulf %25, %26 : vector<2x512xf32>
    %28 = vector.broadcast %21 : vector<2x1xf32> to vector<2x512xf32>
    %29 = arith.addf %28, %27 : vector<2x512xf32>
    %30 = arith.mulf %20, %29 : vector<2x512xf32>
    %31 = vector.extract_strided_slice %15 {offsets = [0, 1], sizes = [2, 1], strides = [1, 1]} : vector<2x9xf32> to vector<2x1xf32>
    %32 = vector.extract_strided_slice %18 {offsets = [0, 1], sizes = [2, 1], strides = [1, 1]} : vector<2x9xf32> to vector<2x1xf32>
    %33 = vector.extract_strided_slice %19 {offsets = [1, 0], sizes = [1, 512], strides = [1, 1]} : vector<9x512xf32> to vector<1x512xf32>
    %34 = arith.subf %32, %31 : vector<2x1xf32>
    %35 = vector.broadcast %34 : vector<2x1xf32> to vector<2x512xf32>
    %36 = vector.broadcast %33 : vector<1x512xf32> to vector<2x512xf32>
    %37 = arith.mulf %35, %36 : vector<2x512xf32>
    %38 = vector.broadcast %31 : vector<2x1xf32> to vector<2x512xf32>
    %39 = arith.addf %38, %37 : vector<2x512xf32>
    %40 = arith.mulf %30, %39 : vector<2x512xf32>
    %41 = vector.extract_strided_slice %15 {offsets = [0, 2], sizes = [2, 1], strides = [1, 1]} : vector<2x9xf32> to vector<2x1xf32>
    %42 = vector.extract_strided_slice %18 {offsets = [0, 2], sizes = [2, 1], strides = [1, 1]} : vector<2x9xf32> to vector<2x1xf32>
    %43 = vector.extract_strided_slice %19 {offsets = [2, 0], sizes = [1, 512], strides = [1, 1]} : vector<9x512xf32> to vector<1x512xf32>
    %44 = arith.subf %42, %41 : vector<2x1xf32>
    %45 = vector.broadcast %44 : vector<2x1xf32> to vector<2x512xf32>
    %46 = vector.broadcast %43 : vector<1x512xf32> to vector<2x512xf32>
    %47 = arith.mulf %45, %46 : vector<2x512xf32>
    %48 = vector.broadcast %41 : vector<2x1xf32> to vector<2x512xf32>
    %49 = arith.addf %48, %47 : vector<2x512xf32>
    %50 = arith.mulf %40, %49 : vector<2x512xf32>
    %51 = vector.extract_strided_slice %15 {offsets = [0, 3], sizes = [2, 1], strides = [1, 1]} : vector<2x9xf32> to vector<2x1xf32>
    %52 = vector.extract_strided_slice %18 {offsets = [0, 3], sizes = [2, 1], strides = [1, 1]} : vector<2x9xf32> to vector<2x1xf32>
    %53 = vector.extract_strided_slice %19 {offsets = [3, 0], sizes = [1, 512], strides = [1, 1]} : vector<9x512xf32> to vector<1x512xf32>
    %54 = arith.subf %52, %51 : vector<2x1xf32>
    %55 = vector.broadcast %54 : vector<2x1xf32> to vector<2x512xf32>
    %56 = vector.broadcast %53 : vector<1x512xf32> to vector<2x512xf32>
    %57 = arith.mulf %55, %56 : vector<2x512xf32>
    %58 = vector.broadcast %51 : vector<2x1xf32> to vector<2x512xf32>
    %59 = arith.addf %58, %57 : vector<2x512xf32>
    %60 = arith.mulf %50, %59 : vector<2x512xf32>
    %61 = vector.extract_strided_slice %15 {offsets = [0, 4], sizes = [2, 1], strides = [1, 1]} : vector<2x9xf32> to vector<2x1xf32>
    %62 = vector.extract_strided_slice %18 {offsets = [0, 4], sizes = [2, 1], strides = [1, 1]} : vector<2x9xf32> to vector<2x1xf32>
    %63 = vector.extract_strided_slice %19 {offsets = [4, 0], sizes = [1, 512], strides = [1, 1]} : vector<9x512xf32> to vector<1x512xf32>
    %64 = arith.subf %62, %61 : vector<2x1xf32>
    %65 = vector.broadcast %64 : vector<2x1xf32> to vector<2x512xf32>
    %66 = vector.broadcast %63 : vector<1x512xf32> to vector<2x512xf32>
    %67 = arith.mulf %65, %66 : vector<2x512xf32>
    %68 = vector.broadcast %61 : vector<2x1xf32> to vector<2x512xf32>
    %69 = arith.addf %68, %67 : vector<2x512xf32>
    %70 = arith.mulf %60, %69 : vector<2x512xf32>
    %71 = vector.extract_strided_slice %15 {offsets = [0, 5], sizes = [2, 1], strides = [1, 1]} : vector<2x9xf32> to vector<2x1xf32>
    %72 = vector.extract_strided_slice %18 {offsets = [0, 5], sizes = [2, 1], strides = [1, 1]} : vector<2x9xf32> to vector<2x1xf32>
    %73 = vector.extract_strided_slice %19 {offsets = [5, 0], sizes = [1, 512], strides = [1, 1]} : vector<9x512xf32> to vector<1x512xf32>
    %74 = arith.subf %72, %71 : vector<2x1xf32>
    %75 = vector.broadcast %74 : vector<2x1xf32> to vector<2x512xf32>
    %76 = vector.broadcast %73 : vector<1x512xf32> to vector<2x512xf32>
    %77 = arith.mulf %75, %76 : vector<2x512xf32>
    %78 = vector.broadcast %71 : vector<2x1xf32> to vector<2x512xf32>
    %79 = arith.addf %78, %77 : vector<2x512xf32>
    %80 = arith.mulf %70, %79 : vector<2x512xf32>
    %81 = vector.extract_strided_slice %15 {offsets = [0, 6], sizes = [2, 1], strides = [1, 1]} : vector<2x9xf32> to vector<2x1xf32>
    %82 = vector.extract_strided_slice %18 {offsets = [0, 6], sizes = [2, 1], strides = [1, 1]} : vector<2x9xf32> to vector<2x1xf32>
    %83 = vector.extract_strided_slice %19 {offsets = [6, 0], sizes = [1, 512], strides = [1, 1]} : vector<9x512xf32> to vector<1x512xf32>
    %84 = arith.subf %82, %81 : vector<2x1xf32>
    %85 = vector.broadcast %84 : vector<2x1xf32> to vector<2x512xf32>
    %86 = vector.broadcast %83 : vector<1x512xf32> to vector<2x512xf32>
    %87 = arith.mulf %85, %86 : vector<2x512xf32>
    %88 = vector.broadcast %81 : vector<2x1xf32> to vector<2x512xf32>
    %89 = arith.addf %88, %87 : vector<2x512xf32>
    %90 = arith.mulf %80, %89 : vector<2x512xf32>
    %91 = vector.extract_strided_slice %15 {offsets = [0, 7], sizes = [2, 1], strides = [1, 1]} : vector<2x9xf32> to vector<2x1xf32>
    %92 = vector.extract_strided_slice %18 {offsets = [0, 7], sizes = [2, 1], strides = [1, 1]} : vector<2x9xf32> to vector<2x1xf32>
    %93 = vector.extract_strided_slice %19 {offsets = [7, 0], sizes = [1, 512], strides = [1, 1]} : vector<9x512xf32> to vector<1x512xf32>
    %94 = arith.subf %92, %91 : vector<2x1xf32>
    %95 = vector.broadcast %94 : vector<2x1xf32> to vector<2x512xf32>
    %96 = vector.broadcast %93 : vector<1x512xf32> to vector<2x512xf32>
    %97 = arith.mulf %95, %96 : vector<2x512xf32>
    %98 = vector.broadcast %91 : vector<2x1xf32> to vector<2x512xf32>
    %99 = arith.addf %98, %97 : vector<2x512xf32>
    %100 = arith.mulf %90, %99 : vector<2x512xf32>
    %101 = vector.extract_strided_slice %15 {offsets = [0, 8], sizes = [2, 1], strides = [1, 1]} : vector<2x9xf32> to vector<2x1xf32>
    %102 = vector.extract_strided_slice %18 {offsets = [0, 8], sizes = [2, 1], strides = [1, 1]} : vector<2x9xf32> to vector<2x1xf32>
    %103 = vector.extract_strided_slice %19 {offsets = [8, 0], sizes = [1, 512], strides = [1, 1]} : vector<9x512xf32> to vector<1x512xf32>
    %104 = arith.subf %102, %101 : vector<2x1xf32>
    %105 = vector.broadcast %104 : vector<2x1xf32> to vector<2x512xf32>
    %106 = vector.broadcast %103 : vector<1x512xf32> to vector<2x512xf32>
    %107 = arith.mulf %105, %106 : vector<2x512xf32>
    %108 = vector.broadcast %101 : vector<2x1xf32> to vector<2x512xf32>
    %109 = arith.addf %108, %107 : vector<2x512xf32>
    %110 = arith.mulf %100, %109 : vector<2x512xf32>
    %111 = arith.truncf %110 : vector<2x512xf32> to vector<2x512xbf16>
    %c0_16 = arith.constant 0 : index
    %c0_17 = arith.constant 0 : index
    %112 = vector.load %arg5[%c0_16, %c0_17] : memref<512x1024xbf16, #tpu.memory_space<vmem>>, vector<512x1024xbf16>
    %cst_18 = arith.constant dense<0.000000e+00> : vector<2x1024xf32>
    %113 = tpu.matmul %111, %112, %cst_18 {dimension_numbers = #tpu.dot_dimension_numbers<[1], [0], [0], [1], [0, 0, 1, 1], [], []>} : vector<2x512xbf16>, vector<512x1024xbf16>, vector<2x1024xf32> -> vector<2x1024xf32>
    %114 = vector.extract_strided_slice %113 {offsets = [0, 0], sizes = [2, 512], strides = [1, 1]} : vector<2x1024xf32> to vector<2x512xf32>
    %115 = vector.extract_strided_slice %113 {offsets = [0, 512], sizes = [2, 512], strides = [1, 1]} : vector<2x1024xf32> to vector<2x512xf32>
    %116 = arith.mulf %114, %114 : vector<2x512xf32>
    %117 = arith.mulf %115, %115 : vector<2x512xf32>
    %118 = arith.addf %116, %117 : vector<2x512xf32>
    %c0_19 = arith.constant 0 : index
    %c0_20 = arith.constant 0 : index
    %119 = vector.load %arg6[%c0_19, %c0_20] : memref<512x8xf32, #tpu.memory_space<vmem>>, vector<512x8xf32>
    %cst_21 = arith.constant dense<0.000000e+00> : vector<2x8xf32>
    %120 = tpu.matmul %118, %119, %cst_21 {dimension_numbers = #tpu.dot_dimension_numbers<[1], [0], [0], [1], [0, 0, 1, 1], [], []>} : vector<2x512xf32>, vector<512x8xf32>, vector<2x8xf32> -> vector<2x8xf32>
    %c0_22 = arith.constant 0 : index
    %c0_23 = arith.constant 0 : index
    %121 = vector.load %arg8[%c0_22, %c0_23] : memref<1x8xf32, #tpu.memory_space<vmem>>, vector<1x8xf32>
    %122 = vector.broadcast %121 : vector<1x8xf32> to vector<2x8xf32>
    %123 = arith.addf %120, %122 : vector<2x8xf32>
    %c0_24 = arith.constant 0 : index
    %c0_25 = arith.constant 0 : index
    %124 = vector.load %arg9[%c0_24, %c0_25] : memref<2x8xf32, #tpu.memory_space<vmem>>, vector<2x8xf32>
    tpu.vector_store %arg9[%c0_24, %c0_25], %123 {strides = array<i32>} : memref<2x8xf32, #tpu.memory_space<vmem>>, vector<2x8xf32>,
    return
  }
}

</mosaic_0001>

<llo_original>
// kernel: tpu_custom_call.1
$region0: #{tpu_custom_call.1}
  #allocation0 [shape = 'u32[]', space=smem, size = 0x4, offset = 0x4, fixed_abs, tag = 'smem constant byte address 0x4 - core index']
  #allocation1 [shape = 'u32[144,128]{1,0:T(1,128)}', space=vmem, size = 0x12000, scoped, tag = 'internal scratch']
  %s0 = inlined_call_operand.vmem [shape: f32[2,64], index: 0, kind: input, shape index: {}]
  %s1 = inlined_call_operand.vmem [shape: f32[64,32], index: 1, kind: input, shape index: {}]
  %s2 = inlined_call_operand.vmem [shape: f32[1,32], index: 2, kind: input, shape index: {}]
  %s3 = inlined_call_operand.vmem [shape: f32[32,9], index: 3, kind: input, shape index: {}]
  %s4 = inlined_call_operand.vmem [shape: f32[1,9], index: 4, kind: input, shape index: {}]
  %s5 = inlined_call_operand.hbm [shape: bf16[512,1024], index: 5, kind: input, shape index: {}]
  %s6 = inlined_call_operand.vmem [shape: f32[512,8], index: 6, kind: input, shape index: {}]
  %s7 = inlined_call_operand.vmem [shape: f32[9,512], index: 7, kind: input, shape index: {}]
  %s8 = inlined_call_operand.vmem [shape: f32[1,8], index: 8, kind: input, shape index: {}]
  %s9 = inlined_call_operand.hbm [shape: f32[2,8], index: 9, kind: output, shape index: {}]
  %s10 = sld [smem:[#allocation0]]
  $region50: #{tpu_custom_call.1} parent=0
    _
  %s12 = ssub.s32 1, %s10
  %s13 = scalar_select 0, %s12, %s10
  $region1: #{tpu_custom_call.1} parent=0
    #allocation2 [shape = 'u8[1048576]{0}', space=vmem, size = 0x100000, scoped, tag = 'input window, operand 5, single buffered']
    #allocation3 [shape = 's32[1]{0}', space=sflag, size = 0x4, scoped, tag = 'scoped memory for tpu_custom_call.1']
    #allocation4 [shape = 's32[1]{0}', space=sflag, size = 0x4, scoped, tag = 'scoped memory for tpu_custom_call.1']
    #allocation5 [shape = 'u8[1024]{0}', space=vmem, size = 0x400, scoped, tag = 'output window, operand 0, single buffered']
    %14 = vsyncpa [#allocation3], 0
    %15 = vsyncpa [#allocation4], 0
    // Predicated region
    $region2: #{tpu_custom_call.1} parent=1 // pred_check
      _
    $region3: #{tpu_custom_call.1} parent=1 // pred_check_branch
      %17 = sbr.rel (0) target = $region5
    $region4: #{tpu_custom_call.1} parent=1 // pred_region
      _
    $region5: #{tpu_custom_call.1} parent=1 // pred_fallthru
      _
    // Predicated region
    $region6: #{tpu_custom_call.1} parent=1 // pred_check
      _
    $region7: #{tpu_custom_call.1} parent=1 // pred_check_branch
      %19 = sbr.rel (0) target = $region9
    $region8: #{tpu_custom_call.1} parent=1 // pred_region
      _
    $region9: #{tpu_custom_call.1} parent=1 // pred_fallthru
      _
    // Predicated region
    $region10: #{tpu_custom_call.1} parent=1 // pred_check
      _
    $region11: #{tpu_custom_call.1} parent=1 // pred_check_branch
      %21 = sbr.rel (0) target = $region13
    $region12: #{tpu_custom_call.1} parent=1 // pred_region
      _
    $region13: #{tpu_custom_call.1} parent=1 // pred_fallthru
      _
    // Predicated region
    $region14: #{tpu_custom_call.1} parent=1 // pred_check
      _
    $region15: #{tpu_custom_call.1} parent=1 // pred_check_branch
      %23 = sbr.rel (0) target = $region17
    $region16: #{tpu_custom_call.1} parent=1 // pred_region
      _
    $region17: #{tpu_custom_call.1} parent=1 // pred_fallthru
      _
    // Predicated region
    $region18: #{tpu_custom_call.1} parent=1 // pred_check
      _
    $region19: #{tpu_custom_call.1} parent=1 // pred_check_branch
      %25 = sbr.rel (0) target = $region21
    $region20: #{tpu_custom_call.1} parent=1 // pred_region
      _
    $region21: #{tpu_custom_call.1} parent=1 // pred_fallthru
      _
    // Predicated region
    $region22: #{tpu_custom_call.1} parent=1 // pred_check
      _
    $region23: #{tpu_custom_call.1} parent=1 // pred_check_branch
      %27 = sbr.rel (0) target = $region25
    $region24: #{tpu_custom_call.1} parent=1 // pred_region
      %s29 = ssub.s32 32768, 32768
      %30 = vsyncadd [#allocation3], %s29
      %s31 = sshll.u32 [#allocation2], 4
      %s32 = int_to_ptr.vmem [resolvable:$true] %s31
      %37 = dma.hbm_to_vmem [thread:$0]  %s5, 32768, %s32, [#allocation3], 512, 512, 32
    $region25: #{tpu_custom_call.1} parent=1 // pred_fallthru
      _
    // Predicated region
    $region26: #{tpu_custom_call.1} parent=1 // pred_check
      _
    $region27: #{tpu_custom_call.1} parent=1 // pred_check_branch
      %39 = sbr.rel (0) target = $region29
    $region28: #{tpu_custom_call.1} parent=1 // pred_region
      _
    $region29: #{tpu_custom_call.1} parent=1 // pred_fallthru
      _
    // Predicated region
    $region30: #{tpu_custom_call.1} parent=1 // pred_check
      _
    $region31: #{tpu_custom_call.1} parent=1 // pred_check_branch
      %41 = sbr.rel (0) target = $region33
    $region32: #{tpu_custom_call.1} parent=1 // pred_region
      _
    $region33: #{tpu_custom_call.1} parent=1 // pred_fallthru
      _
    // Predicated region
    $region34: #{tpu_custom_call.1} parent=1 // pred_check
      _
    $region35: #{tpu_custom_call.1} parent=1 // pred_check_branch
      %43 = sbr.rel (0) target = $region37
    $region36: #{tpu_custom_call.1} parent=1 // pred_region
      _
    $region37: #{tpu_custom_call.1} parent=1 // pred_fallthru
      _
    // Predicated region
    $region38: #{tpu_custom_call.1} parent=1 // pred_check
      _
    $region39: #{tpu_custom_call.1} parent=1 // pred_check_branch
      %45 = sbr.rel (0) target = $region41
    $region40: #{tpu_custom_call.1} parent=1 // pred_region
      %46 = dma.done [#allocation3], 32768
    $region41: #{tpu_custom_call.1} parent=1 // pred_fallthru
      _
    %v47 = vld [vmem:[%s0] sm:$0x3]
    %v48 = vld [vmem:[%s1] sm:$0xff]
    %v49 = vld [vmem:[%s1 + $0x8] sm:$0xff]
    %v50 = vld [vmem:[%s1 + $0x10] sm:$0xff]
    %v51 = vld [vmem:[%s1 + $0x18] sm:$0xff]
    %v52 = vld [vmem:[%s1 + $0x20] sm:$0xff]
    %v53 = vld [vmem:[%s1 + $0x28] sm:$0xff]
    %v54 = vld [vmem:[%s1 + $0x30] sm:$0xff]
    %v55 = vld [vmem:[%s1 + $0x38] sm:$0xff]
    %v56 = vld [vmem:[%s2] sm:$0x1]
    %v58 = vlaneseq
    %v59 = vshrl.u32 %v58, 7
    %v60 = vsub.s32 0, %v59
    %v61 = vrot.slane %v56, %v60
    %vm63 = vcmask 523264
    %v65 = vsel %vm63, %v47, 0
    %67 = vmatprep.subr.mxu0 0.0
    %v68 = vand.u32 %v48, 4294901760
    %69 = vmatpush1.msra.mxu0 %v68
    %70 = vmatprep.subr.mxu0 0.0
    %v71 = vand.u32 %v49, 4294901760
    %72 = vmatpush1.msra.mxu0 %v71
    %73 = vmatprep.subr.mxu0 0.0
    %v74 = vand.u32 %v50, 4294901760
    %75 = vmatpush1.msra.mxu0 %v74
    %76 = vmatprep.subr.mxu0 0.0
    %v77 = vand.u32 %v51, 4294901760
    %78 = vmatpush1.msra.mxu0 %v77
    %79 = vmatprep.subr.mxu0 0.0
    %v80 = vand.u32 %v52, 4294901760
    %81 = vmatpush1.msra.mxu0 %v80
    %82 = vmatprep.subr.mxu0 0.0
    %v83 = vand.u32 %v53, 4294901760
    %84 = vmatpush1.msra.mxu0 %v83
    %85 = vmatprep.subr.mxu0 0.0
    %v86 = vand.u32 %v54, 4294901760
    %87 = vmatpush1.msra.mxu0 %v86
    %88 = vmatprep.subr.mxu0 0.0
    %v89 = vand.u32 %v55, 4294901760
    %90 = vmatpush1.msra.mxu0 %v89
    %91 = vmatprep.subr.mxu0 0.0
    %92 = vmatpush1.msra.mxu0 0.0
    %93 = vmatprep.subr.mxu0 0.0
    %94 = vmatpush1.msra.mxu0 0.0
    %95 = vmatprep.subr.mxu0 0.0
    %96 = vmatpush1.msra.mxu0 0.0
    %97 = vmatprep.subr.mxu0 0.0
    %98 = vmatpush1.msra.mxu0 0.0
    %99 = vmatprep.subr.mxu0 0.0
    %100 = vmatpush1.msra.mxu0 0.0
    %101 = vmatprep.subr.mxu0 0.0
    %102 = vmatpush1.msra.mxu0 0.0
    %103 = vmatprep.subr.mxu0 0.0
    %104 = vmatpush1.msra.mxu0 0.0
    %105 = vmatprep.subr.mxu0 0.0
    %106 = vmatpush1.msra.mxu0 0.0
    %107 = vmatprep.subr.mxu0 0.0
    %108 = vmatpush1.msra.mxu0 0.0
    %109 = vmatprep.subr.mxu0 0.0
    %110 = vmatpush1.msra.mxu0 0.0
    %111 = vmatprep.subr.mxu0 0.0
    %112 = vmatpush1.msra.mxu0 0.0
    %113 = vmatprep.subr.mxu0 0.0
    %114 = vmatpush1.msra.mxu0 0.0
    %115 = vmatprep.subr.mxu0 0.0
    %116 = vmatpush1.msra.mxu0 0.0
    %117 = vmatprep.subr.mxu0 0.0
    %118 = vmatpush1.msra.mxu0 0.0
    %119 = vmatprep.subr.mxu0 0.0
    %120 = vmatpush1.msra.mxu0 0.0
    %121 = vmatprep.subr.mxu0 0.0
    %122 = vmatpush1.msra.mxu0 0.0
    %123 = vmatprep.subr.mxu0 0.0
    %124 = vmatpush1.msra.mxu0 0.0
    %125 = vmatprep.subr.mxu0 0.0
    %126 = vmatpush1.msra.mxu0 0.0
    %127 = vmatprep.subr.mxu0 0.0
    %128 = vmatpush1.msra.mxu0 0.0
    %129 = vmatprep.subr.mxu0 0.0
    %130 = vmatpush1.msra.mxu0 0.0
    %131 = vmatprep.subr.mxu0 0.0
    %132 = vmatpush1.msra.mxu0 0.0
    %133 = vmatprep.subr.mxu0 0.0
    %134 = vmatpush1.msra.mxu0 0.0
    %135 = vmatprep.subr.mxu0 0.0
    %136 = vmatpush1.msra.mxu0 0.0
    %137 = vmatprep.subr.mxu0 0.0
    %138 = vmatpush1.msra.mxu0 0.0
    %139 = vmatprep.mubr.f32.mxu0 0.0
    %v140 = vand.u32 %v65, 4294901760
    %v141 = vsub.f32 %v65, %v140
    %v142 = vand.u32 %v141, 4294901760
    %v143 = vsub.f32 %v141, %v142
    %v144 = vand.u32 %v143, 4294901760
    %145 = vmatmul.mubr.f32.gmra.mrb[0].mxu0 %v144
    %v146 = vpop.f32.mrb[0].mxu0
    %v147 = vadd.f32 %v61, %v146
    %v148 = vpop.f32.mrb[0].mxu0
    %149 = vdwg.mxu0
    %150 = vmatprep.subr.mxu0 0.0
    %v151 = vand.u32 %v48, 4294901760
    %v152 = vsub.f32 %v48, %v151
    %v153 = vand.u32 %v152, 4294901760
    %v154 = vsub.f32 %v152, %v153
    %v155 = vand.u32 %v154, 4294901760
    %156 = vmatpush1.msra.mxu0 %v155
    %157 = vmatprep.subr.mxu0 0.0
    %v158 = vand.u32 %v49, 4294901760
    %v159 = vsub.f32 %v49, %v158
    %v160 = vand.u32 %v159, 4294901760
    %v161 = vsub.f32 %v159, %v160
    %v162 = vand.u32 %v161, 4294901760
    %163 = vmatpush1.msra.mxu0 %v162
    %164 = vmatprep.subr.mxu0 0.0
    %v165 = vand.u32 %v50, 4294901760
    %v166 = vsub.f32 %v50, %v165
    %v167 = vand.u32 %v166, 4294901760
    %v168 = vsub.f32 %v166, %v167
    %v169 = vand.u32 %v168, 4294901760
    %170 = vmatpush1.msra.mxu0 %v169
    %171 = vmatprep.subr.mxu0 0.0
    %v172 = vand.u32 %v51, 4294901760
    %v173 = vsub.f32 %v51, %v172
    %v174 = vand.u32 %v173, 4294901760
    %v175 = vsub.f32 %v173, %v174
    %v176 = vand.u32 %v175, 4294901760
    %177 = vmatpush1.msra.mxu0 %v176
    %178 = vmatprep.subr.mxu0 0.0
    %v179 = vand.u32 %v52, 4294901760
    %v180 = vsub.f32 %v52, %v179
    %v181 = vand.u32 %v180, 4294901760
    %v182 = vsub.f32 %v180, %v181
    %v183 = vand.u32 %v182, 4294901760
    %184 = vmatpush1.msra.mxu0 %v183
    %185 = vmatprep.subr.mxu0 0.0
    %v186 = vand.u32 %v53, 4294901760
    %v187 = vsub.f32 %v53, %v186
    %v188 = vand.u32 %v187, 4294901760
    %v189 = vsub.f32 %v187, %v188
    %v190 = vand.u32 %v189, 4294901760
    %191 = vmatpush1.msra.mxu0 %v190
    %192 = vmatprep.subr.mxu0 0.0
    %v193 = vand.u32 %v54, 4294901760
    %v194 = vsub.f32 %v54, %v193
    %v195 = vand.u32 %v194, 4294901760
    %v196 = vsub.f32 %v194, %v195
    %v197 = vand.u32 %v196, 4294901760
    %198 = vmatpush1.msra.mxu0 %v197
    %199 = vmatprep.subr.mxu0 0.0
    %v200 = vand.u32 %v55, 4294901760
    %v201 = vsub.f32 %v55, %v200
    %v202 = vand.u32 %v201, 4294901760
    %v203 = vsub.f32 %v201, %v202
    %v204 = vand.u32 %v203, 4294901760
    %205 = vmatpush1.msra.mxu0 %v204
    %206 = vmatprep.subr.mxu0 0.0
    %207 = vmatpush1.msra.mxu0 0.0
    %208 = vmatprep.subr.mxu0 0.0
    %209 = vmatpush1.msra.mxu0 0.0
    %210 = vmatprep.subr.mxu0 0.0
    %211 = vmatpush1.msra.mxu0 0.0
    %212 = vmatprep.subr.mxu0 0.0
    %213 = vmatpush1.msra.mxu0 0.0
    %214 = vmatprep.subr.mxu0 0.0
    %215 = vmatpush1.msra.mxu0 0.0
    %216 = vmatprep.subr.mxu0 0.0
    %217 = vmatpush1.msra.mxu0 0.0
    %218 = vmatprep.subr.mxu0 0.0
    %219 = vmatpush1.msra.mxu0 0.0
    %220 = vmatprep.subr.mxu0 0.0
    %221 = vmatpush1.msra.mxu0 0.0
    %222 = vmatprep.subr.mxu0 0.0
    %223 = vmatpush1.msra.mxu0 0.0
    %224 = vmatprep.subr.mxu0 0.0
    %225 = vmatpush1.msra.mxu0 0.0
    %226 = vmatprep.subr.mxu0 0.0
    %227 = vmatpush1.msra.mxu0 0.0
    %228 = vmatprep.subr.mxu0 0.0
    %229 = vmatpush1.msra.mxu0 0.0
    %230 = vmatprep.subr.mxu0 0.0
    %231 = vmatpush1.msra.mxu0 0.0
    %232 = vmatprep.subr.mxu0 0.0
    %233 = vmatpush1.msra.mxu0 0.0
    %234 = vmatprep.subr.mxu0 0.0
    %235 = vmatpush1.msra.mxu0 0.0
    %236 = vmatprep.subr.mxu0 0.0
    %237 = vmatpush1.msra.mxu0 0.0
    %238 = vmatprep.subr.mxu0 0.0
    %239 = vmatpush1.msra.mxu0 0.0
    %240 = vmatprep.subr.mxu0 0.0
    %241 = vmatpush1.msra.mxu0 0.0
    %242 = vmatprep.subr.mxu0 0.0
    %243 = vmatpush1.msra.mxu0 0.0
    %244 = vmatprep.subr.mxu0 0.0
    %245 = vmatpush1.msra.mxu0 0.0
    %246 = vmatprep.subr.mxu0 0.0
    %247 = vmatpush1.msra.mxu0 0.0
    %248 = vmatprep.subr.mxu0 0.0
    %249 = vmatpush1.msra.mxu0 0.0
    %250 = vmatprep.subr.mxu0 0.0
    %251 = vmatpush1.msra.mxu0 0.0
    %252 = vmatprep.subr.mxu0 0.0
    %253 = vmatpush1.msra.mxu0 0.0
    %254 = vmatprep.mubr.f32.mxu0 0.0
    %v255 = vand.u32 %v65, 4294901760
    %256 = vmatmul.mubr.f32.gmra.mrb[0].mxu0 %v255
    %v257 = vpop.f32.mrb[0].mxu0
    %v258 = vadd.f32 %v147, %v257
    %v259 = vpop.f32.mrb[0].mxu0
    %260 = vdwg.mxu0
    %261 = vmatprep.subr.mxu0 0.0
    %v262 = vand.u32 %v48, 4294901760
    %v263 = vsub.f32 %v48, %v262
    %264 = vmatpush1.msra.mxu0 %v263
    %265 = vmatprep.subr.mxu0 0.0
    %v266 = vand.u32 %v49, 4294901760
    %v267 = vsub.f32 %v49, %v266
    %268 = vmatpush1.msra.mxu0 %v267
    %269 = vmatprep.subr.mxu0 0.0
    %v270 = vand.u32 %v50, 4294901760
    %v271 = vsub.f32 %v50, %v270
    %272 = vmatpush1.msra.mxu0 %v271
    %273 = vmatprep.subr.mxu0 0.0
    %v274 = vand.u32 %v51, 4294901760
    %v275 = vsub.f32 %v51, %v274
    %276 = vmatpush1.msra.mxu0 %v275
    %277 = vmatprep.subr.mxu0 0.0
    %v278 = vand.u32 %v52, 4294901760
    %v279 = vsub.f32 %v52, %v278
    %280 = vmatpush1.msra.mxu0 %v279
    %281 = vmatprep.subr.mxu0 0.0
    %v282 = vand.u32 %v53, 4294901760
    %v283 = vsub.f32 %v53, %v282
    %284 = vmatpush1.msra.mxu0 %v283
    %285 = vmatprep.subr.mxu0 0.0
    %v286 = vand.u32 %v54, 4294901760
    %v287 = vsub.f32 %v54, %v286
    %288 = vmatpush1.msra.mxu0 %v287
    %289 = vmatprep.subr.mxu0 0.0
    %v290 = vand.u32 %v55, 4294901760
    %v291 = vsub.f32 %v55, %v290
    %292 = vmatpush1.msra.mxu0 %v291
    %293 = vmatprep.subr.mxu0 0.0
    %294 = vmatpush1.msra.mxu0 0.0
    %295 = vmatprep.subr.mxu0 0.0
    %296 = vmatpush1.msra.mxu0 0.0
    %297 = vmatprep.subr.mxu0 0.0
    %298 = vmatpush1.msra.mxu0 0.0
    %299 = vmatprep.subr.mxu0 0.0
    %300 = vmatpush1.msra.mxu0 0.0
    %301 = vmatprep.subr.mxu0 0.0
    %302 = vmatpush1.msra.mxu0 0.0
    %303 = vmatprep.subr.mxu0 0.0
    %304 = vmatpush1.msra.mxu0 0.0
    %305 = vmatprep.subr.mxu0 0.0
    %306 = vmatpush1.msra.mxu0 0.0
    %307 = vmatprep.subr.mxu0 0.0
    %308 = vmatpush1.msra.mxu0 0.0
    %309 = vmatprep.subr.mxu0 0.0
    %310 = vmatpush1.msra.mxu0 0.0
    %311 = vmatprep.subr.mxu0 0.0
    %312 = vmatpush1.msra.mxu0 0.0
    %313 = vmatprep.subr.mxu0 0.0
    %314 = vmatpush1.msra.mxu0 0.0
    %315 = vmatprep.subr.mxu0 0.0
    %316 = vmatpush1.msra.mxu0 0.0
    %317 = vmatprep.subr.mxu0 0.0
    %318 = vmatpush1.msra.mxu0 0.0
    %319 = vmatprep.subr.mxu0 0.0
    %320 = vmatpush1.msra.mxu0 0.0
    %321 = vmatprep.subr.mxu0 0.0
    %322 = vmatpush1.msra.mxu0 0.0
    %323 = vmatprep.subr.mxu0 0.0
    %324 = vmatpush1.msra.mxu0 0.0
    %325 = vmatprep.subr.mxu0 0.0
    %326 = vmatpush1.msra.mxu0 0.0
    %327 = vmatprep.subr.mxu0 0.0
    %328 = vmatpush1.msra.mxu0 0.0
    %329 = vmatprep.subr.mxu0 0.0
    %330 = vmatpush1.msra.mxu0 0.0
    %331 = vmatprep.subr.mxu0 0.0
    %332 = vmatpush1.msra.mxu0 0.0
    %333 = vmatprep.subr.mxu0 0.0
    %334 = vmatpush1.msra.mxu0 0.0
    %335 = vmatprep.subr.mxu0 0.0
    %336 = vmatpush1.msra.mxu0 0.0
    %337 = vmatprep.subr.mxu0 0.0
    %338 = vmatpush1.msra.mxu0 0.0
    %339 = vmatprep.subr.mxu0 0.0
    %340 = vmatpush1.msra.mxu0 0.0
    %341 = vmatprep.mubr.f32.mxu0 0.0
    %v342 = vand.u32 %v65, 4294901760
    %v343 = vsub.f32 %v65, %v342
    %344 = vmatmul.mubr.f32.gmra.mrb[0].mxu0 %v343
    %v345 = vpop.f32.mrb[0].mxu0
    %v346 = vadd.f32 %v258, %v345
    %v347 = vpop.f32.mrb[0].mxu0
    %348 = vdwg.mxu0
    %349 = vmatprep.subr.mxu0 0.0
    %v350 = vand.u32 %v48, 4294901760
    %351 = vmatpush1.msra.mxu0 %v350
    %352 = vmatprep.subr.mxu0 0.0
    %v353 = vand.u32 %v49, 4294901760
    %354 = vmatpush1.msra.mxu0 %v353
    %355 = vmatprep.subr.mxu0 0.0
    %v356 = vand.u32 %v50, 4294901760
    %357 = vmatpush1.msra.mxu0 %v356
    %358 = vmatprep.subr.mxu0 0.0
    %v359 = vand.u32 %v51, 4294901760
    %360 = vmatpush1.msra.mxu0 %v359
    %361 = vmatprep.subr.mxu0 0.0
    %v362 = vand.u32 %v52, 4294901760
    %363 = vmatpush1.msra.mxu0 %v362
    %364 = vmatprep.subr.mxu0 0.0
    %v365 = vand.u32 %v53, 4294901760
    %366 = vmatpush1.msra.mxu0 %v365
    %367 = vmatprep.subr.mxu0 0.0
    %v368 = vand.u32 %v54, 4294901760
    %369 = vmatpush1.msra.mxu0 %v368
    %370 = vmatprep.subr.mxu0 0.0
    %v371 = vand.u32 %v55, 4294901760
    %372 = vmatpush1.msra.mxu0 %v371
    %373 = vmatprep.subr.mxu0 0.0
    %374 = vmatpush1.msra.mxu0 0.0
    %375 = vmatprep.subr.mxu0 0.0
    %376 = vmatpush1.msra.mxu0 0.0
    %377 = vmatprep.subr.mxu0 0.0
    %378 = vmatpush1.msra.mxu0 0.0
    %379 = vmatprep.subr.mxu0 0.0
    %380 = vmatpush1.msra.mxu0 0.0
    %381 = vmatprep.subr.mxu0 0.0
    %382 = vmatpush1.msra.mxu0 0.0
    %383 = vmatprep.subr.mxu0 0.0
    %384 = vmatpush1.msra.mxu0 0.0
    %385 = vmatprep.subr.mxu0 0.0
    %386 = vmatpush1.msra.mxu0 0.0
    %387 = vmatprep.subr.mxu0 0.0
    %388 = vmatpush1.msra.mxu0 0.0
    %389 = vmatprep.subr.mxu0 0.0
    %390 = vmatpush1.msra.mxu0 0.0
    %391 = vmatprep.subr.mxu0 0.0
    %392 = vmatpush1.msra.mxu0 0.0
    %393 = vmatprep.subr.mxu0 0.0
    %394 = vmatpush1.msra.mxu0 0.0
    %395 = vmatprep.subr.mxu0 0.0
    %396 = vmatpush1.msra.mxu0 0.0
    %397 = vmatprep.subr.mxu0 0.0
    %398 = vmatpush1.msra.mxu0 0.0
    %399 = vmatprep.subr.mxu0 0.0
    %400 = vmatpush1.msra.mxu0 0.0
    %401 = vmatprep.subr.mxu0 0.0
    %402 = vmatpush1.msra.mxu0 0.0
    %403 = vmatprep.subr.mxu0 0.0
    %404 = vmatpush1.msra.mxu0 0.0
    %405 = vmatprep.subr.mxu0 0.0
    %406 = vmatpush1.msra.mxu0 0.0
    %407 = vmatprep.subr.mxu0 0.0
    %408 = vmatpush1.msra.mxu0 0.0
    %409 = vmatprep.subr.mxu0 0.0
    %410 = vmatpush1.msra.mxu0 0.0
    %411 = vmatprep.subr.mxu0 0.0
    %412 = vmatpush1.msra.mxu0 0.0
    %413 = vmatprep.subr.mxu0 0.0
    %414 = vmatpush1.msra.mxu0 0.0
    %415 = vmatprep.subr.mxu0 0.0
    %416 = vmatpush1.msra.mxu0 0.0
    %417 = vmatprep.subr.mxu0 0.0
    %418 = vmatpush1.msra.mxu0 0.0
    %419 = vmatprep.subr.mxu0 0.0
    %420 = vmatpush1.msra.mxu0 0.0
    %421 = vmatprep.mubr.f32.mxu0 0.0
    %v422 = vand.u32 %v65, 4294901760
    %v423 = vsub.f32 %v65, %v422
    %v424 = vand.u32 %v423, 4294901760
    %425 = vmatmul.mubr.f32.gmra.mrb[0].mxu0 %v424
    %v426 = vpop.f32.mrb[0].mxu0
    %v427 = vadd.f32 %v346, %v426
    %v428 = vpop.f32.mrb[0].mxu0
    %429 = vdwg.mxu0
    %430 = vmatprep.subr.mxu0 0.0
    %v431 = vand.u32 %v48, 4294901760
    %v432 = vsub.f32 %v48, %v431
    %v433 = vand.u32 %v432, 4294901760
    %434 = vmatpush1.msra.mxu0 %v433
    %435 = vmatprep.subr.mxu0 0.0
    %v436 = vand.u32 %v49, 4294901760
    %v437 = vsub.f32 %v49, %v436
    %v438 = vand.u32 %v437, 4294901760
    %439 = vmatpush1.msra.mxu0 %v438
    %440 = vmatprep.subr.mxu0 0.0
    %v441 = vand.u32 %v50, 4294901760
    %v442 = vsub.f32 %v50, %v441
    %v443 = vand.u32 %v442, 4294901760
    %444 = vmatpush1.msra.mxu0 %v443
    %445 = vmatprep.subr.mxu0 0.0
    %v446 = vand.u32 %v51, 4294901760
    %v447 = vsub.f32 %v51, %v446
    %v448 = vand.u32 %v447, 4294901760
    %449 = vmatpush1.msra.mxu0 %v448
    %450 = vmatprep.subr.mxu0 0.0
    %v451 = vand.u32 %v52, 4294901760
    %v452 = vsub.f32 %v52, %v451
    %v453 = vand.u32 %v452, 4294901760
    %454 = vmatpush1.msra.mxu0 %v453
    %455 = vmatprep.subr.mxu0 0.0
    %v456 = vand.u32 %v53, 4294901760
    %v457 = vsub.f32 %v53, %v456
    %v458 = vand.u32 %v457, 4294901760
    %459 = vmatpush1.msra.mxu0 %v458
    %460 = vmatprep.subr.mxu0 0.0
    %v461 = vand.u32 %v54, 4294901760
    %v462 = vsub.f32 %v54, %v461
    %v463 = vand.u32 %v462, 4294901760
    %464 = vmatpush1.msra.mxu0 %v463
    %465 = vmatprep.subr.mxu0 0.0
    %v466 = vand.u32 %v55, 4294901760
    %v467 = vsub.f32 %v55, %v466
    %v468 = vand.u32 %v467, 4294901760
    %469 = vmatpush1.msra.mxu0 %v468
    %470 = vmatprep.subr.mxu0 0.0
    %471 = vmatpush1.msra.mxu0 0.0
    %472 = vmatprep.subr.mxu0 0.0
    %473 = vmatpush1.msra.mxu0 0.0
    %474 = vmatprep.subr.mxu0 0.0
    %475 = vmatpush1.msra.mxu0 0.0
    %476 = vmatprep.subr.mxu0 0.0
    %477 = vmatpush1.msra.mxu0 0.0
    %478 = vmatprep.subr.mxu0 0.0
    %479 = vmatpush1.msra.mxu0 0.0
    %480 = vmatprep.subr.mxu0 0.0
    %481 = vmatpush1.msra.mxu0 0.0
    %482 = vmatprep.subr.mxu0 0.0
    %483 = vmatpush1.msra.mxu0 0.0
    %484 = vmatprep.subr.mxu0 0.0
    %485 = vmatpush1.msra.mxu0 0.0
    %486 = vmatprep.subr.mxu0 0.0
    %487 = vmatpush1.msra.mxu0 0.0
    %488 = vmatprep.subr.mxu0 0.0
    %489 = vmatpush1.msra.mxu0 0.0
    %490 = vmatprep.subr.mxu0 0.0
    %491 = vmatpush1.msra.mxu0 0.0
    %492 = vmatprep.subr.mxu0 0.0
    %493 = vmatpush1.msra.mxu0 0.0
    %494 = vmatprep.subr.mxu0 0.0
    %495 = vmatpush1.msra.mxu0 0.0
    %496 = vmatprep.subr.mxu0 0.0
    %497 = vmatpush1.msra.mxu0 0.0
    %498 = vmatprep.subr.mxu0 0.0
    %499 = vmatpush1.msra.mxu0 0.0
    %500 = vmatprep.subr.mxu0 0.0
    %501 = vmatpush1.msra.mxu0 0.0
    %502 = vmatprep.subr.mxu0 0.0
    %503 = vmatpush1.msra.mxu0 0.0
    %504 = vmatprep.subr.mxu0 0.0
    %505 = vmatpush1.msra.mxu0 0.0
    %506 = vmatprep.subr.mxu0 0.0
    %507 = vmatpush1.msra.mxu0 0.0
    %508 = vmatprep.subr.mxu0 0.0
    %509 = vmatpush1.msra.mxu0 0.0
    %510 = vmatprep.subr.mxu0 0.0
    %511 = vmatpush1.msra.mxu0 0.0
    %512 = vmatprep.subr.mxu0 0.0
    %513 = vmatpush1.msra.mxu0 0.0
    %514 = vmatprep.subr.mxu0 0.0
    %515 = vmatpush1.msra.mxu0 0.0
    %516 = vmatprep.subr.mxu0 0.0
    %517 = vmatpush1.msra.mxu0 0.0
    %518 = vmatprep.mubr.f32.mxu0 0.0
    %v519 = vand.u32 %v65, 4294901760
    %520 = vmatmul.mubr.f32.gmra.mrb[0].mxu0 %v519
    %v521 = vpop.f32.mrb[0].mxu0
    %v522 = vadd.f32 %v427, %v521
    %v523 = vpop.f32.mrb[0].mxu0
    %524 = vdwg.mxu0
    %525 = vmatprep.subr.mxu0 0.0
    %v526 = vand.u32 %v48, 4294901760
    %527 = vmatpush1.msra.mxu0 %v526
    %528 = vmatprep.subr.mxu0 0.0
    %v529 = vand.u32 %v49, 4294901760
    %530 = vmatpush1.msra.mxu0 %v529
    %531 = vmatprep.subr.mxu0 0.0
    %v532 = vand.u32 %v50, 4294901760
    %533 = vmatpush1.msra.mxu0 %v532
    %534 = vmatprep.subr.mxu0 0.0
    %v535 = vand.u32 %v51, 4294901760
    %536 = vmatpush1.msra.mxu0 %v535
    %537 = vmatprep.subr.mxu0 0.0
    %v538 = vand.u32 %v52, 4294901760
    %539 = vmatpush1.msra.mxu0 %v538
    %540 = vmatprep.subr.mxu0 0.0
    %v541 = vand.u32 %v53, 4294901760
    %542 = vmatpush1.msra.mxu0 %v541
    %543 = vmatprep.subr.mxu0 0.0
    %v544 = vand.u32 %v54, 4294901760
    %545 = vmatpush1.msra.mxu0 %v544
    %546 = vmatprep.subr.mxu0 0.0
    %v547 = vand.u32 %v55, 4294901760
    %548 = vmatpush1.msra.mxu0 %v547
    %549 = vmatprep.subr.mxu0 0.0
    %550 = vmatpush1.msra.mxu0 0.0
    %551 = vmatprep.subr.mxu0 0.0
    %552 = vmatpush1.msra.mxu0 0.0
    %553 = vmatprep.subr.mxu0 0.0
    %554 = vmatpush1.msra.mxu0 0.0
    %555 = vmatprep.subr.mxu0 0.0
    %556 = vmatpush1.msra.mxu0 0.0
    %557 = vmatprep.subr.mxu0 0.0
    %558 = vmatpush1.msra.mxu0 0.0
    %559 = vmatprep.subr.mxu0 0.0
    %560 = vmatpush1.msra.mxu0 0.0
    %561 = vmatprep.subr.mxu0 0.0
    %562 = vmatpush1.msra.mxu0 0.0
    %563 = vmatprep.subr.mxu0 0.0
    %564 = vmatpush1.msra.mxu0 0.0
    %565 = vmatprep.subr.mxu0 0.0
    %566 = vmatpush1.msra.mxu0 0.0
    %567 = vmatprep.subr.mxu0 0.0
    %568 = vmatpush1.msra.mxu0 0.0
    %569 = vmatprep.subr.mxu0 0.0
    %570 = vmatpush1.msra.mxu0 0.0
    %571 = vmatprep.subr.mxu0 0.0
    %572 = vmatpush1.msra.mxu0 0.0
    %573 = vmatprep.subr.mxu0 0.0
    %574 = vmatpush1.msra.mxu0 0.0
    %575 = vmatprep.subr.mxu0 0.0
    %576 = vmatpush1.msra.mxu0 0.0
    %577 = vmatprep.subr.mxu0 0.0
    %578 = vmatpush1.msra.mxu0 0.0
    %579 = vmatprep.subr.mxu0 0.0
    %580 = vmatpush1.msra.mxu0 0.0
    %581 = vmatprep.subr.mxu0 0.0
    %582 = vmatpush1.msra.mxu0 0.0
    %583 = vmatprep.subr.mxu0 0.0
    %584 = vmatpush1.msra.mxu0 0.0
    %585 = vmatprep.subr.mxu0 0.0
    %586 = vmatpush1.msra.mxu0 0.0
    %587 = vmatprep.subr.mxu0 0.0
    %588 = vmatpush1.msra.mxu0 0.0
    %589 = vmatprep.subr.mxu0 0.0
    %590 = vmatpush1.msra.mxu0 0.0
    %591 = vmatprep.subr.mxu0 0.0
    %592 = vmatpush1.msra.mxu0 0.0
    %593 = vmatprep.subr.mxu0 0.0
    %594 = vmatpush1.msra.mxu0 0.0
    %595 = vmatprep.subr.mxu0 0.0
    %596 = vmatpush1.msra.mxu0 0.0
    %597 = vmatprep.mubr.f32.mxu0 0.0
    %v598 = vand.u32 %v65, 4294901760
    %599 = vmatmul.mubr.f32.gmra.mrb[0].mxu0 %v598
    %v600 = vpop.f32.mrb[0].mxu0
    %v601 = vadd.f32 %v522, %v600
    %v602 = vpop.f32.mrb[0].mxu0
    %603 = vdwg.mxu0
    %v604 = vmax.f32 %v601, 0.0
    %v605 = vld [vmem:[%s3] sm:$0xff]
    %v606 = vld [vmem:[%s3 + $0x8] sm:$0xff]
    %v607 = vld [vmem:[%s3 + $0x10] sm:$0xff]
    %v608 = vld [vmem:[%s3 + $0x18] sm:$0xff]
    %v609 = vld [vmem:[%s4] sm:$0x1]
    %v611 = vlaneseq
    %v612 = vshrl.u32 %v611, 7
    %v613 = vsub.s32 0, %v612
    %v614 = vrot.slane %v609, %v613
    %vm616 = vcmask 261120
    %v618 = vsel %vm616, %v604, 0
    %620 = vmatprep.subr.mxu0 0.0
    %v621 = vand.u32 %v605, 4294901760
    %622 = vmatpush1.msra.mxu0 %v621
    %623 = vmatprep.subr.mxu0 0.0
    %v624 = vand.u32 %v606, 4294901760
    %625 = vmatpush1.msra.mxu0 %v624
    %626 = vmatprep.subr.mxu0 0.0
    %v627 = vand.u32 %v607, 4294901760
    %628 = vmatpush1.msra.mxu0 %v627
    %629 = vmatprep.subr.mxu0 0.0
    %v630 = vand.u32 %v608, 4294901760
    %631 = vmatpush1.msra.mxu0 %v630
    %632 = vmatprep.subr.mxu0 0.0
    %633 = vmatpush1.msra.mxu0 0.0
    %634 = vmatprep.subr.mxu0 0.0
    %635 = vmatpush1.msra.mxu0 0.0
    %636 = vmatprep.subr.mxu0 0.0
    %637 = vmatpush1.msra.mxu0 0.0
    %638 = vmatprep.subr.mxu0 0.0
    %639 = vmatpush1.msra.mxu0 0.0
    %640 = vmatprep.subr.mxu0 0.0
    %641 = vmatpush1.msra.mxu0 0.0
    %642 = vmatprep.subr.mxu0 0.0
    %643 = vmatpush1.msra.mxu0 0.0
    %644 = vmatprep.subr.mxu0 0.0
    %645 = vmatpush1.msra.mxu0 0.0
    %646 = vmatprep.subr.mxu0 0.0
    %647 = vmatpush1.msra.mxu0 0.0
    %648 = vmatprep.subr.mxu0 0.0
    %649 = vmatpush1.msra.mxu0 0.0
    %650 = vmatprep.subr.mxu0 0.0
    %651 = vmatpush1.msra.mxu0 0.0
    %652 = vmatprep.subr.mxu0 0.0
    %653 = vmatpush1.msra.mxu0 0.0
    %654 = vmatprep.subr.mxu0 0.0
    %655 = vmatpush1.msra.mxu0 0.0
    %656 = vmatprep.subr.mxu0 0.0
    %657 = vmatpush1.msra.mxu0 0.0
    %658 = vmatprep.subr.mxu0 0.0
    %659 = vmatpush1.msra.mxu0 0.0
    %660 = vmatprep.subr.mxu0 0.0
    %661 = vmatpush1.msra.mxu0 0.0
    %662 = vmatprep.subr.mxu0 0.0
    %663 = vmatpush1.msra.mxu0 0.0
    %664 = vmatprep.subr.mxu0 0.0
    %665 = vmatpush1.msra.mxu0 0.0
    %666 = vmatprep.subr.mxu0 0.0
    %667 = vmatpush1.msra.mxu0 0.0
    %668 = vmatprep.subr.mxu0 0.0
    %669 = vmatpush1.msra.mxu0 0.0
    %670 = vmatprep.subr.mxu0 0.0
    %671 = vmatpush1.msra.mxu0 0.0
    %672 = vmatprep.subr.mxu0 0.0
    %673 = vmatpush1.msra.mxu0 0.0
    %674 = vmatprep.subr.mxu0 0.0
    %675 = vmatpush1.msra.mxu0 0.0
    %676 = vmatprep.subr.mxu0 0.0
    %677 = vmatpush1.msra.mxu0 0.0
    %678 = vmatprep.subr.mxu0 0.0
    %679 = vmatpush1.msra.mxu0 0.0
    %680 = vmatprep.subr.mxu0 0.0
    %681 = vmatpush1.msra.mxu0 0.0
    %682 = vmatprep.subr.mxu0 0.0
    %683 = vmatpush1.msra.mxu0 0.0
    %684 = vmatprep.subr.mxu0 0.0
    %685 = vmatpush1.msra.mxu0 0.0
    %686 = vmatprep.subr.mxu0 0.0
    %687 = vmatpush1.msra.mxu0 0.0
    %688 = vmatprep.mubr.f32.mxu0 0.0
    %v689 = vand.u32 %v618, 4294901760
    %v690 = vsub.f32 %v618, %v689
    %v691 = vand.u32 %v690, 4294901760
    %v692 = vsub.f32 %v690, %v691
    %v693 = vand.u32 %v692, 4294901760
    %694 = vmatmul.mubr.f32.gmra.mrb[0].mxu0 %v693
    %v695 = vpop.f32.mrb[0].mxu0
    %v696 = vadd.f32 %v614, %v695
    %v697 = vpop.f32.mrb[0].mxu0
    %698 = vdwg.mxu0
    %699 = vmatprep.subr.mxu0 0.0
    %v700 = vand.u32 %v605, 4294901760
    %v701 = vsub.f32 %v605, %v700
    %v702 = vand.u32 %v701, 4294901760
    %v703 = vsub.f32 %v701, %v702
    %v704 = vand.u32 %v703, 4294901760
    %705 = vmatpush1.msra.mxu0 %v704
    %706 = vmatprep.subr.mxu0 0.0
    %v707 = vand.u32 %v606, 4294901760
    %v708 = vsub.f32 %v606, %v707
    %v709 = vand.u32 %v708, 4294901760
    %v710 = vsub.f32 %v708, %v709
    %v711 = vand.u32 %v710, 4294901760
    %712 = vmatpush1.msra.mxu0 %v711
    %713 = vmatprep.subr.mxu0 0.0
    %v714 = vand.u32 %v607, 4294901760
    %v715 = vsub.f32 %v607, %v714
    %v716 = vand.u32 %v715, 4294901760
    %v717 = vsub.f32 %v715, %v716
    %v718 = vand.u32 %v717, 4294901760
    %719 = vmatpush1.msra.mxu0 %v718
    %720 = vmatprep.subr.mxu0 0.0
    %v721 = vand.u32 %v608, 4294901760
    %v722 = vsub.f32 %v608, %v721
    %v723 = vand.u32 %v722, 4294901760
    %v724 = vsub.f32 %v722, %v723
    %v725 = vand.u32 %v724, 4294901760
    %726 = vmatpush1.msra.mxu0 %v725
    %727 = vmatprep.subr.mxu0 0.0
    %728 = vmatpush1.msra.mxu0 0.0
    %729 = vmatprep.subr.mxu0 0.0
    %730 = vmatpush1.msra.mxu0 0.0
    %731 = vmatprep.subr.mxu0 0.0
    %732 = vmatpush1.msra.mxu0 0.0
    %733 = vmatprep.subr.mxu0 0.0
    %734 = vmatpush1.msra.mxu0 0.0
    %735 = vmatprep.subr.mxu0 0.0
    %736 = vmatpush1.msra.mxu0 0.0
    %737 = vmatprep.subr.mxu0 0.0
    %738 = vmatpush1.msra.mxu0 0.0
    %739 = vmatprep.subr.mxu0 0.0
    %740 = vmatpush1.msra.mxu0 0.0
    %741 = vmatprep.subr.mxu0 0.0
    %742 = vmatpush1.msra.mxu0 0.0
    %743 = vmatprep.subr.mxu0 0.0
    %744 = vmatpush1.msra.mxu0 0.0
    %745 = vmatprep.subr.mxu0 0.0
    %746 = vmatpush1.msra.mxu0 0.0
    %747 = vmatprep.subr.mxu0 0.0
    %748 = vmatpush1.msra.mxu0 0.0
    %749 = vmatprep.subr.mxu0 0.0
    %750 = vmatpush1.msra.mxu0 0.0
    %751 = vmatprep.subr.mxu0 0.0
    %752 = vmatpush1.msra.mxu0 0.0
    %753 = vmatprep.subr.mxu0 0.0
    %754 = vmatpush1.msra.mxu0 0.0
    %755 = vmatprep.subr.mxu0 0.0
    %756 = vmatpush1.msra.mxu0 0.0
    %757 = vmatprep.subr.mxu0 0.0
    %758 = vmatpush1.msra.mxu0 0.0
    %759 = vmatprep.subr.mxu0 0.0
    %760 = vmatpush1.msra.mxu0 0.0
    %761 = vmatprep.subr.mxu0 0.0
    %762 = vmatpush1.msra.mxu0 0.0
    %763 = vmatprep.subr.mxu0 0.0
    %764 = vmatpush1.msra.mxu0 0.0
    %765 = vmatprep.subr.mxu0 0.0
    %766 = vmatpush1.msra.mxu0 0.0
    %767 = vmatprep.subr.mxu0 0.0
    %768 = vmatpush1.msra.mxu0 0.0
    %769 = vmatprep.subr.mxu0 0.0
    %770 = vmatpush1.msra.mxu0 0.0
    %771 = vmatprep.subr.mxu0 0.0
    %772 = vmatpush1.msra.mxu0 0.0
    %773 = vmatprep.subr.mxu0 0.0
    %774 = vmatpush1.msra.mxu0 0.0
    %775 = vmatprep.subr.mxu0 0.0
    %776 = vmatpush1.msra.mxu0 0.0
    %777 = vmatprep.subr.mxu0 0.0
    %778 = vmatpush1.msra.mxu0 0.0
    %779 = vmatprep.subr.mxu0 0.0
    %780 = vmatpush1.msra.mxu0 0.0
    %781 = vmatprep.subr.mxu0 0.0
    %782 = vmatpush1.msra.mxu0 0.0
    %783 = vmatprep.mubr.f32.mxu0 0.0
    %v784 = vand.u32 %v618, 4294901760
    %785 = vmatmul.mubr.f32.gmra.mrb[0].mxu0 %v784
    %v786 = vpop.f32.mrb[0].mxu0
    %v787 = vadd.f32 %v696, %v786
    %v788 = vpop.f32.mrb[0].mxu0
    %789 = vdwg.mxu0
    %790 = vmatprep.subr.mxu0 0.0
    %v791 = vand.u32 %v605, 4294901760
    %v792 = vsub.f32 %v605, %v791
    %793 = vmatpush1.msra.mxu0 %v792
    %794 = vmatprep.subr.mxu0 0.0
    %v795 = vand.u32 %v606, 4294901760
    %v796 = vsub.f32 %v606, %v795
    %797 = vmatpush1.msra.mxu0 %v796
    %798 = vmatprep.subr.mxu0 0.0
    %v799 = vand.u32 %v607, 4294901760
    %v800 = vsub.f32 %v607, %v799
    %801 = vmatpush1.msra.mxu0 %v800
    %802 = vmatprep.subr.mxu0 0.0
    %v803 = vand.u32 %v608, 4294901760
    %v804 = vsub.f32 %v608, %v803
    %805 = vmatpush1.msra.mxu0 %v804
    %806 = vmatprep.subr.mxu0 0.0
    %807 = vmatpush1.msra.mxu0 0.0
    %808 = vmatprep.subr.mxu0 0.0
    %809 = vmatpush1.msra.mxu0 0.0
    %810 = vmatprep.subr.mxu0 0.0
    %811 = vmatpush1.msra.mxu0 0.0
    %812 = vmatprep.subr.mxu0 0.0
    %813 = vmatpush1.msra.mxu0 0.0
    %814 = vmatprep.subr.mxu0 0.0
    %815 = vmatpush1.msra.mxu0 0.0
    %816 = vmatprep.subr.mxu0 0.0
    %817 = vmatpush1.msra.mxu0 0.0
    %818 = vmatprep.subr.mxu0 0.0
    %819 = vmatpush1.msra.mxu0 0.0
    %820 = vmatprep.subr.mxu0 0.0
    %821 = vmatpush1.msra.mxu0 0.0
    %822 = vmatprep.subr.mxu0 0.0
    %823 = vmatpush1.msra.mxu0 0.0
    %824 = vmatprep.subr.mxu0 0.0
    %825 = vmatpush1.msra.mxu0 0.0
    %826 = vmatprep.subr.mxu0 0.0
    %827 = vmatpush1.msra.mxu0 0.0
    %828 = vmatprep.subr.mxu0 0.0
    %829 = vmatpush1.msra.mxu0 0.0
    %830 = vmatprep.subr.mxu0 0.0
    %831 = vmatpush1.msra.mxu0 0.0
    %832 = vmatprep.subr.mxu0 0.0
    %833 = vmatpush1.msra.mxu0 0.0
    %834 = vmatprep.subr.mxu0 0.0
    %835 = vmatpush1.msra.mxu0 0.0
    %836 = vmatprep.subr.mxu0 0.0
    %837 = vmatpush1.msra.mxu0 0.0
    %838 = vmatprep.subr.mxu0 0.0
    %839 = vmatpush1.msra.mxu0 0.0
    %840 = vmatprep.subr.mxu0 0.0
    %841 = vmatpush1.msra.mxu0 0.0
    %842 = vmatprep.subr.mxu0 0.0
    %843 = vmatpush1.msra.mxu0 0.0
    %844 = vmatprep.subr.mxu0 0.0
    %845 = vmatpush1.msra.mxu0 0.0
    %846 = vmatprep.subr.mxu0 0.0
    %847 = vmatpush1.msra.mxu0 0.0
    %848 = vmatprep.subr.mxu0 0.0
    %849 = vmatpush1.msra.mxu0 0.0
    %850 = vmatprep.subr.mxu0 0.0
    %851 = vmatpush1.msra.mxu0 0.0
    %852 = vmatprep.subr.mxu0 0.0
    %853 = vmatpush1.msra.mxu0 0.0
    %854 = vmatprep.subr.mxu0 0.0
    %855 = vmatpush1.msra.mxu0 0.0
    %856 = vmatprep.subr.mxu0 0.0
    %857 = vmatpush1.msra.mxu0 0.0
    %858 = vmatprep.subr.mxu0 0.0
    %859 = vmatpush1.msra.mxu0 0.0
    %860 = vmatprep.subr.mxu0 0.0
    %861 = vmatpush1.msra.mxu0 0.0
    %862 = vmatprep.mubr.f32.mxu0 0.0
    %v863 = vand.u32 %v618, 4294901760
    %v864 = vsub.f32 %v618, %v863
    %865 = vmatmul.mubr.f32.gmra.mrb[0].mxu0 %v864
    %v866 = vpop.f32.mrb[0].mxu0
    %v867 = vadd.f32 %v787, %v866
    %v868 = vpop.f32.mrb[0].mxu0
    %869 = vdwg.mxu0
    %870 = vmatprep.subr.mxu0 0.0
    %v871 = vand.u32 %v605, 4294901760
    %872 = vmatpush1.msra.mxu0 %v871
    %873 = vmatprep.subr.mxu0 0.0
    %v874 = vand.u32 %v606, 4294901760
    %875 = vmatpush1.msra.mxu0 %v874
    %876 = vmatprep.subr.mxu0 0.0
    %v877 = vand.u32 %v607, 4294901760
    %878 = vmatpush1.msra.mxu0 %v877
    %879 = vmatprep.subr.mxu0 0.0
    %v880 = vand.u32 %v608, 4294901760
    %881 = vmatpush1.msra.mxu0 %v880
    %882 = vmatprep.subr.mxu0 0.0
    %883 = vmatpush1.msra.mxu0 0.0
    %884 = vmatprep.subr.mxu0 0.0
    %885 = vmatpush1.msra.mxu0 0.0
    %886 = vmatprep.subr.mxu0 0.0
    %887 = vmatpush1.msra.mxu0 0.0
    %888 = vmatprep.subr.mxu0 0.0
    %889 = vmatpush1.msra.mxu0 0.0
    %890 = vmatprep.subr.mxu0 0.0
    %891 = vmatpush1.msra.mxu0 0.0
    %892 = vmatprep.subr.mxu0 0.0
    %893 = vmatpush1.msra.mxu0 0.0
    %894 = vmatprep.subr.mxu0 0.0
    %895 = vmatpush1.msra.mxu0 0.0
    %896 = vmatprep.subr.mxu0 0.0
    %897 = vmatpush1.msra.mxu0 0.0
    %898 = vmatprep.subr.mxu0 0.0
    %899 = vmatpush1.msra.mxu0 0.0
    %900 = vmatprep.subr.mxu0 0.0
    %901 = vmatpush1.msra.mxu0 0.0
    %902 = vmatprep.subr.mxu0 0.0
    %903 = vmatpush1.msra.mxu0 0.0
    %904 = vmatprep.subr.mxu0 0.0
    %905 = vmatpush1.msra.mxu0 0.0
    %906 = vmatprep.subr.mxu0 0.0
    %907 = vmatpush1.msra.mxu0 0.0
    %908 = vmatprep.subr.mxu0 0.0
    %909 = vmatpush1.msra.mxu0 0.0
    %910 = vmatprep.subr.mxu0 0.0
    %911 = vmatpush1.msra.mxu0 0.0
    %912 = vmatprep.subr.mxu0 0.0
    %913 = vmatpush1.msra.mxu0 0.0
    %914 = vmatprep.subr.mxu0 0.0
    %915 = vmatpush1.msra.mxu0 0.0
    %916 = vmatprep.subr.mxu0 0.0
    %917 = vmatpush1.msra.mxu0 0.0
    %918 = vmatprep.subr.mxu0 0.0
    %919 = vmatpush1.msra.mxu0 0.0
    %920 = vmatprep.subr.mxu0 0.0
    %921 = vmatpush1.msra.mxu0 0.0
    %922 = vmatprep.subr.mxu0 0.0
    %923 = vmatpush1.msra.mxu0 0.0
    %924 = vmatprep.subr.mxu0 0.0
    %925 = vmatpush1.msra.mxu0 0.0
    %926 = vmatprep.subr.mxu0 0.0
    %927 = vmatpush1.msra.mxu0 0.0
    %928 = vmatprep.subr.mxu0 0.0
    %929 = vmatpush1.msra.mxu0 0.0
    %930 = vmatprep.subr.mxu0 0.0
    %931 = vmatpush1.msra.mxu0 0.0
    %932 = vmatprep.subr.mxu0 0.0
    %933 = vmatpush1.msra.mxu0 0.0
    %934 = vmatprep.subr.mxu0 0.0
    %935 = vmatpush1.msra.mxu0 0.0
    %936 = vmatprep.subr.mxu0 0.0
    %937 = vmatpush1.msra.mxu0 0.0
    %938 = vmatprep.mubr.f32.mxu0 0.0
    %v939 = vand.u32 %v618, 4294901760
    %v940 = vsub.f32 %v618, %v939
    %v941 = vand.u32 %v940, 4294901760
    %942 = vmatmul.mubr.f32.gmra.mrb[0].mxu0 %v941
    %v943 = vpop.f32.mrb[0].mxu0
    %v944 = vadd.f32 %v867, %v943
    %v945 = vpop.f32.mrb[0].mxu0
    %946 = vdwg.mxu0
    %947 = vmatprep.subr.mxu0 0.0
    %v948 = vand.u32 %v605, 4294901760
    %v949 = vsub.f32 %v605, %v948
    %v950 = vand.u32 %v949, 4294901760
    %951 = vmatpush1.msra.mxu0 %v950
    %952 = vmatprep.subr.mxu0 0.0
    %v953 = vand.u32 %v606, 4294901760
    %v954 = vsub.f32 %v606, %v953
    %v955 = vand.u32 %v954, 4294901760
    %956 = vmatpush1.msra.mxu0 %v955
    %957 = vmatprep.subr.mxu0 0.0
    %v958 = vand.u32 %v607, 4294901760
    %v959 = vsub.f32 %v607, %v958
    %v960 = vand.u32 %v959, 4294901760
    %961 = vmatpush1.msra.mxu0 %v960
    %962 = vmatprep.subr.mxu0 0.0
    %v963 = vand.u32 %v608, 4294901760
    %v964 = vsub.f32 %v608, %v963
    %v965 = vand.u32 %v964, 4294901760
    %966 = vmatpush1.msra.mxu0 %v965
    %967 = vmatprep.subr.mxu0 0.0
    %968 = vmatpush1.msra.mxu0 0.0
    %969 = vmatprep.subr.mxu0 0.0
    %970 = vmatpush1.msra.mxu0 0.0
    %971 = vmatprep.subr.mxu0 0.0
    %972 = vmatpush1.msra.mxu0 0.0
    %973 = vmatprep.subr.mxu0 0.0
    %974 = vmatpush1.msra.mxu0 0.0
    %975 = vmatprep.subr.mxu0 0.0
    %976 = vmatpush1.msra.mxu0 0.0
    %977 = vmatprep.subr.mxu0 0.0
    %978 = vmatpush1.msra.mxu0 0.0
    %979 = vmatprep.subr.mxu0 0.0
    %980 = vmatpush1.msra.mxu0 0.0
    %981 = vmatprep.subr.mxu0 0.0
    %982 = vmatpush1.msra.mxu0 0.0
    %983 = vmatprep.subr.mxu0 0.0
    %984 = vmatpush1.msra.mxu0 0.0
    %985 = vmatprep.subr.mxu0 0.0
    %986 = vmatpush1.msra.mxu0 0.0
    %987 = vmatprep.subr.mxu0 0.0
    %988 = vmatpush1.msra.mxu0 0.0
    %989 = vmatprep.subr.mxu0 0.0
    %990 = vmatpush1.msra.mxu0 0.0
    %991 = vmatprep.subr.mxu0 0.0
    %992 = vmatpush1.msra.mxu0 0.0
    %993 = vmatprep.subr.mxu0 0.0
    %994 = vmatpush1.msra.mxu0 0.0
    %995 = vmatprep.subr.mxu0 0.0
    %996 = vmatpush1.msra.mxu0 0.0
    %997 = vmatprep.subr.mxu0 0.0
    %998 = vmatpush1.msra.mxu0 0.0
    %999 = vmatprep.subr.mxu0 0.0
    %1000 = vmatpush1.msra.mxu0 0.0
    %1001 = vmatprep.subr.mxu0 0.0
    %1002 = vmatpush1.msra.mxu0 0.0
    %1003 = vmatprep.subr.mxu0 0.0
    %1004 = vmatpush1.msra.mxu0 0.0
    %1005 = vmatprep.subr.mxu0 0.0
    %1006 = vmatpush1.msra.mxu0 0.0
    %1007 = vmatprep.subr.mxu0 0.0
    %1008 = vmatpush1.msra.mxu0 0.0
    %1009 = vmatprep.subr.mxu0 0.0
    %1010 = vmatpush1.msra.mxu0 0.0
    %1011 = vmatprep.subr.mxu0 0.0
    %1012 = vmatpush1.msra.mxu0 0.0
    %1013 = vmatprep.subr.mxu0 0.0
    %1014 = vmatpush1.msra.mxu0 0.0
    %1015 = vmatprep.subr.mxu0 0.0
    %1016 = vmatpush1.msra.mxu0 0.0
    %1017 = vmatprep.subr.mxu0 0.0
    %1018 = vmatpush1.msra.mxu0 0.0
    %1019 = vmatprep.subr.mxu0 0.0
    %1020 = vmatpush1.msra.mxu0 0.0
    %1021 = vmatprep.subr.mxu0 0.0
    %1022 = vmatpush1.msra.mxu0 0.0
    %1023 = vmatprep.mubr.f32.mxu0 0.0
    %v1024 = vand.u32 %v618, 4294901760
    %1025 = vmatmul.mubr.f32.gmra.mrb[0].mxu0 %v1024
    %v1026 = vpop.f32.mrb[0].mxu0
    %v1027 = vadd.f32 %v944, %v1026
    %v1028 = vpop.f32.mrb[0].mxu0
    %1029 = vdwg.mxu0
    %1030 = vmatprep.subr.mxu0 0.0
    %v1031 = vand.u32 %v605, 4294901760
    %1032 = vmatpush1.msra.mxu0 %v1031
    %1033 = vmatprep.subr.mxu0 0.0
    %v1034 = vand.u32 %v606, 4294901760
    %1035 = vmatpush1.msra.mxu0 %v1034
    %1036 = vmatprep.subr.mxu0 0.0
    %v1037 = vand.u32 %v607, 4294901760
    %1038 = vmatpush1.msra.mxu0 %v1037
    %1039 = vmatprep.subr.mxu0 0.0
    %v1040 = vand.u32 %v608, 4294901760
    %1041 = vmatpush1.msra.mxu0 %v1040
    %1042 = vmatprep.subr.mxu0 0.0
    %1043 = vmatpush1.msra.mxu0 0.0
    %1044 = vmatprep.subr.mxu0 0.0
    %1045 = vmatpush1.msra.mxu0 0.0
    %1046 = vmatprep.subr.mxu0 0.0
    %1047 = vmatpush1.msra.mxu0 0.0
    %1048 = vmatprep.subr.mxu0 0.0
    %1049 = vmatpush1.msra.mxu0 0.0
    %1050 = vmatprep.subr.mxu0 0.0
    %1051 = vmatpush1.msra.mxu0 0.0
    %1052 = vmatprep.subr.mxu0 0.0
    %1053 = vmatpush1.msra.mxu0 0.0
    %1054 = vmatprep.subr.mxu0 0.0
    %1055 = vmatpush1.msra.mxu0 0.0
    %1056 = vmatprep.subr.mxu0 0.0
    %1057 = vmatpush1.msra.mxu0 0.0
    %1058 = vmatprep.subr.mxu0 0.0
    %1059 = vmatpush1.msra.mxu0 0.0
    %1060 = vmatprep.subr.mxu0 0.0
    %1061 = vmatpush1.msra.mxu0 0.0
    %1062 = vmatprep.subr.mxu0 0.0
    %1063 = vmatpush1.msra.mxu0 0.0
    %1064 = vmatprep.subr.mxu0 0.0
    %1065 = vmatpush1.msra.mxu0 0.0
    %1066 = vmatprep.subr.mxu0 0.0
    %1067 = vmatpush1.msra.mxu0 0.0
    %1068 = vmatprep.subr.mxu0 0.0
    %1069 = vmatpush1.msra.mxu0 0.0
    %1070 = vmatprep.subr.mxu0 0.0
    %1071 = vmatpush1.msra.mxu0 0.0
    %1072 = vmatprep.subr.mxu0 0.0
    %1073 = vmatpush1.msra.mxu0 0.0
    %1074 = vmatprep.subr.mxu0 0.0
    %1075 = vmatpush1.msra.mxu0 0.0
    %1076 = vmatprep.subr.mxu0 0.0
    %1077 = vmatpush1.msra.mxu0 0.0
    %1078 = vmatprep.subr.mxu0 0.0
    %1079 = vmatpush1.msra.mxu0 0.0
    %1080 = vmatprep.subr.mxu0 0.0
    %1081 = vmatpush1.msra.mxu0 0.0
    %1082 = vmatprep.subr.mxu0 0.0
    %1083 = vmatpush1.msra.mxu0 0.0
    %1084 = vmatprep.subr.mxu0 0.0
    %1085 = vmatpush1.msra.mxu0 0.0
    %1086 = vmatprep.subr.mxu0 0.0
    %1087 = vmatpush1.msra.mxu0 0.0
    %1088 = vmatprep.subr.mxu0 0.0
    %1089 = vmatpush1.msra.mxu0 0.0
    %1090 = vmatprep.subr.mxu0 0.0
    %1091 = vmatpush1.msra.mxu0 0.0
    %1092 = vmatprep.subr.mxu0 0.0
    %1093 = vmatpush1.msra.mxu0 0.0
    %1094 = vmatprep.subr.mxu0 0.0
    %1095 = vmatpush1.msra.mxu0 0.0
    %1096 = vmatprep.subr.mxu0 0.0
    %1097 = vmatpush1.msra.mxu0 0.0
    %1098 = vmatprep.mubr.f32.mxu0 0.0
    %v1099 = vand.u32 %v618, 4294901760
    %1100 = vmatmul.mubr.f32.gmra.mrb[0].mxu0 %v1099
    %v1101 = vpop.f32.mrb[0].mxu0
    %v1102 = vadd.f32 %v1027, %v1101
    %v1103 = vpop.f32.mrb[0].mxu0
    %1104 = vdwg.mxu0
    %v1105 = vmul.f32 %v1102, 0.5
    %v1106 = vand.u32 2147483647, %v1105
    %vm1107 = vcmp.le.f32.partialorder %v1106, 0.7853982
    %vm1108 = vcmp.lt.s32.totalorder %v1105, 0
    %v1109 = vand.u32 %v1105, 2139095040
    %v1110 = vshrl.u32 %v1109, 23
    %v1111 = vsub.s32 %v1110, 127
    %v1112 = vand.u32 2147483647, %v1105
    %v1113 = vand.u32 %v1112, 8388607
    %v1114 = vor.u32 %v1113, 8388608
    %v1115 = vsub.s32 0, %v1114
    %v1116 = vadd.s32 %v1111, 1
    %vm1117 = vcmp.gt.s32.totalorder %v1116, 0
    %v1118 = vsel %vm1117, %v1116, 0
    %v1119 = vshrl.u32 %v1118, 5
    %v1120 = vand.u32 %v1118, 31
    %v1121 = vsub.s32 32, %v1120
    %v1122 = vshrl.u32 683565275, %v1121
    %v1123 = vshll.u32 683565275, %v1120
    %v1124 = vshrl.u32 2475754826, %v1121
    %v1125 = vor.u32 %v1123, %v1124
    %v1126 = vshll.u32 2475754826, %v1120
    %v1127 = vshrl.u32 2131351028, %v1121
    %v1128 = vor.u32 %v1126, %v1127
    %v1129 = vshll.u32 2131351028, %v1120
    %v1130 = vshrl.u32 2102212464, %v1121
    %v1131 = vor.u32 %v1129, %v1130
    %v1132 = vshll.u32 2102212464, %v1120
    %v1133 = vshrl.u32 920167782, %v1121
    %v1134 = vor.u32 %v1132, %v1133
    %v1135 = vshll.u32 920167782, %v1120
    %v1136 = vshrl.u32 1326507024, %v1121
    %v1137 = vor.u32 %v1135, %v1136
    %vm1138 = vcmp.lt.s32.totalorder %v1119, 1
    %vm1139 = vcmp.lt.s32.totalorder %v1119, 2
    %vm1140 = vcmp.lt.s32.totalorder %v1119, 3
    %vm1141 = vcmp.lt.s32.totalorder %v1119, 4
    %v1142 = vsel %vm1138, %v1122, %v1125
    %v1143 = vsel %vm1141, %v1131, 2102212464
    %v1144 = vsel %vm1140, %v1128, %v1143
    %v1145 = vsel %vm1139, %v1142, %v1144
    %v1146 = vsel %vm1138, %v1125, %v1128
    %v1147 = vsel %vm1141, %v1134, 920167782
    %v1148 = vsel %vm1140, %v1131, %v1147
    %v1149 = vsel %vm1139, %v1146, %v1148
    %v1150 = vsel %vm1138, %v1128, %v1131
    %v1151 = vsel %vm1141, %v1137, 1326507024
    %v1152 = vsel %vm1140, %v1134, %v1151
    %v1153 = vsel %vm1139, %v1150, %v1152
    %v1154 = vshll.u32 %v1114, 8
    %v1155 = vmul.u32.u64.compose %v1154, %v1153
    %v1156 = vextract.low.u32 %v1155
    %v1157 = vextract.high.u32 %v1155
    %v1158 = vmul.u32.u64.compose %v1154, %v1149
    %v1159 = vextract.low.u32 %v1158
    %v1160 = vextract.high.u32 %v1158
    %v1161 = vmul.u32 %v1154, %v1145
    %v1162 = vadd.s32 %v1157, %v1159
    %vm1163 = vc.u32 %v1157, %v1159
    %v1164 = vadd.s32 %v1160, 1
    %v1165 = vsel %vm1163, %v1164, %v1160
    %v1166 = vadd.s32 %v1161, %v1165
    %v1167 = vadd.s32 %v1166, 536870912
    %v1168 = vshrl.u32 %v1167, 30
    %v1169 = vshll.u32 %v1168, 30
    %v1170 = vsub.s32 %v1166, %v1169
    %vm1171 = vcmp.lt.s32.totalorder %v1170, 0
    %v1172 = vsub.s32 0, %v1170
    %v1173 = vsel %vm1171, %v1172, %v1170
    %v1174 = vclz %v1173
    %v1175 = vsub.s32 %v1174, 2
    %vm1176 = vcmp.gt.s32.totalorder 0, %v1175
    %v1177 = vsel %vm1176, 0, %v1175
    %v1178 = vsub.s32 32, %v1177
    %v1179 = vshll.u32 %v1170, %v1177
    %v1180 = vshrl.u32 %v1162, %v1178
    %v1181 = vor.u32 %v1179, %v1180
    %v1182 = vsub.s32 4294967266, %v1177
    %v1183 = vadd.s32 %v1182, 127
    %v1184 = vshll.u32 %v1183, 23
    %v1185 = vor.u32 4788187, %v1184
    %v1186 = vand.u32 2147483647, %v1185
    %v1188 = vcvt.s32.f32 %v1181
    %v1189 = vmul.f32 %v1188, %v1186
    %v1190 = vxor.u32 %v1189, 2147483648
    %v1191 = vsel %vm1108, %v1190, %v1189
    %v1192 = vsub.s32 4, %v1168
    %v1193 = vsel %vm1108, %v1192, %v1168
    %v1194 = vsel %vm1107, %v1105, %v1191
    %v1195 = vsel %vm1107, 0, %v1193
    %v1196 = vcosq.f32.pop %v1194
    %v1197 = vsinq.f32.pop %v1194
    %vm1198 = vweird.f32 %v1105
    %v1199 = vand.u32 %v1195, 3
    %vm1200 = vcmp.lt.s32.totalorder %v1199, 2
    %vm1201 = vcmp.eq.s32.totalorder %v1199, 0
    %v1202 = vxor.u32 %v1197, 2147483648
    %v1203 = vsel %vm1201, %v1196, %v1202
    %vm1204 = vcmp.eq.s32.totalorder %v1199, 2
    %v1205 = vxor.u32 %v1196, 2147483648
    %v1206 = vsel %vm1204, %v1205, %v1197
    %v1207 = vsel %vm1200, %v1203, %v1206
    %v1208 = vsel %vm1198, nan, %v1207
    %v1209 = vand.u32 2147483647, %v1105
    %vm1210 = vcmp.le.f32.partialorder %v1209, 0.7853982
    %vm1211 = vcmp.lt.s32.totalorder %v1105, 0
    %v1212 = vand.u32 %v1105, 2139095040
    %v1213 = vshrl.u32 %v1212, 23
    %v1214 = vsub.s32 %v1213, 127
    %v1215 = vand.u32 2147483647, %v1105
    %v1216 = vand.u32 %v1215, 8388607
    %v1217 = vor.u32 %v1216, 8388608
    %v1218 = vsub.s32 0, %v1217
    %v1219 = vadd.s32 %v1214, 1
    %vm1220 = vcmp.gt.s32.totalorder %v1219, 0
    %v1221 = vsel %vm1220, %v1219, 0
    %v1222 = vshrl.u32 %v1221, 5
    %v1223 = vand.u32 %v1221, 31
    %v1224 = vsub.s32 32, %v1223
    %v1225 = vshrl.u32 683565275, %v1224
    %v1226 = vshll.u32 683565275, %v1223
    %v1227 = vshrl.u32 2475754826, %v1224
    %v1228 = vor.u32 %v1226, %v1227
    %v1229 = vshll.u32 2475754826, %v1223
    %v1230 = vshrl.u32 2131351028, %v1224
    %v1231 = vor.u32 %v1229, %v1230
    %v1232 = vshll.u32 2131351028, %v1223
    %v1233 = vshrl.u32 2102212464, %v1224
    %v1234 = vor.u32 %v1232, %v1233
    %v1235 = vshll.u32 2102212464, %v1223
    %v1236 = vshrl.u32 920167782, %v1224
    %v1237 = vor.u32 %v1235, %v1236
    %v1238 = vshll.u32 920167782, %v1223
    %v1239 = vshrl.u32 1326507024, %v1224
    %v1240 = vor.u32 %v1238, %v1239
    %vm1241 = vcmp.lt.s32.totalorder %v1222, 1
    %vm1242 = vcmp.lt.s32.totalorder %v1222, 2
    %vm1243 = vcmp.lt.s32.totalorder %v1222, 3
    %vm1244 = vcmp.lt.s32.totalorder %v1222, 4
    %v1245 = vsel %vm1241, %v1225, %v1228
    %v1246 = vsel %vm1244, %v1234, 2102212464
    %v1247 = vsel %vm1243, %v1231, %v1246
    %v1248 = vsel %vm1242, %v1245, %v1247
    %v1249 = vsel %vm1241, %v1228, %v1231
    %v1250 = vsel %vm1244, %v1237, 920167782
    %v1251 = vsel %vm1243, %v1234, %v1250
    %v1252 = vsel %vm1242, %v1249, %v1251
    %v1253 = vsel %vm1241, %v1231, %v1234
    %v1254 = vsel %vm1244, %v1240, 1326507024
    %v1255 = vsel %vm1243, %v1237, %v1254
    %v1256 = vsel %vm1242, %v1253, %v1255
    %v1257 = vshll.u32 %v1217, 8
    %v1258 = vmul.u32.u64.compose %v1257, %v1256
    %v1259 = vextract.low.u32 %v1258
    %v1260 = vextract.high.u32 %v1258
    %v1261 = vmul.u32.u64.compose %v1257, %v1252
    %v1262 = vextract.low.u32 %v1261
    %v1263 = vextract.high.u32 %v1261
    %v1264 = vmul.u32 %v1257, %v1248
    %v1265 = vadd.s32 %v1260, %v1262
    %vm1266 = vc.u32 %v1260, %v1262
    %v1267 = vadd.s32 %v1263, 1
    %v1268 = vsel %vm1266, %v1267, %v1263
    %v1269 = vadd.s32 %v1264, %v1268
    %v1270 = vadd.s32 %v1269, 536870912
    %v1271 = vshrl.u32 %v1270, 30
    %v1272 = vshll.u32 %v1271, 30
    %v1273 = vsub.s32 %v1269, %v1272
    %vm1274 = vcmp.lt.s32.totalorder %v1273, 0
    %v1275 = vsub.s32 0, %v1273
    %v1276 = vsel %vm1274, %v1275, %v1273
    %v1277 = vclz %v1276
    %v1278 = vsub.s32 %v1277, 2
    %vm1279 = vcmp.gt.s32.totalorder 0, %v1278
    %v1280 = vsel %vm1279, 0, %v1278
    %v1281 = vsub.s32 32, %v1280
    %v1282 = vshll.u32 %v1273, %v1280
    %v1283 = vshrl.u32 %v1265, %v1281
    %v1284 = vor.u32 %v1282, %v1283
    %v1285 = vsub.s32 4294967266, %v1280
    %v1286 = vadd.s32 %v1285, 127
    %v1287 = vshll.u32 %v1286, 23
    %v1288 = vor.u32 4788187, %v1287
    %v1289 = vand.u32 2147483647, %v1288
    %v1291 = vcvt.s32.f32 %v1284
    %v1292 = vmul.f32 %v1291, %v1289
    %v1293 = vxor.u32 %v1292, 2147483648
    %v1294 = vsel %vm1211, %v1293, %v1292
    %v1295 = vsub.s32 4, %v1271
    %v1296 = vsel %vm1211, %v1295, %v1271
    %v1297 = vsel %vm1210, %v1105, %v1294
    %v1298 = vsel %vm1210, 0, %v1296
    %v1299 = vcosq.f32.pop %v1297
    %v1300 = vsinq.f32.pop %v1297
    %vm1301 = vweird.f32 %v1105
    %v1302 = vadd.s32 %v1298, 3
    %v1303 = vand.u32 %v1302, 3
    %vm1304 = vcmp.lt.s32.totalorder %v1303, 2
    %vm1305 = vcmp.eq.s32.totalorder %v1303, 0
    %v1306 = vxor.u32 %v1300, 2147483648
    %v1307 = vsel %vm1305, %v1299, %v1306
    %vm1308 = vcmp.eq.s32.totalorder %v1303, 2
    %v1309 = vxor.u32 %v1299, 2147483648
    %v1310 = vsel %vm1308, %v1309, %v1300
    %v1311 = vsel %vm1304, %v1307, %v1310
    %v1312 = vsel %vm1301, nan, %v1311
    %v1313 = vld [vmem:[%s7] sm:$0xff]
    %v1314 = vld [vmem:[%s7 + $0x8] sm:$0xff]
    %v1315 = vld [vmem:[%s7 + $0x10] sm:$0xff]
    %v1316 = vld [vmem:[%s7 + $0x18] sm:$0xff]
    %v1317 = vld [vmem:[%s7 + $0x20] sm:$0x1]
    %v1318 = vld [vmem:[%s7 + $0x28] sm:$0x1]
    %v1319 = vld [vmem:[%s7 + $0x30] sm:$0x1]
    %v1320 = vld [vmem:[%s7 + $0x38] sm:$0x1]
    %v1321 = vsub.f32 %v1312, %v1208
    %1323 = vset.pattern.permute.xlu0 0
    %1324 = vperm.xlu0 %1323, %v1321
    %v1325 = vpop.permute.xlu0 %1324
    %v1327 = vlaneseq
    %v1328 = vshrl.u32 %v1327, 7
    %v1329 = vsub.s32 0, %v1328
    %v1330 = vrot.slane %v1313, %v1329
    %v1331 = vlaneseq
    %v1332 = vshrl.u32 %v1331, 7
    %v1333 = vsub.s32 0, %v1332
    %v1334 = vrot.slane %v1314, %v1333
    %v1335 = vlaneseq
    %v1336 = vshrl.u32 %v1335, 7
    %v1337 = vsub.s32 0, %v1336
    %v1338 = vrot.slane %v1315, %v1337
    %v1339 = vlaneseq
    %v1340 = vshrl.u32 %v1339, 7
    %v1341 = vsub.s32 0, %v1340
    %v1342 = vrot.slane %v1316, %v1341
    %v1343 = vmul.f32 %v1325, %v1330
    %v1344 = vmul.f32 %v1325, %v1334
    %v1345 = vmul.f32 %v1325, %v1338
    %v1346 = vmul.f32 %v1325, %v1342
    %1348 = vset.pattern.permute.xlu0 0
    %1349 = vperm.xlu0 %1348, %v1208
    %v1350 = vpop.permute.xlu0 %1349
    %v1352 = vadd.f32 %v1350, %v1343
    %v1353 = vadd.f32 %v1350, %v1344
    %v1354 = vadd.f32 %v1350, %v1345
    %v1355 = vadd.f32 %v1350, %v1346
    %1356 = vset.pattern.permute.xlu0 1
    %1357 = vperm.xlu0 %1356, %v1321
    %v1358 = vpop.permute.xlu0 %1357
    %v1360 = vlaneseq
    %v1361 = vshrl.u32 %v1360, 7
    %v1362 = vsub.s32 1, %v1361
    %v1363 = vrot.slane %v1313, %v1362
    %v1364 = vlaneseq
    %v1365 = vshrl.u32 %v1364, 7
    %v1366 = vsub.s32 1, %v1365
    %v1367 = vrot.slane %v1314, %v1366
    %v1368 = vlaneseq
    %v1369 = vshrl.u32 %v1368, 7
    %v1370 = vsub.s32 1, %v1369
    %v1371 = vrot.slane %v1315, %v1370
    %v1372 = vlaneseq
    %v1373 = vshrl.u32 %v1372, 7
    %v1374 = vsub.s32 1, %v1373
    %v1375 = vrot.slane %v1316, %v1374
    %v1376 = vmul.f32 %v1358, %v1363
    %v1377 = vmul.f32 %v1358, %v1367
    %v1378 = vmul.f32 %v1358, %v1371
    %v1379 = vmul.f32 %v1358, %v1375
    %1380 = vset.pattern.permute.xlu0 1
    %1381 = vperm.xlu0 %1380, %v1208
    %v1382 = vpop.permute.xlu0 %1381
    %v1384 = vadd.f32 %v1382, %v1376
    %v1385 = vadd.f32 %v1382, %v1377
    %v1386 = vadd.f32 %v1382, %v1378
    %v1387 = vadd.f32 %v1382, %v1379
    %v1388 = vmul.f32 %v1352, %v1384
    %v1389 = vmul.f32 %v1353, %v1385
    %v1390 = vmul.f32 %v1354, %v1386
    %v1391 = vmul.f32 %v1355, %v1387
    %1392 = vset.pattern.permute.xlu0 2
    %1393 = vperm.xlu0 %1392, %v1321
    %v1394 = vpop.permute.xlu0 %1393
    %v1396 = vlaneseq
    %v1397 = vshrl.u32 %v1396, 7
    %v1398 = vsub.s32 2, %v1397
    %v1399 = vrot.slane %v1313, %v1398
    %v1400 = vlaneseq
    %v1401 = vshrl.u32 %v1400, 7
    %v1402 = vsub.s32 2, %v1401
    %v1403 = vrot.slane %v1314, %v1402
    %v1404 = vlaneseq
    %v1405 = vshrl.u32 %v1404, 7
    %v1406 = vsub.s32 2, %v1405
    %v1407 = vrot.slane %v1315, %v1406
    %v1408 = vlaneseq
    %v1409 = vshrl.u32 %v1408, 7
    %v1410 = vsub.s32 2, %v1409
    %v1411 = vrot.slane %v1316, %v1410
    %v1412 = vmul.f32 %v1394, %v1399
    %v1413 = vmul.f32 %v1394, %v1403
    %v1414 = vmul.f32 %v1394, %v1407
    %v1415 = vmul.f32 %v1394, %v1411
    %1416 = vset.pattern.permute.xlu0 2
    %1417 = vperm.xlu0 %1416, %v1208
    %v1418 = vpop.permute.xlu0 %1417
    %v1420 = vadd.f32 %v1418, %v1412
    %v1421 = vadd.f32 %v1418, %v1413
    %v1422 = vadd.f32 %v1418, %v1414
    %v1423 = vadd.f32 %v1418, %v1415
    %v1424 = vmul.f32 %v1388, %v1420
    %v1425 = vmul.f32 %v1389, %v1421
    %v1426 = vmul.f32 %v1390, %v1422
    %v1427 = vmul.f32 %v1391, %v1423
    %1428 = vset.pattern.permute.xlu0 3
    %1429 = vperm.xlu0 %1428, %v1321
    %v1430 = vpop.permute.xlu0 %1429
    %v1432 = vlaneseq
    %v1433 = vshrl.u32 %v1432, 7
    %v1434 = vsub.s32 3, %v1433
    %v1435 = vrot.slane %v1313, %v1434
    %v1436 = vlaneseq
    %v1437 = vshrl.u32 %v1436, 7
    %v1438 = vsub.s32 3, %v1437
    %v1439 = vrot.slane %v1314, %v1438
    %v1440 = vlaneseq
    %v1441 = vshrl.u32 %v1440, 7
    %v1442 = vsub.s32 3, %v1441
    %v1443 = vrot.slane %v1315, %v1442
    %v1444 = vlaneseq
    %v1445 = vshrl.u32 %v1444, 7
    %v1446 = vsub.s32 3, %v1445
    %v1447 = vrot.slane %v1316, %v1446
    %v1448 = vmul.f32 %v1430, %v1435
    %v1449 = vmul.f32 %v1430, %v1439
    %v1450 = vmul.f32 %v1430, %v1443
    %v1451 = vmul.f32 %v1430, %v1447
    %1452 = vset.pattern.permute.xlu0 3
    %1453 = vperm.xlu0 %1452, %v1208
    %v1454 = vpop.permute.xlu0 %1453
    %v1456 = vadd.f32 %v1454, %v1448
    %v1457 = vadd.f32 %v1454, %v1449
    %v1458 = vadd.f32 %v1454, %v1450
    %v1459 = vadd.f32 %v1454, %v1451
    %v1460 = vmul.f32 %v1424, %v1456
    %v1461 = vmul.f32 %v1425, %v1457
    %v1462 = vmul.f32 %v1426, %v1458
    %v1463 = vmul.f32 %v1427, %v1459
    %1464 = vset.pattern.permute.xlu0 4
    %1465 = vperm.xlu0 %1464, %v1321
    %v1466 = vpop.permute.xlu0 %1465
    %v1468 = vlaneseq
    %v1469 = vshrl.u32 %v1468, 7
    %v1470 = vsub.s32 4, %v1469
    %v1471 = vrot.slane %v1313, %v1470
    %v1472 = vlaneseq
    %v1473 = vshrl.u32 %v1472, 7
    %v1474 = vsub.s32 4, %v1473
    %v1475 = vrot.slane %v1314, %v1474
    %v1476 = vlaneseq
    %v1477 = vshrl.u32 %v1476, 7
    %v1478 = vsub.s32 4, %v1477
    %v1479 = vrot.slane %v1315, %v1478
    %v1480 = vlaneseq
    %v1481 = vshrl.u32 %v1480, 7
    %v1482 = vsub.s32 4, %v1481
    %v1483 = vrot.slane %v1316, %v1482
    %v1484 = vmul.f32 %v1466, %v1471
    %v1485 = vmul.f32 %v1466, %v1475
    %v1486 = vmul.f32 %v1466, %v1479
    %v1487 = vmul.f32 %v1466, %v1483
    %1488 = vset.pattern.permute.xlu0 4
    %1489 = vperm.xlu0 %1488, %v1208
    %v1490 = vpop.permute.xlu0 %1489
    %v1492 = vadd.f32 %v1490, %v1484
    %v1493 = vadd.f32 %v1490, %v1485
    %v1494 = vadd.f32 %v1490, %v1486
    %v1495 = vadd.f32 %v1490, %v1487
    %v1496 = vmul.f32 %v1460, %v1492
    %v1497 = vmul.f32 %v1461, %v1493
    %v1498 = vmul.f32 %v1462, %v1494
    %v1499 = vmul.f32 %v1463, %v1495
    %1500 = vset.pattern.permute.xlu0 5
    %1501 = vperm.xlu0 %1500, %v1321
    %v1502 = vpop.permute.xlu0 %1501
    %v1504 = vlaneseq
    %v1505 = vshrl.u32 %v1504, 7
    %v1506 = vsub.s32 5, %v1505
    %v1507 = vrot.slane %v1313, %v1506
    %v1508 = vlaneseq
    %v1509 = vshrl.u32 %v1508, 7
    %v1510 = vsub.s32 5, %v1509
    %v1511 = vrot.slane %v1314, %v1510
    %v1512 = vlaneseq
    %v1513 = vshrl.u32 %v1512, 7
    %v1514 = vsub.s32 5, %v1513
    %v1515 = vrot.slane %v1315, %v1514
    %v1516 = vlaneseq
    %v1517 = vshrl.u32 %v1516, 7
    %v1518 = vsub.s32 5, %v1517
    %v1519 = vrot.slane %v1316, %v1518
    %v1520 = vmul.f32 %v1502, %v1507
    %v1521 = vmul.f32 %v1502, %v1511
    %v1522 = vmul.f32 %v1502, %v1515
    %v1523 = vmul.f32 %v1502, %v1519
    %1524 = vset.pattern.permute.xlu0 5
    %1525 = vperm.xlu0 %1524, %v1208
    %v1526 = vpop.permute.xlu0 %1525
    %v1528 = vadd.f32 %v1526, %v1520
    %v1529 = vadd.f32 %v1526, %v1521
    %v1530 = vadd.f32 %v1526, %v1522
    %v1531 = vadd.f32 %v1526, %v1523
    %v1532 = vmul.f32 %v1496, %v1528
    %v1533 = vmul.f32 %v1497, %v1529
    %v1534 = vmul.f32 %v1498, %v1530
    %v1535 = vmul.f32 %v1499, %v1531
    %1536 = vset.pattern.permute.xlu0 6
    %1537 = vperm.xlu0 %1536, %v1321
    %v1538 = vpop.permute.xlu0 %1537
    %v1540 = vlaneseq
    %v1541 = vshrl.u32 %v1540, 7
    %v1542 = vsub.s32 6, %v1541
    %v1543 = vrot.slane %v1313, %v1542
    %v1544 = vlaneseq
    %v1545 = vshrl.u32 %v1544, 7
    %v1546 = vsub.s32 6, %v1545
    %v1547 = vrot.slane %v1314, %v1546
    %v1548 = vlaneseq
    %v1549 = vshrl.u32 %v1548, 7
    %v1550 = vsub.s32 6, %v1549
    %v1551 = vrot.slane %v1315, %v1550
    %v1552 = vlaneseq
    %v1553 = vshrl.u32 %v1552, 7
    %v1554 = vsub.s32 6, %v1553
    %v1555 = vrot.slane %v1316, %v1554
    %v1556 = vmul.f32 %v1538, %v1543
    %v1557 = vmul.f32 %v1538, %v1547
    %v1558 = vmul.f32 %v1538, %v1551
    %v1559 = vmul.f32 %v1538, %v1555
    %1560 = vset.pattern.permute.xlu0 6
    %1561 = vperm.xlu0 %1560, %v1208
    %v1562 = vpop.permute.xlu0 %1561
    %v1564 = vadd.f32 %v1562, %v1556
    %v1565 = vadd.f32 %v1562, %v1557
    %v1566 = vadd.f32 %v1562, %v1558
    %v1567 = vadd.f32 %v1562, %v1559
    %v1568 = vmul.f32 %v1532, %v1564
    %v1569 = vmul.f32 %v1533, %v1565
    %v1570 = vmul.f32 %v1534, %v1566
    %v1571 = vmul.f32 %v1535, %v1567
    %1572 = vset.pattern.permute.xlu0 7
    %1573 = vperm.xlu0 %1572, %v1321
    %v1574 = vpop.permute.xlu0 %1573
    %v1576 = vlaneseq
    %v1577 = vshrl.u32 %v1576, 7
    %v1578 = vsub.s32 7, %v1577
    %v1579 = vrot.slane %v1313, %v1578
    %v1580 = vlaneseq
    %v1581 = vshrl.u32 %v1580, 7
    %v1582 = vsub.s32 7, %v1581
    %v1583 = vrot.slane %v1314, %v1582
    %v1584 = vlaneseq
    %v1585 = vshrl.u32 %v1584, 7
    %v1586 = vsub.s32 7, %v1585
    %v1587 = vrot.slane %v1315, %v1586
    %v1588 = vlaneseq
    %v1589 = vshrl.u32 %v1588, 7
    %v1590 = vsub.s32 7, %v1589
    %v1591 = vrot.slane %v1316, %v1590
    %v1592 = vmul.f32 %v1574, %v1579
    %v1593 = vmul.f32 %v1574, %v1583
    %v1594 = vmul.f32 %v1574, %v1587
    %v1595 = vmul.f32 %v1574, %v1591
    %1596 = vset.pattern.permute.xlu0 7
    %1597 = vperm.xlu0 %1596, %v1208
    %v1598 = vpop.permute.xlu0 %1597
    %v1600 = vadd.f32 %v1598, %v1592
    %v1601 = vadd.f32 %v1598, %v1593
    %v1602 = vadd.f32 %v1598, %v1594
    %v1603 = vadd.f32 %v1598, %v1595
    %v1604 = vmul.f32 %v1568, %v1600
    %v1605 = vmul.f32 %v1569, %v1601
    %v1606 = vmul.f32 %v1570, %v1602
    %v1607 = vmul.f32 %v1571, %v1603
    %1608 = vset.pattern.permute.xlu0 8
    %1609 = vperm.xlu0 %1608, %v1321
    %v1610 = vpop.permute.xlu0 %1609
    %v1612 = vlaneseq
    %v1613 = vshrl.u32 %v1612, 7
    %v1614 = vsub.s32 0, %v1613
    %v1615 = vrot.slane %v1317, %v1614
    %v1616 = vlaneseq
    %v1617 = vshrl.u32 %v1616, 7
    %v1618 = vsub.s32 0, %v1617
    %v1619 = vrot.slane %v1318, %v1618
    %v1620 = vlaneseq
    %v1621 = vshrl.u32 %v1620, 7
    %v1622 = vsub.s32 0, %v1621
    %v1623 = vrot.slane %v1319, %v1622
    %v1624 = vlaneseq
    %v1625 = vshrl.u32 %v1624, 7
    %v1626 = vsub.s32 0, %v1625
    %v1627 = vrot.slane %v1320, %v1626
    %v1628 = vmul.f32 %v1610, %v1615
    %v1629 = vmul.f32 %v1610, %v1619
    %v1630 = vmul.f32 %v1610, %v1623
    %v1631 = vmul.f32 %v1610, %v1627
    %1632 = vset.pattern.permute.xlu0 8
    %1633 = vperm.xlu0 %1632, %v1208
    %v1634 = vpop.permute.xlu0 %1633
    %v1636 = vadd.f32 %v1634, %v1628
    %v1637 = vadd.f32 %v1634, %v1629
    %v1638 = vadd.f32 %v1634, %v1630
    %v1639 = vadd.f32 %v1634, %v1631
    %v1640 = vmul.f32 %v1604, %v1636
    %v1641 = vmul.f32 %v1605, %v1637
    %v1642 = vmul.f32 %v1606, %v1638
    %v1643 = vmul.f32 %v1607, %v1639
    %v1644 = vpack.c.bf16 %v1640, %v1640
    %v1645 = vpack.c.bf16 %v1641, %v1641
    %v1646 = vpack.c.bf16 %v1642, %v1642
    %v1647 = vpack.c.bf16 %v1643, %v1643
    %v1648 = vld [vmem:[#allocation2] sm:$0xff]
    %v1649 = vld [vmem:[#allocation2 + $0x8] sm:$0xff]
    %v1650 = vld [vmem:[#allocation2 + $0x10] sm:$0xff]
    %v1651 = vld [vmem:[#allocation2 + $0x18] sm:$0xff]
    %v1652 = vld [vmem:[#allocation2 + $0x20] sm:$0xff]
    %v1653 = vld [vmem:[#allocation2 + $0x28] sm:$0xff]
    %v1654 = vld [vmem:[#allocation2 + $0x30] sm:$0xff]
    %v1655 = vld [vmem:[#allocation2 + $0x38] sm:$0xff]
    %v1656 = vld [vmem:[#allocation2 + $0x40] sm:$0xff]
    %v1657 = vld [vmem:[#allocation2 + $0x48] sm:$0xff]
    %v1658 = vld [vmem:[#allocation2 + $0x50] sm:$0xff]
    %v1659 = vld [vmem:[#allocation2 + $0x58] sm:$0xff]
    %v1660 = vld [vmem:[#allocation2 + $0x60] sm:$0xff]
    %v1661 = vld [vmem:[#allocation2 + $0x68] sm:$0xff]
    %v1662 = vld [vmem:[#allocation2 + $0x70] sm:$0xff]
    %v1663 = vld [vmem:[#allocation2 + $0x78] sm:$0xff]
    %v1664 = vld [vmem:[#allocation2 + $0x80] sm:$0xff]
    %v1665 = vld [vmem:[#allocation2 + $0x88] sm:$0xff]
    %v1666 = vld [vmem:[#allocation2 + $0x90] sm:$0xff]
    %v1667 = vld [vmem:[#allocation2 + $0x98] sm:$0xff]
    %v1668 = vld [vmem:[#allocation2 + $0xa0] sm:$0xff]
    %v1669 = vld [vmem:[#allocation2 + $0xa8] sm:$0xff]
    %v1670 = vld [vmem:[#allocation2 + $0xb0] sm:$0xff]
    %v1671 = vld [vmem:[#allocation2 + $0xb8] sm:$0xff]
    %v1672 = vld [vmem:[#allocation2 + $0xc0] sm:$0xff]
    %v1673 = vld [vmem:[#allocation2 + $0xc8] sm:$0xff]
    %v1674 = vld [vmem:[#allocation2 + $0xd0] sm:$0xff]
    %v1675 = vld [vmem:[#allocation2 + $0xd8] sm:$0xff]
    %v1676 = vld [vmem:[#allocation2 + $0xe0] sm:$0xff]
    %v1677 = vld [vmem:[#allocation2 + $0xe8] sm:$0xff]
    %v1678 = vld [vmem:[#allocation2 + $0xf0] sm:$0xff]
    %v1679 = vld [vmem:[#allocation2 + $0xf8] sm:$0xff]
    %v1680 = vld [vmem:[#allocation2 + $0x100] sm:$0xff]
    %v1681 = vld [vmem:[#allocation2 + $0x108] sm:$0xff]
    %v1682 = vld [vmem:[#allocation2 + $0x110] sm:$0xff]
    %v1683 = vld [vmem:[#allocation2 + $0x118] sm:$0xff]
    %v1684 = vld [vmem:[#allocation2 + $0x120] sm:$0xff]
    %v1685 = vld [vmem:[#allocation2 + $0x128] sm:$0xff]
    %v1686 = vld [vmem:[#allocation2 + $0x130] sm:$0xff]
    %v1687 = vld [vmem:[#allocation2 + $0x138] sm:$0xff]
    %v1688 = vld [vmem:[#allocation2 + $0x140] sm:$0xff]
    %v1689 = vld [vmem:[#allocation2 + $0x148] sm:$0xff]
    %v1690 = vld [vmem:[#allocation2 + $0x150] sm:$0xff]
    %v1691 = vld [vmem:[#allocation2 + $0x158] sm:$0xff]
    %v1692 = vld [vmem:[#allocation2 + $0x160] sm:$0xff]
    %v1693 = vld [vmem:[#allocation2 + $0x168] sm:$0xff]
    %v1694 = vld [vmem:[#allocation2 + $0x170] sm:$0xff]
    %v1695 = vld [vmem:[#allocation2 + $0x178] sm:$0xff]
    %v1696 = vld [vmem:[#allocation2 + $0x180] sm:$0xff]
    %v1697 = vld [vmem:[#allocation2 + $0x188] sm:$0xff]
    %v1698 = vld [vmem:[#allocation2 + $0x190] sm:$0xff]
    %v1699 = vld [vmem:[#allocation2 + $0x198] sm:$0xff]
    %v1700 = vld [vmem:[#allocation2 + $0x1a0] sm:$0xff]
    %v1701 = vld [vmem:[#allocation2 + $0x1a8] sm:$0xff]
    %v1702 = vld [vmem:[#allocation2 + $0x1b0] sm:$0xff]
    %v1703 = vld [vmem:[#allocation2 + $0x1b8] sm:$0xff]
    %v1704 = vld [vmem:[#allocation2 + $0x1c0] sm:$0xff]
    %v1705 = vld [vmem:[#allocation2 + $0x1c8] sm:$0xff]
    %v1706 = vld [vmem:[#allocation2 + $0x1d0] sm:$0xff]
    %v1707 = vld [vmem:[#allocation2 + $0x1d8] sm:$0xff]
    %v1708 = vld [vmem:[#allocation2 + $0x1e0] sm:$0xff]
    %v1709 = vld [vmem:[#allocation2 + $0x1e8] sm:$0xff]
    %v1710 = vld [vmem:[#allocation2 + $0x1f0] sm:$0xff]
    %v1711 = vld [vmem:[#allocation2 + $0x1f8] sm:$0xff]
    %v1712 = vld [vmem:[#allocation2 + $0x200] sm:$0xff]
    %v1713 = vld [vmem:[#allocation2 + $0x208] sm:$0xff]
    %v1714 = vld [vmem:[#allocation2 + $0x210] sm:$0xff]
    %v1715 = vld [vmem:[#allocation2 + $0x218] sm:$0xff]
    %v1716 = vld [vmem:[#allocation2 + $0x220] sm:$0xff]
    %v1717 = vld [vmem:[#allocation2 + $0x228] sm:$0xff]
    %v1718 = vld [vmem:[#allocation2 + $0x230] sm:$0xff]
    %v1719 = vld [vmem:[#allocation2 + $0x238] sm:$0xff]
    %v1720 = vld [vmem:[#allocation2 + $0x240] sm:$0xff]
    %v1721 = vld [vmem:[#allocation2 + $0x248] sm:$0xff]
    %v1722 = vld [vmem:[#allocation2 + $0x250] sm:$0xff]
    %v1723 = vld [vmem:[#allocation2 + $0x258] sm:$0xff]
    %v1724 = vld [vmem:[#allocation2 + $0x260] sm:$0xff]
    %v1725 = vld [vmem:[#allocation2 + $0x268] sm:$0xff]
    %v1726 = vld [vmem:[#allocation2 + $0x270] sm:$0xff]
    %v1727 = vld [vmem:[#allocation2 + $0x278] sm:$0xff]
    %v1728 = vld [vmem:[#allocation2 + $0x280] sm:$0xff]
    %v1729 = vld [vmem:[#allocation2 + $0x288] sm:$0xff]
    %v1730 = vld [vmem:[#allocation2 + $0x290] sm:$0xff]
    %v1731 = vld [vmem:[#allocation2 + $0x298] sm:$0xff]
    %v1732 = vld [vmem:[#allocation2 + $0x2a0] sm:$0xff]
    %v1733 = vld [vmem:[#allocation2 + $0x2a8] sm:$0xff]
    %v1734 = vld [vmem:[#allocation2 + $0x2b0] sm:$0xff]
    %v1735 = vld [vmem:[#allocation2 + $0x2b8] sm:$0xff]
    %v1736 = vld [vmem:[#allocation2 + $0x2c0] sm:$0xff]
    %v1737 = vld [vmem:[#allocation2 + $0x2c8] sm:$0xff]
    %v1738 = vld [vmem:[#allocation2 + $0x2d0] sm:$0xff]
    %v1739 = vld [vmem:[#allocation2 + $0x2d8] sm:$0xff]
    %v1740 = vld [vmem:[#allocation2 + $0x2e0] sm:$0xff]
    %v1741 = vld [vmem:[#allocation2 + $0x2e8] sm:$0xff]
    %v1742 = vld [vmem:[#allocation2 + $0x2f0] sm:$0xff]
    %v1743 = vld [vmem:[#allocation2 + $0x2f8] sm:$0xff]
    %v1744 = vld [vmem:[#allocation2 + $0x300] sm:$0xff]
    %v1745 = vld [vmem:[#allocation2 + $0x308] sm:$0xff]
    %v1746 = vld [vmem:[#allocation2 + $0x310] sm:$0xff]
    %v1747 = vld [vmem:[#allocation2 + $0x318] sm:$0xff]
    %v1748 = vld [vmem:[#allocation2 + $0x320] sm:$0xff]
    %v1749 = vld [vmem:[#allocation2 + $0x328] sm:$0xff]
    %v1750 = vld [vmem:[#allocation2 + $0x330] sm:$0xff]
    %v1751 = vld [vmem:[#allocation2 + $0x338] sm:$0xff]
    %v1752 = vld [vmem:[#allocation2 + $0x340] sm:$0xff]
    %v1753 = vld [vmem:[#allocation2 + $0x348] sm:$0xff]
    %v1754 = vld [vmem:[#allocation2 + $0x350] sm:$0xff]
    %v1755 = vld [vmem:[#allocation2 + $0x358] sm:$0xff]
    %v1756 = vld [vmem:[#allocation2 + $0x360] sm:$0xff]
    %v1757 = vld [vmem:[#allocation2 + $0x368] sm:$0xff]
    %v1758 = vld [vmem:[#allocation2 + $0x370] sm:$0xff]
    %v1759 = vld [vmem:[#allocation2 + $0x378] sm:$0xff]
    %v1760 = vld [vmem:[#allocation2 + $0x380] sm:$0xff]
    %v1761 = vld [vmem:[#allocation2 + $0x388] sm:$0xff]
    %v1762 = vld [vmem:[#allocation2 + $0x390] sm:$0xff]
    %v1763 = vld [vmem:[#allocation2 + $0x398] sm:$0xff]
    %v1764 = vld [vmem:[#allocation2 + $0x3a0] sm:$0xff]
    %v1765 = vld [vmem:[#allocation2 + $0x3a8] sm:$0xff]
    %v1766 = vld [vmem:[#allocation2 + $0x3b0] sm:$0xff]
    %v1767 = vld [vmem:[#allocation2 + $0x3b8] sm:$0xff]
    %v1768 = vld [vmem:[#allocation2 + $0x3c0] sm:$0xff]
    %v1769 = vld [vmem:[#allocation2 + $0x3c8] sm:$0xff]
    %v1770 = vld [vmem:[#allocation2 + $0x3d0] sm:$0xff]
    %v1771 = vld [vmem:[#allocation2 + $0x3d8] sm:$0xff]
    %v1772 = vld [vmem:[#allocation2 + $0x3e0] sm:$0xff]
    %v1773 = vld [vmem:[#allocation2 + $0x3e8] sm:$0xff]
    %v1774 = vld [vmem:[#allocation2 + $0x3f0] sm:$0xff]
    %v1775 = vld [vmem:[#allocation2 + $0x3f8] sm:$0xff]
    %v1776 = vld [vmem:[#allocation2 + $0x400] sm:$0xff]
    %v1777 = vld [vmem:[#allocation2 + $0x408] sm:$0xff]
    %v1778 = vld [vmem:[#allocation2 + $0x410] sm:$0xff]
    %v1779 = vld [vmem:[#allocation2 + $0x418] sm:$0xff]
    %v1780 = vld [vmem:[#allocation2 + $0x420] sm:$0xff]
    %v1781 = vld [vmem:[#allocation2 + $0x428] sm:$0xff]
    %v1782 = vld [vmem:[#allocation2 + $0x430] sm:$0xff]
    %v1783 = vld [vmem:[#allocation2 + $0x438] sm:$0xff]
    %v1784 = vld [vmem:[#allocation2 + $0x440] sm:$0xff]
    %v1785 = vld [vmem:[#allocation2 + $0x448] sm:$0xff]
    %v1786 = vld [vmem:[#allocation2 + $0x450] sm:$0xff]
    %v1787 = vld [vmem:[#allocation2 + $0x458] sm:$0xff]
    %v1788 = vld [vmem:[#allocation2 + $0x460] sm:$0xff]
    %v1789 = vld [vmem:[#allocation2 + $0x468] sm:$0xff]
    %v1790 = vld [vmem:[#allocation2 + $0x470] sm:$0xff]
    %v1791 = vld [vmem:[#allocation2 + $0x478] sm:$0xff]
    %v1792 = vld [vmem:[#allocation2 + $0x480] sm:$0xff]
    %v1793 = vld [vmem:[#allocation2 + $0x488] sm:$0xff]
    %v1794 = vld [vmem:[#allocation2 + $0x490] sm:$0xff]
    %v1795 = vld [vmem:[#allocation2 + $0x498] sm:$0xff]
    %v1796 = vld [vmem:[#allocation2 + $0x4a0] sm:$0xff]
    %v1797 = vld [vmem:[#allocation2 + $0x4a8] sm:$0xff]
    %v1798 = vld [vmem:[#allocation2 + $0x4b0] sm:$0xff]
    %v1799 = vld [vmem:[#allocation2 + $0x4b8] sm:$0xff]
    %v1800 = vld [vmem:[#allocation2 + $0x4c0] sm:$0xff]
    %v1801 = vld [vmem:[#allocation2 + $0x4c8] sm:$0xff]
    %v1802 = vld [vmem:[#allocation2 + $0x4d0] sm:$0xff]
    %v1803 = vld [vmem:[#allocation2 + $0x4d8] sm:$0xff]
    %v1804 = vld [vmem:[#allocation2 + $0x4e0] sm:$0xff]
    %v1805 = vld [vmem:[#allocation2 + $0x4e8] sm:$0xff]
    %v1806 = vld [vmem:[#allocation2 + $0x4f0] sm:$0xff]
    %v1807 = vld [vmem:[#allocation2 + $0x4f8] sm:$0xff]
    %v1808 = vld [vmem:[#allocation2 + $0x500] sm:$0xff]
    %v1809 = vld [vmem:[#allocation2 + $0x508] sm:$0xff]
    %v1810 = vld [vmem:[#allocation2 + $0x510] sm:$0xff]
    %v1811 = vld [vmem:[#allocation2 + $0x518] sm:$0xff]
    %v1812 = vld [vmem:[#allocation2 + $0x520] sm:$0xff]
    %v1813 = vld [vmem:[#allocation2 + $0x528] sm:$0xff]
    %v1814 = vld [vmem:[#allocation2 + $0x530] sm:$0xff]
    %v1815 = vld [vmem:[#allocation2 + $0x538] sm:$0xff]
    %v1816 = vld [vmem:[#allocation2 + $0x540] sm:$0xff]
    %v1817 = vld [vmem:[#allocation2 + $0x548] sm:$0xff]
    %v1818 = vld [vmem:[#allocation2 + $0x550] sm:$0xff]
    %v1819 = vld [vmem:[#allocation2 + $0x558] sm:$0xff]
    %v1820 = vld [vmem:[#allocation2 + $0x560] sm:$0xff]
    %v1821 = vld [vmem:[#allocation2 + $0x568] sm:$0xff]
    %v1822 = vld [vmem:[#allocation2 + $0x570] sm:$0xff]
    %v1823 = vld [vmem:[#allocation2 + $0x578] sm:$0xff]
    %v1824 = vld [vmem:[#allocation2 + $0x580] sm:$0xff]
    %v1825 = vld [vmem:[#allocation2 + $0x588] sm:$0xff]
    %v1826 = vld [vmem:[#allocation2 + $0x590] sm:$0xff]
    %v1827 = vld [vmem:[#allocation2 + $0x598] sm:$0xff]
    %v1828 = vld [vmem:[#allocation2 + $0x5a0] sm:$0xff]
    %v1829 = vld [vmem:[#allocation2 + $0x5a8] sm:$0xff]
    %v1830 = vld [vmem:[#allocation2 + $0x5b0] sm:$0xff]
    %v1831 = vld [vmem:[#allocation2 + $0x5b8] sm:$0xff]
    %v1832 = vld [vmem:[#allocation2 + $0x5c0] sm:$0xff]
    %v1833 = vld [vmem:[#allocation2 + $0x5c8] sm:$0xff]
    %v1834 = vld [vmem:[#allocation2 + $0x5d0] sm:$0xff]
    %v1835 = vld [vmem:[#allocation2 + $0x5d8] sm:$0xff]
    %v1836 = vld [vmem:[#allocation2 + $0x5e0] sm:$0xff]
    %v1837 = vld [vmem:[#allocation2 + $0x5e8] sm:$0xff]
    %v1838 = vld [vmem:[#allocation2 + $0x5f0] sm:$0xff]
    %v1839 = vld [vmem:[#allocation2 + $0x5f8] sm:$0xff]
    %v1840 = vld [vmem:[#allocation2 + $0x600] sm:$0xff]
    %v1841 = vld [vmem:[#allocation2 + $0x608] sm:$0xff]
    %v1842 = vld [vmem:[#allocation2 + $0x610] sm:$0xff]
    %v1843 = vld [vmem:[#allocation2 + $0x618] sm:$0xff]
    %v1844 = vld [vmem:[#allocation2 + $0x620] sm:$0xff]
    %v1845 = vld [vmem:[#allocation2 + $0x628] sm:$0xff]
    %v1846 = vld [vmem:[#allocation2 + $0x630] sm:$0xff]
    %v1847 = vld [vmem:[#allocation2 + $0x638] sm:$0xff]
    %v1848 = vld [vmem:[#allocation2 + $0x640] sm:$0xff]
    %v1849 = vld [vmem:[#allocation2 + $0x648] sm:$0xff]
    %v1850 = vld [vmem:[#allocation2 + $0x650] sm:$0xff]
    %v1851 = vld [vmem:[#allocation2 + $0x658] sm:$0xff]
    %v1852 = vld [vmem:[#allocation2 + $0x660] sm:$0xff]
    %v1853 = vld [vmem:[#allocation2 + $0x668] sm:$0xff]
    %v1854 = vld [vmem:[#allocation2 + $0x670] sm:$0xff]
    %v1855 = vld [vmem:[#allocation2 + $0x678] sm:$0xff]
    %v1856 = vld [vmem:[#allocation2 + $0x680] sm:$0xff]
    %v1857 = vld [vmem:[#allocation2 + $0x688] sm:$0xff]
    %v1858 = vld [vmem:[#allocation2 + $0x690] sm:$0xff]
    %v1859 = vld [vmem:[#allocation2 + $0x698] sm:$0xff]
    %v1860 = vld [vmem:[#allocation2 + $0x6a0] sm:$0xff]
    %v1861 = vld [vmem:[#allocation2 + $0x6a8] sm:$0xff]
    %v1862 = vld [vmem:[#allocation2 + $0x6b0] sm:$0xff]
    %v1863 = vld [vmem:[#allocation2 + $0x6b8] sm:$0xff]
    %v1864 = vld [vmem:[#allocation2 + $0x6c0] sm:$0xff]
    %v1865 = vld [vmem:[#allocation2 + $0x6c8] sm:$0xff]
    %v1866 = vld [vmem:[#allocation2 + $0x6d0] sm:$0xff]
    %v1867 = vld [vmem:[#allocation2 + $0x6d8] sm:$0xff]
    %v1868 = vld [vmem:[#allocation2 + $0x6e0] sm:$0xff]
    %v1869 = vld [vmem:[#allocation2 + $0x6e8] sm:$0xff]
    %v1870 = vld [vmem:[#allocation2 + $0x6f0] sm:$0xff]
    %v1871 = vld [vmem:[#allocation2 + $0x6f8] sm:$0xff]
    %v1872 = vld [vmem:[#allocation2 + $0x700] sm:$0xff]
    %v1873 = vld [vmem:[#allocation2 + $0x708] sm:$0xff]
    %v1874 = vld [vmem:[#allocation2 + $0x710] sm:$0xff]
    %v1875 = vld [vmem:[#allocation2 + $0x718] sm:$0xff]
    %v1876 = vld [vmem:[#allocation2 + $0x720] sm:$0xff]
    %v1877 = vld [vmem:[#allocation2 + $0x728] sm:$0xff]
    %v1878 = vld [vmem:[#allocation2 + $0x730] sm:$0xff]
    %v1879 = vld [vmem:[#allocation2 + $0x738] sm:$0xff]
    %v1880 = vld [vmem:[#allocation2 + $0x740] sm:$0xff]
    %v1881 = vld [vmem:[#allocation2 + $0x748] sm:$0xff]
    %v1882 = vld [vmem:[#allocation2 + $0x750] sm:$0xff]
    %v1883 = vld [vmem:[#allocation2 + $0x758] sm:$0xff]
    %v1884 = vld [vmem:[#allocation2 + $0x760] sm:$0xff]
    %v1885 = vld [vmem:[#allocation2 + $0x768] sm:$0xff]
    %v1886 = vld [vmem:[#allocation2 + $0x770] sm:$0xff]
    %v1887 = vld [vmem:[#allocation2 + $0x778] sm:$0xff]
    %v1888 = vld [vmem:[#allocation2 + $0x780] sm:$0xff]
    %v1889 = vld [vmem:[#allocation2 + $0x788] sm:$0xff]
    %v1890 = vld [vmem:[#allocation2 + $0x790] sm:$0xff]
    %v1891 = vld [vmem:[#allocation2 + $0x798] sm:$0xff]
    %v1892 = vld [vmem:[#allocation2 + $0x7a0] sm:$0xff]
    %v1893 = vld [vmem:[#allocation2 + $0x7a8] sm:$0xff]
    %v1894 = vld [vmem:[#allocation2 + $0x7b0] sm:$0xff]
    %v1895 = vld [vmem:[#allocation2 + $0x7b8] sm:$0xff]
    %v1896 = vld [vmem:[#allocation2 + $0x7c0] sm:$0xff]
    %v1897 = vld [vmem:[#allocation2 + $0x7c8] sm:$0xff]
    %v1898 = vld [vmem:[#allocation2 + $0x7d0] sm:$0xff]
    %v1899 = vld [vmem:[#allocation2 + $0x7d8] sm:$0xff]
    %v1900 = vld [vmem:[#allocation2 + $0x7e0] sm:$0xff]
    %v1901 = vld [vmem:[#allocation2 + $0x7e8] sm:$0xff]
    %v1902 = vld [vmem:[#allocation2 + $0x7f0] sm:$0xff]
    %v1903 = vld [vmem:[#allocation2 + $0x7f8] sm:$0xff]
    %v2160 = vunpack.c.l.b16 %v1648
    %v2161 = vunpack.c.h.b16 %v1648
    %v2162 = vunpack.c.l.b16 %v1649
    %v2163 = vunpack.c.h.b16 %v1649
    %v2164 = vunpack.c.l.b16 %v1650
    %v2165 = vunpack.c.h.b16 %v1650
    %v2166 = vunpack.c.l.b16 %v1651
    %v2167 = vunpack.c.h.b16 %v1651
    %v2168 = vunpack.c.l.b16 %v1652
    %v2169 = vunpack.c.h.b16 %v1652
    %v2170 = vunpack.c.l.b16 %v1653
    %v2171 = vunpack.c.h.b16 %v1653
    %v2172 = vunpack.c.l.b16 %v1654
    %v2173 = vunpack.c.h.b16 %v1654
    %v2174 = vunpack.c.l.b16 %v1655
    %v2175 = vunpack.c.h.b16 %v1655
    %v2176 = vunpack.c.l.b16 %v1656
    %v2177 = vunpack.c.h.b16 %v1656
    %v2178 = vunpack.c.l.b16 %v1657
    %v2179 = vunpack.c.h.b16 %v1657
    %v2180 = vunpack.c.l.b16 %v1658
    %v2181 = vunpack.c.h.b16 %v1658
    %v2182 = vunpack.c.l.b16 %v1659
    %v2183 = vunpack.c.h.b16 %v1659
    %v2184 = vunpack.c.l.b16 %v1660
    %v2185 = vunpack.c.h.b16 %v1660
    %v2186 = vunpack.c.l.b16 %v1661
    %v2187 = vunpack.c.h.b16 %v1661
    %v2188 = vunpack.c.l.b16 %v1662
    %v2189 = vunpack.c.h.b16 %v1662
    %v2190 = vunpack.c.l.b16 %v1663
    %v2191 = vunpack.c.h.b16 %v1663
    %v2192 = vunpack.c.l.b16 %v1664
    %v2193 = vunpack.c.h.b16 %v1664
    %v2194 = vunpack.c.l.b16 %v1665
    %v2195 = vunpack.c.h.b16 %v1665
    %v2196 = vunpack.c.l.b16 %v1666
    %v2197 = vunpack.c.h.b16 %v1666
    %v2198 = vunpack.c.l.b16 %v1667
    %v2199 = vunpack.c.h.b16 %v1667
    %v2200 = vunpack.c.l.b16 %v1668
    %v2201 = vunpack.c.h.b16 %v1668
    %v2202 = vunpack.c.l.b16 %v1669
    %v2203 = vunpack.c.h.b16 %v1669
    %v2204 = vunpack.c.l.b16 %v1670
    %v2205 = vunpack.c.h.b16 %v1670
    %v2206 = vunpack.c.l.b16 %v1671
    %v2207 = vunpack.c.h.b16 %v1671
    %v2208 = vunpack.c.l.b16 %v1672
    %v2209 = vunpack.c.h.b16 %v1672
    %v2210 = vunpack.c.l.b16 %v1673
    %v2211 = vunpack.c.h.b16 %v1673
    %v2212 = vunpack.c.l.b16 %v1674
    %v2213 = vunpack.c.h.b16 %v1674
    %v2214 = vunpack.c.l.b16 %v1675
    %v2215 = vunpack.c.h.b16 %v1675
    %v2216 = vunpack.c.l.b16 %v1676
    %v2217 = vunpack.c.h.b16 %v1676
    %v2218 = vunpack.c.l.b16 %v1677
    %v2219 = vunpack.c.h.b16 %v1677
    %v2220 = vunpack.c.l.b16 %v1678
    %v2221 = vunpack.c.h.b16 %v1678
    %v2222 = vunpack.c.l.b16 %v1679
    %v2223 = vunpack.c.h.b16 %v1679
    %v2224 = vunpack.c.l.b16 %v1680
    %v2225 = vunpack.c.h.b16 %v1680
    %v2226 = vunpack.c.l.b16 %v1681
    %v2227 = vunpack.c.h.b16 %v1681
    %v2228 = vunpack.c.l.b16 %v1682
    %v2229 = vunpack.c.h.b16 %v1682
    %v2230 = vunpack.c.l.b16 %v1683
    %v2231 = vunpack.c.h.b16 %v1683
    %v2232 = vunpack.c.l.b16 %v1684
    %v2233 = vunpack.c.h.b16 %v1684
    %v2234 = vunpack.c.l.b16 %v1685
    %v2235 = vunpack.c.h.b16 %v1685
    %v2236 = vunpack.c.l.b16 %v1686
    %v2237 = vunpack.c.h.b16 %v1686
    %v2238 = vunpack.c.l.b16 %v1687
    %v2239 = vunpack.c.h.b16 %v1687
    %v2240 = vunpack.c.l.b16 %v1688
    %v2241 = vunpack.c.h.b16 %v1688
    %v2242 = vunpack.c.l.b16 %v1689
    %v2243 = vunpack.c.h.b16 %v1689
    %v2244 = vunpack.c.l.b16 %v1690
    %v2245 = vunpack.c.h.b16 %v1690
    %v2246 = vunpack.c.l.b16 %v1691
    %v2247 = vunpack.c.h.b16 %v1691
    %v2248 = vunpack.c.l.b16 %v1692
    %v2249 = vunpack.c.h.b16 %v1692
    %v2250 = vunpack.c.l.b16 %v1693
    %v2251 = vunpack.c.h.b16 %v1693
    %v2252 = vunpack.c.l.b16 %v1694
    %v2253 = vunpack.c.h.b16 %v1694
    %v2254 = vunpack.c.l.b16 %v1695
    %v2255 = vunpack.c.h.b16 %v1695
    %v2256 = vunpack.c.l.b16 %v1696
    %v2257 = vunpack.c.h.b16 %v1696
    %v2258 = vunpack.c.l.b16 %v1697
    %v2259 = vunpack.c.h.b16 %v1697
    %v2260 = vunpack.c.l.b16 %v1698
    %v2261 = vunpack.c.h.b16 %v1698
    %v2262 = vunpack.c.l.b16 %v1699
    %v2263 = vunpack.c.h.b16 %v1699
    %v2264 = vunpack.c.l.b16 %v1700
    %v2265 = vunpack.c.h.b16 %v1700
    %v2266 = vunpack.c.l.b16 %v1701
    %v2267 = vunpack.c.h.b16 %v1701
    %v2268 = vunpack.c.l.b16 %v1702
    %v2269 = vunpack.c.h.b16 %v1702
    %v2270 = vunpack.c.l.b16 %v1703
    %v2271 = vunpack.c.h.b16 %v1703
    %v2272 = vunpack.c.l.b16 %v1704
    %v2273 = vunpack.c.h.b16 %v1704
    %v2274 = vunpack.c.l.b16 %v1705
    %v2275 = vunpack.c.h.b16 %v1705
    %v2276 = vunpack.c.l.b16 %v1706
    %v2277 = vunpack.c.h.b16 %v1706
    %v2278 = vunpack.c.l.b16 %v1707
    %v2279 = vunpack.c.h.b16 %v1707
    %v2280 = vunpack.c.l.b16 %v1708
    %v2281 = vunpack.c.h.b16 %v1708
    %v2282 = vunpack.c.l.b16 %v1709
    %v2283 = vunpack.c.h.b16 %v1709
    %v2284 = vunpack.c.l.b16 %v1710
    %v2285 = vunpack.c.h.b16 %v1710
    %v2286 = vunpack.c.l.b16 %v1711
    %v2287 = vunpack.c.h.b16 %v1711
    %v2288 = vunpack.c.l.b16 %v1712
    %v2289 = vunpack.c.h.b16 %v1712
    %v2290 = vunpack.c.l.b16 %v1713
    %v2291 = vunpack.c.h.b16 %v1713
    %v2292 = vunpack.c.l.b16 %v1714
    %v2293 = vunpack.c.h.b16 %v1714
    %v2294 = vunpack.c.l.b16 %v1715
    %v2295 = vunpack.c.h.b16 %v1715
    %v2296 = vunpack.c.l.b16 %v1716
    %v2297 = vunpack.c.h.b16 %v1716
    %v2298 = vunpack.c.l.b16 %v1717
    %v2299 = vunpack.c.h.b16 %v1717
    %v2300 = vunpack.c.l.b16 %v1718
    %v2301 = vunpack.c.h.b16 %v1718
    %v2302 = vunpack.c.l.b16 %v1719
    %v2303 = vunpack.c.h.b16 %v1719
    %v2304 = vunpack.c.l.b16 %v1720
    %v2305 = vunpack.c.h.b16 %v1720
    %v2306 = vunpack.c.l.b16 %v1721
    %v2307 = vunpack.c.h.b16 %v1721
    %v2308 = vunpack.c.l.b16 %v1722
    %v2309 = vunpack.c.h.b16 %v1722
    %v2310 = vunpack.c.l.b16 %v1723
    %v2311 = vunpack.c.h.b16 %v1723
    %v2312 = vunpack.c.l.b16 %v1724
    %v2313 = vunpack.c.h.b16 %v1724
    %v2314 = vunpack.c.l.b16 %v1725
    %v2315 = vunpack.c.h.b16 %v1725
    %v2316 = vunpack.c.l.b16 %v1726
    %v2317 = vunpack.c.h.b16 %v1726
    %v2318 = vunpack.c.l.b16 %v1727
    %v2319 = vunpack.c.h.b16 %v1727
    %v2320 = vunpack.c.l.b16 %v1728
    %v2321 = vunpack.c.h.b16 %v1728
    %v2322 = vunpack.c.l.b16 %v1729
    %v2323 = vunpack.c.h.b16 %v1729
    %v2324 = vunpack.c.l.b16 %v1730
    %v2325 = vunpack.c.h.b16 %v1730
    %v2326 = vunpack.c.l.b16 %v1731
    %v2327 = vunpack.c.h.b16 %v1731
    %v2328 = vunpack.c.l.b16 %v1732
    %v2329 = vunpack.c.h.b16 %v1732
    %v2330 = vunpack.c.l.b16 %v1733
    %v2331 = vunpack.c.h.b16 %v1733
    %v2332 = vunpack.c.l.b16 %v1734
    %v2333 = vunpack.c.h.b16 %v1734
    %v2334 = vunpack.c.l.b16 %v1735
    %v2335 = vunpack.c.h.b16 %v1735
    %v2336 = vunpack.c.l.b16 %v1736
    %v2337 = vunpack.c.h.b16 %v1736
    %v2338 = vunpack.c.l.b16 %v1737
    %v2339 = vunpack.c.h.b16 %v1737
    %v2340 = vunpack.c.l.b16 %v1738
    %v2341 = vunpack.c.h.b16 %v1738
    %v2342 = vunpack.c.l.b16 %v1739
    %v2343 = vunpack.c.h.b16 %v1739
    %v2344 = vunpack.c.l.b16 %v1740
    %v2345 = vunpack.c.h.b16 %v1740
    %v2346 = vunpack.c.l.b16 %v1741
    %v2347 = vunpack.c.h.b16 %v1741
    %v2348 = vunpack.c.l.b16 %v1742
    %v2349 = vunpack.c.h.b16 %v1742
    %v2350 = vunpack.c.l.b16 %v1743
    %v2351 = vunpack.c.h.b16 %v1743
    %v2352 = vunpack.c.l.b16 %v1744
    %v2353 = vunpack.c.h.b16 %v1744
    %v2354 = vunpack.c.l.b16 %v1745
    %v2355 = vunpack.c.h.b16 %v1745
    %v2356 = vunpack.c.l.b16 %v1746
    %v2357 = vunpack.c.h.b16 %v1746
    %v2358 = vunpack.c.l.b16 %v1747
    %v2359 = vunpack.c.h.b16 %v1747
    %v2360 = vunpack.c.l.b16 %v1748
    %v2361 = vunpack.c.h.b16 %v1748
    %v2362 = vunpack.c.l.b16 %v1749
    %v2363 = vunpack.c.h.b16 %v1749
    %v2364 = vunpack.c.l.b16 %v1750
    %v2365 = vunpack.c.h.b16 %v1750
    %v2366 = vunpack.c.l.b16 %v1751
    %v2367 = vunpack.c.h.b16 %v1751
    %v2368 = vunpack.c.l.b16 %v1752
    %v2369 = vunpack.c.h.b16 %v1752
    %v2370 = vunpack.c.l.b16 %v1753
    %v2371 = vunpack.c.h.b16 %v1753
    %v2372 = vunpack.c.l.b16 %v1754
    %v2373 = vunpack.c.h.b16 %v1754
    %v2374 = vunpack.c.l.b16 %v1755
    %v2375 = vunpack.c.h.b16 %v1755
    %v2376 = vunpack.c.l.b16 %v1756
    %v2377 = vunpack.c.h.b16 %v1756
    %v2378 = vunpack.c.l.b16 %v1757
    %v2379 = vunpack.c.h.b16 %v1757
    %v2380 = vunpack.c.l.b16 %v1758
    %v2381 = vunpack.c.h.b16 %v1758
    %v2382 = vunpack.c.l.b16 %v1759
    %v2383 = vunpack.c.h.b16 %v1759
    %v2384 = vunpack.c.l.b16 %v1760
    %v2385 = vunpack.c.h.b16 %v1760
    %v2386 = vunpack.c.l.b16 %v1761
    %v2387 = vunpack.c.h.b16 %v1761
    %v2388 = vunpack.c.l.b16 %v1762
    %v2389 = vunpack.c.h.b16 %v1762
    %v2390 = vunpack.c.l.b16 %v1763
    %v2391 = vunpack.c.h.b16 %v1763
    %v2392 = vunpack.c.l.b16 %v1764
    %v2393 = vunpack.c.h.b16 %v1764
    %v2394 = vunpack.c.l.b16 %v1765
    %v2395 = vunpack.c.h.b16 %v1765
    %v2396 = vunpack.c.l.b16 %v1766
    %v2397 = vunpack.c.h.b16 %v1766
    %v2398 = vunpack.c.l.b16 %v1767
    %v2399 = vunpack.c.h.b16 %v1767
    %v2400 = vunpack.c.l.b16 %v1768
    %v2401 = vunpack.c.h.b16 %v1768
    %v2402 = vunpack.c.l.b16 %v1769
    %v2403 = vunpack.c.h.b16 %v1769
    %v2404 = vunpack.c.l.b16 %v1770
    %v2405 = vunpack.c.h.b16 %v1770
    %v2406 = vunpack.c.l.b16 %v1771
    %v2407 = vunpack.c.h.b16 %v1771
    %v2408 = vunpack.c.l.b16 %v1772
    %v2409 = vunpack.c.h.b16 %v1772
    %v2410 = vunpack.c.l.b16 %v1773
    %v2411 = vunpack.c.h.b16 %v1773
    %v2412 = vunpack.c.l.b16 %v1774
    %v2413 = vunpack.c.h.b16 %v1774
    %v2414 = vunpack.c.l.b16 %v1775
    %v2415 = vunpack.c.h.b16 %v1775
    %v2416 = vunpack.c.l.b16 %v1776
    %v2417 = vunpack.c.h.b16 %v1776
    %v2418 = vunpack.c.l.b16 %v1777
    %v2419 = vunpack.c.h.b16 %v1777
    %v2420 = vunpack.c.l.b16 %v1778
    %v2421 = vunpack.c.h.b16 %v1778
    %v2422 = vunpack.c.l.b16 %v1779
    %v2423 = vunpack.c.h.b16 %v1779
    %v2424 = vunpack.c.l.b16 %v1780
    %v2425 = vunpack.c.h.b16 %v1780
    %v2426 = vunpack.c.l.b16 %v1781
    %v2427 = vunpack.c.h.b16 %v1781
    %v2428 = vunpack.c.l.b16 %v1782
    %v2429 = vunpack.c.h.b16 %v1782
    %v2430 = vunpack.c.l.b16 %v1783
    %v2431 = vunpack.c.h.b16 %v1783
    %v2432 = vunpack.c.l.b16 %v1784
    %v2433 = vunpack.c.h.b16 %v1784
    %v2434 = vunpack.c.l.b16 %v1785
    %v2435 = vunpack.c.h.b16 %v1785
    %v2436 = vunpack.c.l.b16 %v1786
    %v2437 = vunpack.c.h.b16 %v1786
    %v2438 = vunpack.c.l.b16 %v1787
    %v2439 = vunpack.c.h.b16 %v1787
    %v2440 = vunpack.c.l.b16 %v1788
    %v2441 = vunpack.c.h.b16 %v1788
    %v2442 = vunpack.c.l.b16 %v1789
    %v2443 = vunpack.c.h.b16 %v1789
    %v2444 = vunpack.c.l.b16 %v1790
    %v2445 = vunpack.c.h.b16 %v1790
    %v2446 = vunpack.c.l.b16 %v1791
    %v2447 = vunpack.c.h.b16 %v1791
    %v2448 = vunpack.c.l.b16 %v1792
    %v2449 = vunpack.c.h.b16 %v1792
    %v2450 = vunpack.c.l.b16 %v1793
    %v2451 = vunpack.c.h.b16 %v1793
    %v2452 = vunpack.c.l.b16 %v1794
    %v2453 = vunpack.c.h.b16 %v1794
    %v2454 = vunpack.c.l.b16 %v1795
    %v2455 = vunpack.c.h.b16 %v1795
    %v2456 = vunpack.c.l.b16 %v1796
    %v2457 = vunpack.c.h.b16 %v1796
    %v2458 = vunpack.c.l.b16 %v1797
    %v2459 = vunpack.c.h.b16 %v1797
    %v2460 = vunpack.c.l.b16 %v1798
    %v2461 = vunpack.c.h.b16 %v1798
    %v2462 = vunpack.c.l.b16 %v1799
    %v2463 = vunpack.c.h.b16 %v1799
    %v2464 = vunpack.c.l.b16 %v1800
    %v2465 = vunpack.c.h.b16 %v1800
    %v2466 = vunpack.c.l.b16 %v1801
    %v2467 = vunpack.c.h.b16 %v1801
    %v2468 = vunpack.c.l.b16 %v1802
    %v2469 = vunpack.c.h.b16 %v1802
    %v2470 = vunpack.c.l.b16 %v1803
    %v2471 = vunpack.c.h.b16 %v1803
    %v2472 = vunpack.c.l.b16 %v1804
    %v2473 = vunpack.c.h.b16 %v1804
    %v2474 = vunpack.c.l.b16 %v1805
    %v2475 = vunpack.c.h.b16 %v1805
    %v2476 = vunpack.c.l.b16 %v1806
    %v2477 = vunpack.c.h.b16 %v1806
    %v2478 = vunpack.c.l.b16 %v1807
    %v2479 = vunpack.c.h.b16 %v1807
    %v2480 = vunpack.c.l.b16 %v1808
    %v2481 = vunpack.c.h.b16 %v1808
    %v2482 = vunpack.c.l.b16 %v1809
    %v2483 = vunpack.c.h.b16 %v1809
    %v2484 = vunpack.c.l.b16 %v1810
    %v2485 = vunpack.c.h.b16 %v1810
    %v2486 = vunpack.c.l.b16 %v1811
    %v2487 = vunpack.c.h.b16 %v1811
    %v2488 = vunpack.c.l.b16 %v1812
    %v2489 = vunpack.c.h.b16 %v1812
    %v2490 = vunpack.c.l.b16 %v1813
    %v2491 = vunpack.c.h.b16 %v1813
    %v2492 = vunpack.c.l.b16 %v1814
    %v2493 = vunpack.c.h.b16 %v1814
    %v2494 = vunpack.c.l.b16 %v1815
    %v2495 = vunpack.c.h.b16 %v1815
    %v2496 = vunpack.c.l.b16 %v1816
    %v2497 = vunpack.c.h.b16 %v1816
    %v2498 = vunpack.c.l.b16 %v1817
    %v2499 = vunpack.c.h.b16 %v1817
    %v2500 = vunpack.c.l.b16 %v1818
    %v2501 = vunpack.c.h.b16 %v1818
    %v2502 = vunpack.c.l.b16 %v1819
    %v2503 = vunpack.c.h.b16 %v1819
    %v2504 = vunpack.c.l.b16 %v1820
    %v2505 = vunpack.c.h.b16 %v1820
    %v2506 = vunpack.c.l.b16 %v1821
    %v2507 = vunpack.c.h.b16 %v1821
    %v2508 = vunpack.c.l.b16 %v1822
    %v2509 = vunpack.c.h.b16 %v1822
    %v2510 = vunpack.c.l.b16 %v1823
    %v2511 = vunpack.c.h.b16 %v1823
    %v2512 = vunpack.c.l.b16 %v1824
    %v2513 = vunpack.c.h.b16 %v1824
    %v2514 = vunpack.c.l.b16 %v1825
    %v2515 = vunpack.c.h.b16 %v1825
    %v2516 = vunpack.c.l.b16 %v1826
    %v2517 = vunpack.c.h.b16 %v1826
    %v2518 = vunpack.c.l.b16 %v1827
    %v2519 = vunpack.c.h.b16 %v1827
    %v2520 = vunpack.c.l.b16 %v1828
    %v2521 = vunpack.c.h.b16 %v1828
    %v2522 = vunpack.c.l.b16 %v1829
    %v2523 = vunpack.c.h.b16 %v1829
    %v2524 = vunpack.c.l.b16 %v1830
    %v2525 = vunpack.c.h.b16 %v1830
    %v2526 = vunpack.c.l.b16 %v1831
    %v2527 = vunpack.c.h.b16 %v1831
    %v2528 = vunpack.c.l.b16 %v1832
    %v2529 = vunpack.c.h.b16 %v1832
    %v2530 = vunpack.c.l.b16 %v1833
    %v2531 = vunpack.c.h.b16 %v1833
    %v2532 = vunpack.c.l.b16 %v1834
    %v2533 = vunpack.c.h.b16 %v1834
    %v2534 = vunpack.c.l.b16 %v1835
    %v2535 = vunpack.c.h.b16 %v1835
    %v2536 = vunpack.c.l.b16 %v1836
    %v2537 = vunpack.c.h.b16 %v1836
    %v2538 = vunpack.c.l.b16 %v1837
    %v2539 = vunpack.c.h.b16 %v1837
    %v2540 = vunpack.c.l.b16 %v1838
    %v2541 = vunpack.c.h.b16 %v1838
    %v2542 = vunpack.c.l.b16 %v1839
    %v2543 = vunpack.c.h.b16 %v1839
    %v2544 = vunpack.c.l.b16 %v1840
    %v2545 = vunpack.c.h.b16 %v1840
    %v2546 = vunpack.c.l.b16 %v1841
    %v2547 = vunpack.c.h.b16 %v1841
    %v2548 = vunpack.c.l.b16 %v1842
    %v2549 = vunpack.c.h.b16 %v1842
    %v2550 = vunpack.c.l.b16 %v1843
    %v2551 = vunpack.c.h.b16 %v1843
    %v2552 = vunpack.c.l.b16 %v1844
    %v2553 = vunpack.c.h.b16 %v1844
    %v2554 = vunpack.c.l.b16 %v1845
    %v2555 = vunpack.c.h.b16 %v1845
    %v2556 = vunpack.c.l.b16 %v1846
    %v2557 = vunpack.c.h.b16 %v1846
    %v2558 = vunpack.c.l.b16 %v1847
    %v2559 = vunpack.c.h.b16 %v1847
    %v2560 = vunpack.c.l.b16 %v1848
    %v2561 = vunpack.c.h.b16 %v1848
    %v2562 = vunpack.c.l.b16 %v1849
    %v2563 = vunpack.c.h.b16 %v1849
    %v2564 = vunpack.c.l.b16 %v1850
    %v2565 = vunpack.c.h.b16 %v1850
    %v2566 = vunpack.c.l.b16 %v1851
    %v2567 = vunpack.c.h.b16 %v1851
    %v2568 = vunpack.c.l.b16 %v1852
    %v2569 = vunpack.c.h.b16 %v1852
    %v2570 = vunpack.c.l.b16 %v1853
    %v2571 = vunpack.c.h.b16 %v1853
    %v2572 = vunpack.c.l.b16 %v1854
    %v2573 = vunpack.c.h.b16 %v1854
    %v2574 = vunpack.c.l.b16 %v1855
    %v2575 = vunpack.c.h.b16 %v1855
    %v2576 = vunpack.c.l.b16 %v1856
    %v2577 = vunpack.c.h.b16 %v1856
    %v2578 = vunpack.c.l.b16 %v1857
    %v2579 = vunpack.c.h.b16 %v1857
    %v2580 = vunpack.c.l.b16 %v1858
    %v2581 = vunpack.c.h.b16 %v1858
    %v2582 = vunpack.c.l.b16 %v1859
    %v2583 = vunpack.c.h.b16 %v1859
    %v2584 = vunpack.c.l.b16 %v1860
    %v2585 = vunpack.c.h.b16 %v1860
    %v2586 = vunpack.c.l.b16 %v1861
    %v2587 = vunpack.c.h.b16 %v1861
    %v2588 = vunpack.c.l.b16 %v1862
    %v2589 = vunpack.c.h.b16 %v1862
    %v2590 = vunpack.c.l.b16 %v1863
    %v2591 = vunpack.c.h.b16 %v1863
    %v2592 = vunpack.c.l.b16 %v1864
    %v2593 = vunpack.c.h.b16 %v1864
    %v2594 = vunpack.c.l.b16 %v1865
    %v2595 = vunpack.c.h.b16 %v1865
    %v2596 = vunpack.c.l.b16 %v1866
    %v2597 = vunpack.c.h.b16 %v1866
    %v2598 = vunpack.c.l.b16 %v1867
    %v2599 = vunpack.c.h.b16 %v1867
    %v2600 = vunpack.c.l.b16 %v1868
    %v2601 = vunpack.c.h.b16 %v1868
    %v2602 = vunpack.c.l.b16 %v1869
    %v2603 = vunpack.c.h.b16 %v1869
    %v2604 = vunpack.c.l.b16 %v1870
    %v2605 = vunpack.c.h.b16 %v1870
    %v2606 = vunpack.c.l.b16 %v1871
    %v2607 = vunpack.c.h.b16 %v1871
    %v2608 = vunpack.c.l.b16 %v1872
    %v2609 = vunpack.c.h.b16 %v1872
    %v2610 = vunpack.c.l.b16 %v1873
    %v2611 = vunpack.c.h.b16 %v1873
    %v2612 = vunpack.c.l.b16 %v1874
    %v2613 = vunpack.c.h.b16 %v1874
    %v2614 = vunpack.c.l.b16 %v1875
    %v2615 = vunpack.c.h.b16 %v1875
    %v2616 = vunpack.c.l.b16 %v1876
    %v2617 = vunpack.c.h.b16 %v1876
    %v2618 = vunpack.c.l.b16 %v1877
    %v2619 = vunpack.c.h.b16 %v1877
    %v2620 = vunpack.c.l.b16 %v1878
    %v2621 = vunpack.c.h.b16 %v1878
    %v2622 = vunpack.c.l.b16 %v1879
    %v2623 = vunpack.c.h.b16 %v1879
    %v2624 = vunpack.c.l.b16 %v1880
    %v2625 = vunpack.c.h.b16 %v1880
    %v2626 = vunpack.c.l.b16 %v1881
    %v2627 = vunpack.c.h.b16 %v1881
    %v2628 = vunpack.c.l.b16 %v1882
    %v2629 = vunpack.c.h.b16 %v1882
    %v2630 = vunpack.c.l.b16 %v1883
    %v2631 = vunpack.c.h.b16 %v1883
    %v2632 = vunpack.c.l.b16 %v1884
    %v2633 = vunpack.c.h.b16 %v1884
    %v2634 = vunpack.c.l.b16 %v1885
    %v2635 = vunpack.c.h.b16 %v1885
    %v2636 = vunpack.c.l.b16 %v1886
    %v2637 = vunpack.c.h.b16 %v1886
    %v2638 = vunpack.c.l.b16 %v1887
    %v2639 = vunpack.c.h.b16 %v1887
    %v2640 = vunpack.c.l.b16 %v1888
    %v2641 = vunpack.c.h.b16 %v1888
    %v2642 = vunpack.c.l.b16 %v1889
    %v2643 = vunpack.c.h.b16 %v1889
    %v2644 = vunpack.c.l.b16 %v1890
    %v2645 = vunpack.c.h.b16 %v1890
    %v2646 = vunpack.c.l.b16 %v1891
    %v2647 = vunpack.c.h.b16 %v1891
    %v2648 = vunpack.c.l.b16 %v1892
    %v2649 = vunpack.c.h.b16 %v1892
    %v2650 = vunpack.c.l.b16 %v1893
    %v2651 = vunpack.c.h.b16 %v1893
    %v2652 = vunpack.c.l.b16 %v1894
    %v2653 = vunpack.c.h.b16 %v1894
    %v2654 = vunpack.c.l.b16 %v1895
    %v2655 = vunpack.c.h.b16 %v1895
    %v2656 = vunpack.c.l.b16 %v1896
    %v2657 = vunpack.c.h.b16 %v1896
    %v2658 = vunpack.c.l.b16 %v1897
    %v2659 = vunpack.c.h.b16 %v1897
    %v2660 = vunpack.c.l.b16 %v1898
    %v2661 = vunpack.c.h.b16 %v1898
    %v2662 = vunpack.c.l.b16 %v1899
    %v2663 = vunpack.c.h.b16 %v1899
    %v2664 = vunpack.c.l.b16 %v1900
    %v2665 = vunpack.c.h.b16 %v1900
    %v2666 = vunpack.c.l.b16 %v1901
    %v2667 = vunpack.c.h.b16 %v1901
    %v2668 = vunpack.c.l.b16 %v1902
    %v2669 = vunpack.c.h.b16 %v1902
    %v2670 = vunpack.c.l.b16 %v1903
    %v2671 = vunpack.c.h.b16 %v1903
    %v2672 = vpack.c.b16 %v2168, %v2160
    %v2673 = vpack.c.b16 %v2169, %v2161
    %v2674 = vpack.c.b16 %v2170, %v2162
    %v2675 = vpack.c.b16 %v2171, %v2163
    %v2676 = vpack.c.b16 %v2172, %v2164
    %v2677 = vpack.c.b16 %v2173, %v2165
    %v2678 = vpack.c.b16 %v2174, %v2166
    %v2679 = vpack.c.b16 %v2175, %v2167
    %v2680 = vpack.c.b16 %v2184, %v2176
    %v2681 = vpack.c.b16 %v2185, %v2177
    %v2682 = vpack.c.b16 %v2186, %v2178
    %v2683 = vpack.c.b16 %v2187, %v2179
    %v2684 = vpack.c.b16 %v2188, %v2180
    %v2685 = vpack.c.b16 %v2189, %v2181
    %v2686 = vpack.c.b16 %v2190, %v2182
    %v2687 = vpack.c.b16 %v2191, %v2183
    %v2688 = vpack.c.b16 %v2200, %v2192
    %v2689 = vpack.c.b16 %v2201, %v2193
    %v2690 = vpack.c.b16 %v2202, %v2194
    %v2691 = vpack.c.b16 %v2203, %v2195
    %v2692 = vpack.c.b16 %v2204, %v2196
    %v2693 = vpack.c.b16 %v2205, %v2197
    %v2694 = vpack.c.b16 %v2206, %v2198
    %v2695 = vpack.c.b16 %v2207, %v2199
    %v2696 = vpack.c.b16 %v2216, %v2208
    %v2697 = vpack.c.b16 %v2217, %v2209
    %v2698 = vpack.c.b16 %v2218, %v2210
    %v2699 = vpack.c.b16 %v2219, %v2211
    %v2700 = vpack.c.b16 %v2220, %v2212
    %v2701 = vpack.c.b16 %v2221, %v2213
    %v2702 = vpack.c.b16 %v2222, %v2214
    %v2703 = vpack.c.b16 %v2223, %v2215
    %v2704 = vpack.c.b16 %v2232, %v2224
    %v2705 = vpack.c.b16 %v2233, %v2225
    %v2706 = vpack.c.b16 %v2234, %v2226
    %v2707 = vpack.c.b16 %v2235, %v2227
    %v2708 = vpack.c.b16 %v2236, %v2228
    %v2709 = vpack.c.b16 %v2237, %v2229
    %v2710 = vpack.c.b16 %v2238, %v2230
    %v2711 = vpack.c.b16 %v2239, %v2231
    %v2712 = vpack.c.b16 %v2248, %v2240
    %v2713 = vpack.c.b16 %v2249, %v2241
    %v2714 = vpack.c.b16 %v2250, %v2242
    %v2715 = vpack.c.b16 %v2251, %v2243
    %v2716 = vpack.c.b16 %v2252, %v2244
    %v2717 = vpack.c.b16 %v2253, %v2245
    %v2718 = vpack.c.b16 %v2254, %v2246
    %v2719 = vpack.c.b16 %v2255, %v2247
    %v2720 = vpack.c.b16 %v2264, %v2256
    %v2721 = vpack.c.b16 %v2265, %v2257
    %v2722 = vpack.c.b16 %v2266, %v2258
    %v2723 = vpack.c.b16 %v2267, %v2259
    %v2724 = vpack.c.b16 %v2268, %v2260
    %v2725 = vpack.c.b16 %v2269, %v2261
    %v2726 = vpack.c.b16 %v2270, %v2262
    %v2727 = vpack.c.b16 %v2271, %v2263
    %v2728 = vpack.c.b16 %v2280, %v2272
    %v2729 = vpack.c.b16 %v2281, %v2273
    %v2730 = vpack.c.b16 %v2282, %v2274
    %v2731 = vpack.c.b16 %v2283, %v2275
    %v2732 = vpack.c.b16 %v2284, %v2276
    %v2733 = vpack.c.b16 %v2285, %v2277
    %v2734 = vpack.c.b16 %v2286, %v2278
    %v2735 = vpack.c.b16 %v2287, %v2279
    %v2736 = vpack.c.b16 %v2296, %v2288
    %v2737 = vpack.c.b16 %v2297, %v2289
    %v2738 = vpack.c.b16 %v2298, %v2290
    %v2739 = vpack.c.b16 %v2299, %v2291
    %v2740 = vpack.c.b16 %v2300, %v2292
    %v2741 = vpack.c.b16 %v2301, %v2293
    %v2742 = vpack.c.b16 %v2302, %v2294
    %v2743 = vpack.c.b16 %v2303, %v2295
    %v2744 = vpack.c.b16 %v2312, %v2304
    %v2745 = vpack.c.b16 %v2313, %v2305
    %v2746 = vpack.c.b16 %v2314, %v2306
    %v2747 = vpack.c.b16 %v2315, %v2307
    %v2748 = vpack.c.b16 %v2316, %v2308
    %v2749 = vpack.c.b16 %v2317, %v2309
    %v2750 = vpack.c.b16 %v2318, %v2310
    %v2751 = vpack.c.b16 %v2319, %v2311
    %v2752 = vpack.c.b16 %v2328, %v2320
    %v2753 = vpack.c.b16 %v2329, %v2321
    %v2754 = vpack.c.b16 %v2330, %v2322
    %v2755 = vpack.c.b16 %v2331, %v2323
    %v2756 = vpack.c.b16 %v2332, %v2324
    %v2757 = vpack.c.b16 %v2333, %v2325
    %v2758 = vpack.c.b16 %v2334, %v2326
    %v2759 = vpack.c.b16 %v2335, %v2327
    %v2760 = vpack.c.b16 %v2344, %v2336
    %v2761 = vpack.c.b16 %v2345, %v2337
    %v2762 = vpack.c.b16 %v2346, %v2338
    %v2763 = vpack.c.b16 %v2347, %v2339
    %v2764 = vpack.c.b16 %v2348, %v2340
    %v2765 = vpack.c.b16 %v2349, %v2341
    %v2766 = vpack.c.b16 %v2350, %v2342
    %v2767 = vpack.c.b16 %v2351, %v2343
    %v2768 = vpack.c.b16 %v2360, %v2352
    %v2769 = vpack.c.b16 %v2361, %v2353
    %v2770 = vpack.c.b16 %v2362, %v2354
    %v2771 = vpack.c.b16 %v2363, %v2355
    %v2772 = vpack.c.b16 %v2364, %v2356
    %v2773 = vpack.c.b16 %v2365, %v2357
    %v2774 = vpack.c.b16 %v2366, %v2358
    %v2775 = vpack.c.b16 %v2367, %v2359
    %v2776 = vpack.c.b16 %v2376, %v2368
    %v2777 = vpack.c.b16 %v2377, %v2369
    %v2778 = vpack.c.b16 %v2378, %v2370
    %v2779 = vpack.c.b16 %v2379, %v2371
    %v2780 = vpack.c.b16 %v2380, %v2372
    %v2781 = vpack.c.b16 %v2381, %v2373
    %v2782 = vpack.c.b16 %v2382, %v2374
    %v2783 = vpack.c.b16 %v2383, %v2375
    %v2784 = vpack.c.b16 %v2392, %v2384
    %v2785 = vpack.c.b16 %v2393, %v2385
    %v2786 = vpack.c.b16 %v2394, %v2386
    %v2787 = vpack.c.b16 %v2395, %v2387
    %v2788 = vpack.c.b16 %v2396, %v2388
    %v2789 = vpack.c.b16 %v2397, %v2389
    %v2790 = vpack.c.b16 %v2398, %v2390
    %v2791 = vpack.c.b16 %v2399, %v2391
    %v2792 = vpack.c.b16 %v2408, %v2400
    %v2793 = vpack.c.b16 %v2409, %v2401
    %v2794 = vpack.c.b16 %v2410, %v2402
    %v2795 = vpack.c.b16 %v2411, %v2403
    %v2796 = vpack.c.b16 %v2412, %v2404
    %v2797 = vpack.c.b16 %v2413, %v2405
    %v2798 = vpack.c.b16 %v2414, %v2406
    %v2799 = vpack.c.b16 %v2415, %v2407
    %v2800 = vpack.c.b16 %v2424, %v2416
    %v2801 = vpack.c.b16 %v2425, %v2417
    %v2802 = vpack.c.b16 %v2426, %v2418
    %v2803 = vpack.c.b16 %v2427, %v2419
    %v2804 = vpack.c.b16 %v2428, %v2420
    %v2805 = vpack.c.b16 %v2429, %v2421
    %v2806 = vpack.c.b16 %v2430, %v2422
    %v2807 = vpack.c.b16 %v2431, %v2423
    %v2808 = vpack.c.b16 %v2440, %v2432
    %v2809 = vpack.c.b16 %v2441, %v2433
    %v2810 = vpack.c.b16 %v2442, %v2434
    %v2811 = vpack.c.b16 %v2443, %v2435
    %v2812 = vpack.c.b16 %v2444, %v2436
    %v2813 = vpack.c.b16 %v2445, %v2437
    %v2814 = vpack.c.b16 %v2446, %v2438
    %v2815 = vpack.c.b16 %v2447, %v2439
    %v2816 = vpack.c.b16 %v2456, %v2448
    %v2817 = vpack.c.b16 %v2457, %v2449
    %v2818 = vpack.c.b16 %v2458, %v2450
    %v2819 = vpack.c.b16 %v2459, %v2451
    %v2820 = vpack.c.b16 %v2460, %v2452
    %v2821 = vpack.c.b16 %v2461, %v2453
    %v2822 = vpack.c.b16 %v2462, %v2454
    %v2823 = vpack.c.b16 %v2463, %v2455
    %v2824 = vpack.c.b16 %v2472, %v2464
    %v2825 = vpack.c.b16 %v2473, %v2465
    %v2826 = vpack.c.b16 %v2474, %v2466
    %v2827 = vpack.c.b16 %v2475, %v2467
    %v2828 = vpack.c.b16 %v2476, %v2468
    %v2829 = vpack.c.b16 %v2477, %v2469
    %v2830 = vpack.c.b16 %v2478, %v2470
    %v2831 = vpack.c.b16 %v2479, %v2471
    %v2832 = vpack.c.b16 %v2488, %v2480
    %v2833 = vpack.c.b16 %v2489, %v2481
    %v2834 = vpack.c.b16 %v2490, %v2482
    %v2835 = vpack.c.b16 %v2491, %v2483
    %v2836 = vpack.c.b16 %v2492, %v2484
    %v2837 = vpack.c.b16 %v2493, %v2485
    %v2838 = vpack.c.b16 %v2494, %v2486
    %v2839 = vpack.c.b16 %v2495, %v2487
    %v2840 = vpack.c.b16 %v2504, %v2496
    %v2841 = vpack.c.b16 %v2505, %v2497
    %v2842 = vpack.c.b16 %v2506, %v2498
    %v2843 = vpack.c.b16 %v2507, %v2499
    %v2844 = vpack.c.b16 %v2508, %v2500
    %v2845 = vpack.c.b16 %v2509, %v2501
    %v2846 = vpack.c.b16 %v2510, %v2502
    %v2847 = vpack.c.b16 %v2511, %v2503
    %v2848 = vpack.c.b16 %v2520, %v2512
    %v2849 = vpack.c.b16 %v2521, %v2513
    %v2850 = vpack.c.b16 %v2522, %v2514
    %v2851 = vpack.c.b16 %v2523, %v2515
    %v2852 = vpack.c.b16 %v2524, %v2516
    %v2853 = vpack.c.b16 %v2525, %v2517
    %v2854 = vpack.c.b16 %v2526, %v2518
    %v2855 = vpack.c.b16 %v2527, %v2519
    %v2856 = vpack.c.b16 %v2536, %v2528
    %v2857 = vpack.c.b16 %v2537, %v2529
    %v2858 = vpack.c.b16 %v2538, %v2530
    %v2859 = vpack.c.b16 %v2539, %v2531
    %v2860 = vpack.c.b16 %v2540, %v2532
    %v2861 = vpack.c.b16 %v2541, %v2533
    %v2862 = vpack.c.b16 %v2542, %v2534
    %v2863 = vpack.c.b16 %v2543, %v2535
    %v2864 = vpack.c.b16 %v2552, %v2544
    %v2865 = vpack.c.b16 %v2553, %v2545
    %v2866 = vpack.c.b16 %v2554, %v2546
    %v2867 = vpack.c.b16 %v2555, %v2547
    %v2868 = vpack.c.b16 %v2556, %v2548
    %v2869 = vpack.c.b16 %v2557, %v2549
    %v2870 = vpack.c.b16 %v2558, %v2550
    %v2871 = vpack.c.b16 %v2559, %v2551
    %v2872 = vpack.c.b16 %v2568, %v2560
    %v2873 = vpack.c.b16 %v2569, %v2561
    %v2874 = vpack.c.b16 %v2570, %v2562
    %v2875 = vpack.c.b16 %v2571, %v2563
    %v2876 = vpack.c.b16 %v2572, %v2564
    %v2877 = vpack.c.b16 %v2573, %v2565
    %v2878 = vpack.c.b16 %v2574, %v2566
    %v2879 = vpack.c.b16 %v2575, %v2567
    %v2880 = vpack.c.b16 %v2584, %v2576
    %v2881 = vpack.c.b16 %v2585, %v2577
    %v2882 = vpack.c.b16 %v2586, %v2578
    %v2883 = vpack.c.b16 %v2587, %v2579
    %v2884 = vpack.c.b16 %v2588, %v2580
    %v2885 = vpack.c.b16 %v2589, %v2581
    %v2886 = vpack.c.b16 %v2590, %v2582
    %v2887 = vpack.c.b16 %v2591, %v2583
    %v2888 = vpack.c.b16 %v2600, %v2592
    %v2889 = vpack.c.b16 %v2601, %v2593
    %v2890 = vpack.c.b16 %v2602, %v2594
    %v2891 = vpack.c.b16 %v2603, %v2595
    %v2892 = vpack.c.b16 %v2604, %v2596
    %v2893 = vpack.c.b16 %v2605, %v2597
    %v2894 = vpack.c.b16 %v2606, %v2598
    %v2895 = vpack.c.b16 %v2607, %v2599
    %v2896 = vpack.c.b16 %v2616, %v2608
    %v2897 = vpack.c.b16 %v2617, %v2609
    %v2898 = vpack.c.b16 %v2618, %v2610
    %v2899 = vpack.c.b16 %v2619, %v2611
    %v2900 = vpack.c.b16 %v2620, %v2612
    %v2901 = vpack.c.b16 %v2621, %v2613
    %v2902 = vpack.c.b16 %v2622, %v2614
    %v2903 = vpack.c.b16 %v2623, %v2615
    %v2904 = vpack.c.b16 %v2632, %v2624
    %v2905 = vpack.c.b16 %v2633, %v2625
    %v2906 = vpack.c.b16 %v2634, %v2626
    %v2907 = vpack.c.b16 %v2635, %v2627
    %v2908 = vpack.c.b16 %v2636, %v2628
    %v2909 = vpack.c.b16 %v2637, %v2629
    %v2910 = vpack.c.b16 %v2638, %v2630
    %v2911 = vpack.c.b16 %v2639, %v2631
    %v2912 = vpack.c.b16 %v2648, %v2640
    %v2913 = vpack.c.b16 %v2649, %v2641
    %v2914 = vpack.c.b16 %v2650, %v2642
    %v2915 = vpack.c.b16 %v2651, %v2643
    %v2916 = vpack.c.b16 %v2652, %v2644
    %v2917 = vpack.c.b16 %v2653, %v2645
    %v2918 = vpack.c.b16 %v2654, %v2646
    %v2919 = vpack.c.b16 %v2655, %v2647
    %v2920 = vpack.c.b16 %v2664, %v2656
    %v2921 = vpack.c.b16 %v2665, %v2657
    %v2922 = vpack.c.b16 %v2666, %v2658
    %v2923 = vpack.c.b16 %v2667, %v2659
    %v2924 = vpack.c.b16 %v2668, %v2660
    %v2925 = vpack.c.b16 %v2669, %v2661
    %v2926 = vpack.c.b16 %v2670, %v2662
    %v2927 = vpack.c.b16 %v2671, %v2663
    %3184 = vmatprep.subr.bf16.mxu0 %v2673
    %3185 = vmatpush1.bf16.msra.mxu0 %v2672
    %3186 = vmatprep.subr.bf16.mxu0 %v2681
    %3187 = vmatpush1.bf16.msra.mxu0 %v2680
    %3188 = vmatprep.subr.bf16.mxu0 %v2689
    %3189 = vmatpush1.bf16.msra.mxu0 %v2688
    %3190 = vmatprep.subr.bf16.mxu0 %v2697
    %3191 = vmatpush1.bf16.msra.mxu0 %v2696
    %3192 = vmatprep.subr.bf16.mxu0 %v2705
    %3193 = vmatpush1.bf16.msra.mxu0 %v2704
    %3194 = vmatprep.subr.bf16.mxu0 %v2713
    %3195 = vmatpush1.bf16.msra.mxu0 %v2712
    %3196 = vmatprep.subr.bf16.mxu0 %v2721
    %3197 = vmatpush1.bf16.msra.mxu0 %v2720
    %3198 = vmatprep.subr.bf16.mxu0 %v2729
    %3199 = vmatpush1.bf16.msra.mxu0 %v2728
    %3200 = vmatprep.subr.bf16.mxu0 %v2737
    %3201 = vmatpush1.bf16.msra.mxu0 %v2736
    %3202 = vmatprep.subr.bf16.mxu0 %v2745
    %3203 = vmatpush1.bf16.msra.mxu0 %v2744
    %3204 = vmatprep.subr.bf16.mxu0 %v2753
    %3205 = vmatpush1.bf16.msra.mxu0 %v2752
    %3206 = vmatprep.subr.bf16.mxu0 %v2761
    %3207 = vmatpush1.bf16.msra.mxu0 %v2760
    %3208 = vmatprep.subr.bf16.mxu0 %v2769
    %3209 = vmatpush1.bf16.msra.mxu0 %v2768
    %3210 = vmatprep.subr.bf16.mxu0 %v2777
    %3211 = vmatpush1.bf16.msra.mxu0 %v2776
    %3212 = vmatprep.subr.bf16.mxu0 %v2785
    %3213 = vmatpush1.bf16.msra.mxu0 %v2784
    %3214 = vmatprep.subr.bf16.mxu0 %v2793
    %3215 = vmatpush1.bf16.msra.mxu0 %v2792
    %3216 = vmatprep.mubr.bf16.mxu0 %v1645
    %3217 = vmatmul.mubr.bf16.gmra.mrb[0].mxu0 %v1644
    %v3218 = vpop.f32.mrb[0].mxu0
    %v3219 = vadd.f32 0.0, %v3218
    %v3220 = vpop.f32.mrb[0].mxu0
    %v3221 = vadd.f32 0.0, %v3220
    %v3222 = vpop.f32.mrb[0].mxu0
    %v3223 = vpop.f32.mrb[0].mxu0
    %3224 = vdwg.mxu0
    %3225 = vmatprep.subr.bf16.mxu0 %v2801
    %3226 = vmatpush1.bf16.msra.mxu0 %v2800
    %3227 = vmatprep.subr.bf16.mxu0 %v2809
    %3228 = vmatpush1.bf16.msra.mxu0 %v2808
    %3229 = vmatprep.subr.bf16.mxu0 %v2817
    %3230 = vmatpush1.bf16.msra.mxu0 %v2816
    %3231 = vmatprep.subr.bf16.mxu0 %v2825
    %3232 = vmatpush1.bf16.msra.mxu0 %v2824
    %3233 = vmatprep.subr.bf16.mxu0 %v2833
    %3234 = vmatpush1.bf16.msra.mxu0 %v2832
    %3235 = vmatprep.subr.bf16.mxu0 %v2841
    %3236 = vmatpush1.bf16.msra.mxu0 %v2840
    %3237 = vmatprep.subr.bf16.mxu0 %v2849
    %3238 = vmatpush1.bf16.msra.mxu0 %v2848
    %3239 = vmatprep.subr.bf16.mxu0 %v2857
    %3240 = vmatpush1.bf16.msra.mxu0 %v2856
    %3241 = vmatprep.subr.bf16.mxu0 %v2865
    %3242 = vmatpush1.bf16.msra.mxu0 %v2864
    %3243 = vmatprep.subr.bf16.mxu0 %v2873
    %3244 = vmatpush1.bf16.msra.mxu0 %v2872
    %3245 = vmatprep.subr.bf16.mxu0 %v2881
    %3246 = vmatpush1.bf16.msra.mxu0 %v2880
    %3247 = vmatprep.subr.bf16.mxu0 %v2889
    %3248 = vmatpush1.bf16.msra.mxu0 %v2888
    %3249 = vmatprep.subr.bf16.mxu0 %v2897
    %3250 = vmatpush1.bf16.msra.mxu0 %v2896
    %3251 = vmatprep.subr.bf16.mxu0 %v2905
    %3252 = vmatpush1.bf16.msra.mxu0 %v2904
    %3253 = vmatprep.subr.bf16.mxu0 %v2913
    %3254 = vmatpush1.bf16.msra.mxu0 %v2912
    %3255 = vmatprep.subr.bf16.mxu0 %v2921
    %3256 = vmatpush1.bf16.msra.mxu0 %v2920
    %3257 = vmatprep.mubr.bf16.mxu0 %v1647
    %3258 = vmatmul.mubr.bf16.gmra.mrb[0].mxu0 %v1646
    %v3259 = vpop.f32.mrb[0].mxu0
    %v3260 = vadd.f32 %v3219, %v3259
    %v3261 = vpop.f32.mrb[0].mxu0
    %v3262 = vadd.f32 %v3221, %v3261
    %v3263 = vpop.f32.mrb[0].mxu0
    %v3264 = vpop.f32.mrb[0].mxu0
    %3265 = vdwg.mxu0
    %3266 = vmatprep.subr.bf16.mxu0 %v2675
    %3267 = vmatpush1.bf16.msra.mxu0 %v2674
    %3268 = vmatprep.subr.bf16.mxu0 %v2683
    %3269 = vmatpush1.bf16.msra.mxu0 %v2682
    %3270 = vmatprep.subr.bf16.mxu0 %v2691
    %3271 = vmatpush1.bf16.msra.mxu0 %v2690
    %3272 = vmatprep.subr.bf16.mxu0 %v2699
    %3273 = vmatpush1.bf16.msra.mxu0 %v2698
    %3274 = vmatprep.subr.bf16.mxu0 %v2707
    %3275 = vmatpush1.bf16.msra.mxu0 %v2706
    %3276 = vmatprep.subr.bf16.mxu0 %v2715
    %3277 = vmatpush1.bf16.msra.mxu0 %v2714
    %3278 = vmatprep.subr.bf16.mxu0 %v2723
    %3279 = vmatpush1.bf16.msra.mxu0 %v2722
    %3280 = vmatprep.subr.bf16.mxu0 %v2731
    %3281 = vmatpush1.bf16.msra.mxu0 %v2730
    %3282 = vmatprep.subr.bf16.mxu0 %v2739
    %3283 = vmatpush1.bf16.msra.mxu0 %v2738
    %3284 = vmatprep.subr.bf16.mxu0 %v2747
    %3285 = vmatpush1.bf16.msra.mxu0 %v2746
    %3286 = vmatprep.subr.bf16.mxu0 %v2755
    %3287 = vmatpush1.bf16.msra.mxu0 %v2754
    %3288 = vmatprep.subr.bf16.mxu0 %v2763
    %3289 = vmatpush1.bf16.msra.mxu0 %v2762
    %3290 = vmatprep.subr.bf16.mxu0 %v2771
    %3291 = vmatpush1.bf16.msra.mxu0 %v2770
    %3292 = vmatprep.subr.bf16.mxu0 %v2779
    %3293 = vmatpush1.bf16.msra.mxu0 %v2778
    %3294 = vmatprep.subr.bf16.mxu0 %v2787
    %3295 = vmatpush1.bf16.msra.mxu0 %v2786
    %3296 = vmatprep.subr.bf16.mxu0 %v2795
    %3297 = vmatpush1.bf16.msra.mxu0 %v2794
    %3298 = vmatprep.mubr.bf16.mxu0 %v1645
    %3299 = vmatmul.mubr.bf16.gmra.mrb[0].mxu0 %v1644
    %v3300 = vpop.f32.mrb[0].mxu0
    %v3301 = vadd.f32 0.0, %v3300
    %v3302 = vpop.f32.mrb[0].mxu0
    %v3303 = vadd.f32 0.0, %v3302
    %v3304 = vpop.f32.mrb[0].mxu0
    %v3305 = vpop.f32.mrb[0].mxu0
    %3306 = vdwg.mxu0
    %3307 = vmatprep.subr.bf16.mxu0 %v2803
    %3308 = vmatpush1.bf16.msra.mxu0 %v2802
    %3309 = vmatprep.subr.bf16.mxu0 %v2811
    %3310 = vmatpush1.bf16.msra.mxu0 %v2810
    %3311 = vmatprep.subr.bf16.mxu0 %v2819
    %3312 = vmatpush1.bf16.msra.mxu0 %v2818
    %3313 = vmatprep.subr.bf16.mxu0 %v2827
    %3314 = vmatpush1.bf16.msra.mxu0 %v2826
    %3315 = vmatprep.subr.bf16.mxu0 %v2835
    %3316 = vmatpush1.bf16.msra.mxu0 %v2834
    %3317 = vmatprep.subr.bf16.mxu0 %v2843
    %3318 = vmatpush1.bf16.msra.mxu0 %v2842
    %3319 = vmatprep.subr.bf16.mxu0 %v2851
    %3320 = vmatpush1.bf16.msra.mxu0 %v2850
    %3321 = vmatprep.subr.bf16.mxu0 %v2859
    %3322 = vmatpush1.bf16.msra.mxu0 %v2858
    %3323 = vmatprep.subr.bf16.mxu0 %v2867
    %3324 = vmatpush1.bf16.msra.mxu0 %v2866
    %3325 = vmatprep.subr.bf16.mxu0 %v2875
    %3326 = vmatpush1.bf16.msra.mxu0 %v2874
    %3327 = vmatprep.subr.bf16.mxu0 %v2883
    %3328 = vmatpush1.bf16.msra.mxu0 %v2882
    %3329 = vmatprep.subr.bf16.mxu0 %v2891
    %3330 = vmatpush1.bf16.msra.mxu0 %v2890
    %3331 = vmatprep.subr.bf16.mxu0 %v2899
    %3332 = vmatpush1.bf16.msra.mxu0 %v2898
    %3333 = vmatprep.subr.bf16.mxu0 %v2907
    %3334 = vmatpush1.bf16.msra.mxu0 %v2906
    %3335 = vmatprep.subr.bf16.mxu0 %v2915
    %3336 = vmatpush1.bf16.msra.mxu0 %v2914
    %3337 = vmatprep.subr.bf16.mxu0 %v2923
    %3338 = vmatpush1.bf16.msra.mxu0 %v2922
    %3339 = vmatprep.mubr.bf16.mxu0 %v1647
    %3340 = vmatmul.mubr.bf16.gmra.mrb[0].mxu0 %v1646
    %v3341 = vpop.f32.mrb[0].mxu0
    %v3342 = vadd.f32 %v3301, %v3341
    %v3343 = vpop.f32.mrb[0].mxu0
    %v3344 = vadd.f32 %v3303, %v3343
    %v3345 = vpop.f32.mrb[0].mxu0
    %v3346 = vpop.f32.mrb[0].mxu0
    %3347 = vdwg.mxu0
    %3348 = vmatprep.subr.bf16.mxu0 %v2677
    %3349 = vmatpush1.bf16.msra.mxu0 %v2676
    %3350 = vmatprep.subr.bf16.mxu0 %v2685
    %3351 = vmatpush1.bf16.msra.mxu0 %v2684
    %3352 = vmatprep.subr.bf16.mxu0 %v2693
    %3353 = vmatpush1.bf16.msra.mxu0 %v2692
    %3354 = vmatprep.subr.bf16.mxu0 %v2701
    %3355 = vmatpush1.bf16.msra.mxu0 %v2700
    %3356 = vmatprep.subr.bf16.mxu0 %v2709
    %3357 = vmatpush1.bf16.msra.mxu0 %v2708
    %3358 = vmatprep.subr.bf16.mxu0 %v2717
    %3359 = vmatpush1.bf16.msra.mxu0 %v2716
    %3360 = vmatprep.subr.bf16.mxu0 %v2725
    %3361 = vmatpush1.bf16.msra.mxu0 %v2724
    %3362 = vmatprep.subr.bf16.mxu0 %v2733
    %3363 = vmatpush1.bf16.msra.mxu0 %v2732
    %3364 = vmatprep.subr.bf16.mxu0 %v2741
    %3365 = vmatpush1.bf16.msra.mxu0 %v2740
    %3366 = vmatprep.subr.bf16.mxu0 %v2749
    %3367 = vmatpush1.bf16.msra.mxu0 %v2748
    %3368 = vmatprep.subr.bf16.mxu0 %v2757
    %3369 = vmatpush1.bf16.msra.mxu0 %v2756
    %3370 = vmatprep.subr.bf16.mxu0 %v2765
    %3371 = vmatpush1.bf16.msra.mxu0 %v2764
    %3372 = vmatprep.subr.bf16.mxu0 %v2773
    %3373 = vmatpush1.bf16.msra.mxu0 %v2772
    %3374 = vmatprep.subr.bf16.mxu0 %v2781
    %3375 = vmatpush1.bf16.msra.mxu0 %v2780
    %3376 = vmatprep.subr.bf16.mxu0 %v2789
    %3377 = vmatpush1.bf16.msra.mxu0 %v2788
    %3378 = vmatprep.subr.bf16.mxu0 %v2797
    %3379 = vmatpush1.bf16.msra.mxu0 %v2796
    %3380 = vmatprep.mubr.bf16.mxu0 %v1645
    %3381 = vmatmul.mubr.bf16.gmra.mrb[0].mxu0 %v1644
    %v3382 = vpop.f32.mrb[0].mxu0
    %v3383 = vadd.f32 0.0, %v3382
    %v3384 = vpop.f32.mrb[0].mxu0
    %v3385 = vadd.f32 0.0, %v3384
    %v3386 = vpop.f32.mrb[0].mxu0
    %v3387 = vpop.f32.mrb[0].mxu0
    %3388 = vdwg.mxu0
    %3389 = vmatprep.subr.bf16.mxu0 %v2805
    %3390 = vmatpush1.bf16.msra.mxu0 %v2804
    %3391 = vmatprep.subr.bf16.mxu0 %v2813
    %3392 = vmatpush1.bf16.msra.mxu0 %v2812
    %3393 = vmatprep.subr.bf16.mxu0 %v2821
    %3394 = vmatpush1.bf16.msra.mxu0 %v2820
    %3395 = vmatprep.subr.bf16.mxu0 %v2829
    %3396 = vmatpush1.bf16.msra.mxu0 %v2828
    %3397 = vmatprep.subr.bf16.mxu0 %v2837
    %3398 = vmatpush1.bf16.msra.mxu0 %v2836
    %3399 = vmatprep.subr.bf16.mxu0 %v2845
    %3400 = vmatpush1.bf16.msra.mxu0 %v2844
    %3401 = vmatprep.subr.bf16.mxu0 %v2853
    %3402 = vmatpush1.bf16.msra.mxu0 %v2852
    %3403 = vmatprep.subr.bf16.mxu0 %v2861
    %3404 = vmatpush1.bf16.msra.mxu0 %v2860
    %3405 = vmatprep.subr.bf16.mxu0 %v2869
    %3406 = vmatpush1.bf16.msra.mxu0 %v2868
    %3407 = vmatprep.subr.bf16.mxu0 %v2877
    %3408 = vmatpush1.bf16.msra.mxu0 %v2876
    %3409 = vmatprep.subr.bf16.mxu0 %v2885
    %3410 = vmatpush1.bf16.msra.mxu0 %v2884
    %3411 = vmatprep.subr.bf16.mxu0 %v2893
    %3412 = vmatpush1.bf16.msra.mxu0 %v2892
    %3413 = vmatprep.subr.bf16.mxu0 %v2901
    %3414 = vmatpush1.bf16.msra.mxu0 %v2900
    %3415 = vmatprep.subr.bf16.mxu0 %v2909
    %3416 = vmatpush1.bf16.msra.mxu0 %v2908
    %3417 = vmatprep.subr.bf16.mxu0 %v2917
    %3418 = vmatpush1.bf16.msra.mxu0 %v2916
    %3419 = vmatprep.subr.bf16.mxu0 %v2925
    %3420 = vmatpush1.bf16.msra.mxu0 %v2924
    %3421 = vmatprep.mubr.bf16.mxu0 %v1647
    %3422 = vmatmul.mubr.bf16.gmra.mrb[0].mxu0 %v1646
    %v3423 = vpop.f32.mrb[0].mxu0
    %v3424 = vadd.f32 %v3383, %v3423
    %v3425 = vpop.f32.mrb[0].mxu0
    %v3426 = vadd.f32 %v3385, %v3425
    %v3427 = vpop.f32.mrb[0].mxu0
    %v3428 = vpop.f32.mrb[0].mxu0
    %3429 = vdwg.mxu0
    %3430 = vmatprep.subr.bf16.mxu0 %v2679
    %3431 = vmatpush1.bf16.msra.mxu0 %v2678
    %3432 = vmatprep.subr.bf16.mxu0 %v2687
    %3433 = vmatpush1.bf16.msra.mxu0 %v2686
    %3434 = vmatprep.subr.bf16.mxu0 %v2695
    %3435 = vmatpush1.bf16.msra.mxu0 %v2694
    %3436 = vmatprep.subr.bf16.mxu0 %v2703
    %3437 = vmatpush1.bf16.msra.mxu0 %v2702
    %3438 = vmatprep.subr.bf16.mxu0 %v2711
    %3439 = vmatpush1.bf16.msra.mxu0 %v2710
    %3440 = vmatprep.subr.bf16.mxu0 %v2719
    %3441 = vmatpush1.bf16.msra.mxu0 %v2718
    %3442 = vmatprep.subr.bf16.mxu0 %v2727
    %3443 = vmatpush1.bf16.msra.mxu0 %v2726
    %3444 = vmatprep.subr.bf16.mxu0 %v2735
    %3445 = vmatpush1.bf16.msra.mxu0 %v2734
    %3446 = vmatprep.subr.bf16.mxu0 %v2743
    %3447 = vmatpush1.bf16.msra.mxu0 %v2742
    %3448 = vmatprep.subr.bf16.mxu0 %v2751
    %3449 = vmatpush1.bf16.msra.mxu0 %v2750
    %3450 = vmatprep.subr.bf16.mxu0 %v2759
    %3451 = vmatpush1.bf16.msra.mxu0 %v2758
    %3452 = vmatprep.subr.bf16.mxu0 %v2767
    %3453 = vmatpush1.bf16.msra.mxu0 %v2766
    %3454 = vmatprep.subr.bf16.mxu0 %v2775
    %3455 = vmatpush1.bf16.msra.mxu0 %v2774
    %3456 = vmatprep.subr.bf16.mxu0 %v2783
    %3457 = vmatpush1.bf16.msra.mxu0 %v2782
    %3458 = vmatprep.subr.bf16.mxu0 %v2791
    %3459 = vmatpush1.bf16.msra.mxu0 %v2790
    %3460 = vmatprep.subr.bf16.mxu0 %v2799
    %3461 = vmatpush1.bf16.msra.mxu0 %v2798
    %3462 = vmatprep.mubr.bf16.mxu0 %v1645
    %3463 = vmatmul.mubr.bf16.gmra.mrb[0].mxu0 %v1644
    %v3464 = vpop.f32.mrb[0].mxu0
    %v3465 = vadd.f32 0.0, %v3464
    %v3466 = vpop.f32.mrb[0].mxu0
    %v3467 = vadd.f32 0.0, %v3466
    %v3468 = vpop.f32.mrb[0].mxu0
    %v3469 = vpop.f32.mrb[0].mxu0
    %3470 = vdwg.mxu0
    %3471 = vmatprep.subr.bf16.mxu0 %v2807
    %3472 = vmatpush1.bf16.msra.mxu0 %v2806
    %3473 = vmatprep.subr.bf16.mxu0 %v2815
    %3474 = vmatpush1.bf16.msra.mxu0 %v2814
    %3475 = vmatprep.subr.bf16.mxu0 %v2823
    %3476 = vmatpush1.bf16.msra.mxu0 %v2822
    %3477 = vmatprep.subr.bf16.mxu0 %v2831
    %3478 = vmatpush1.bf16.msra.mxu0 %v2830
    %3479 = vmatprep.subr.bf16.mxu0 %v2839
    %3480 = vmatpush1.bf16.msra.mxu0 %v2838
    %3481 = vmatprep.subr.bf16.mxu0 %v2847
    %3482 = vmatpush1.bf16.msra.mxu0 %v2846
    %3483 = vmatprep.subr.bf16.mxu0 %v2855
    %3484 = vmatpush1.bf16.msra.mxu0 %v2854
    %3485 = vmatprep.subr.bf16.mxu0 %v2863
    %3486 = vmatpush1.bf16.msra.mxu0 %v2862
    %3487 = vmatprep.subr.bf16.mxu0 %v2871
    %3488 = vmatpush1.bf16.msra.mxu0 %v2870
    %3489 = vmatprep.subr.bf16.mxu0 %v2879
    %3490 = vmatpush1.bf16.msra.mxu0 %v2878
    %3491 = vmatprep.subr.bf16.mxu0 %v2887
    %3492 = vmatpush1.bf16.msra.mxu0 %v2886
    %3493 = vmatprep.subr.bf16.mxu0 %v2895
    %3494 = vmatpush1.bf16.msra.mxu0 %v2894
    %3495 = vmatprep.subr.bf16.mxu0 %v2903
    %3496 = vmatpush1.bf16.msra.mxu0 %v2902
    %3497 = vmatprep.subr.bf16.mxu0 %v2911
    %3498 = vmatpush1.bf16.msra.mxu0 %v2910
    %3499 = vmatprep.subr.bf16.mxu0 %v2919
    %3500 = vmatpush1.bf16.msra.mxu0 %v2918
    %3501 = vmatprep.subr.bf16.mxu0 %v2927
    %3502 = vmatpush1.bf16.msra.mxu0 %v2926
    %3503 = vmatprep.mubr.bf16.mxu0 %v1647
    %3504 = vmatmul.mubr.bf16.gmra.mrb[0].mxu0 %v1646
    %v3505 = vpop.f32.mrb[0].mxu0
    %v3506 = vadd.f32 %v3465, %v3505
    %v3507 = vpop.f32.mrb[0].mxu0
    %v3508 = vadd.f32 %v3467, %v3507
    %v3509 = vpop.f32.mrb[0].mxu0
    %v3510 = vpop.f32.mrb[0].mxu0
    %3511 = vdwg.mxu0
    %v3512 = vmul.f32 %v3260, %v3260
    %v3513 = vmul.f32 %v3262, %v3262
    %v3514 = vmul.f32 %v3342, %v3342
    %v3515 = vmul.f32 %v3344, %v3344
    %v3516 = vmul.f32 %v3424, %v3424
    %v3517 = vmul.f32 %v3426, %v3426
    %v3518 = vmul.f32 %v3506, %v3506
    %v3519 = vmul.f32 %v3508, %v3508
    %v3520 = vadd.f32 %v3512, %v3516
    %v3521 = vadd.f32 %v3513, %v3517
    %v3522 = vadd.f32 %v3514, %v3518
    %v3523 = vadd.f32 %v3515, %v3519
    %v3524 = vld [vmem:[%s6] sm:$0xff]
    %v3525 = vld [vmem:[%s6 + $0x8] sm:$0xff]
    %v3526 = vld [vmem:[%s6 + $0x10] sm:$0xff]
    %v3527 = vld [vmem:[%s6 + $0x18] sm:$0xff]
    %v3528 = vld [vmem:[%s6 + $0x20] sm:$0xff]
    %v3529 = vld [vmem:[%s6 + $0x28] sm:$0xff]
    %v3530 = vld [vmem:[%s6 + $0x30] sm:$0xff]
    %v3531 = vld [vmem:[%s6 + $0x38] sm:$0xff]
    %v3532 = vld [vmem:[%s6 + $0x40] sm:$0xff]
    %v3533 = vld [vmem:[%s6 + $0x48] sm:$0xff]
    %v3534 = vld [vmem:[%s6 + $0x50] sm:$0xff]
    %v3535 = vld [vmem:[%s6 + $0x58] sm:$0xff]
    %v3536 = vld [vmem:[%s6 + $0x60] sm:$0xff]
    %v3537 = vld [vmem:[%s6 + $0x68] sm:$0xff]
    %v3538 = vld [vmem:[%s6 + $0x70] sm:$0xff]
    %v3539 = vld [vmem:[%s6 + $0x78] sm:$0xff]
    %v3540 = vld [vmem:[%s6 + $0x80] sm:$0xff]
    %v3541 = vld [vmem:[%s6 + $0x88] sm:$0xff]
    %v3542 = vld [vmem:[%s6 + $0x90] sm:$0xff]
    %v3543 = vld [vmem:[%s6 + $0x98] sm:$0xff]
    %v3544 = vld [vmem:[%s6 + $0xa0] sm:$0xff]
    %v3545 = vld [vmem:[%s6 + $0xa8] sm:$0xff]
    %v3546 = vld [vmem:[%s6 + $0xb0] sm:$0xff]
    %v3547 = vld [vmem:[%s6 + $0xb8] sm:$0xff]
    %v3548 = vld [vmem:[%s6 + $0xc0] sm:$0xff]
    %v3549 = vld [vmem:[%s6 + $0xc8] sm:$0xff]
    %v3550 = vld [vmem:[%s6 + $0xd0] sm:$0xff]
    %v3551 = vld [vmem:[%s6 + $0xd8] sm:$0xff]
    %v3552 = vld [vmem:[%s6 + $0xe0] sm:$0xff]
    %v3553 = vld [vmem:[%s6 + $0xe8] sm:$0xff]
    %v3554 = vld [vmem:[%s6 + $0xf0] sm:$0xff]
    %v3555 = vld [vmem:[%s6 + $0xf8] sm:$0xff]
    %v3556 = vld [vmem:[%s6 + $0x100] sm:$0xff]
    %v3557 = vld [vmem:[%s6 + $0x108] sm:$0xff]
    %v3558 = vld [vmem:[%s6 + $0x110] sm:$0xff]
    %v3559 = vld [vmem:[%s6 + $0x118] sm:$0xff]
    %v3560 = vld [vmem:[%s6 + $0x120] sm:$0xff]
    %v3561 = vld [vmem:[%s6 + $0x128] sm:$0xff]
    %v3562 = vld [vmem:[%s6 + $0x130] sm:$0xff]
    %v3563 = vld [vmem:[%s6 + $0x138] sm:$0xff]
    %v3564 = vld [vmem:[%s6 + $0x140] sm:$0xff]
    %v3565 = vld [vmem:[%s6 + $0x148] sm:$0xff]
    %v3566 = vld [vmem:[%s6 + $0x150] sm:$0xff]
    %v3567 = vld [vmem:[%s6 + $0x158] sm:$0xff]
    %v3568 = vld [vmem:[%s6 + $0x160] sm:$0xff]
    %v3569 = vld [vmem:[%s6 + $0x168] sm:$0xff]
    %v3570 = vld [vmem:[%s6 + $0x170] sm:$0xff]
    %v3571 = vld [vmem:[%s6 + $0x178] sm:$0xff]
    %v3572 = vld [vmem:[%s6 + $0x180] sm:$0xff]
    %v3573 = vld [vmem:[%s6 + $0x188] sm:$0xff]
    %v3574 = vld [vmem:[%s6 + $0x190] sm:$0xff]
    %v3575 = vld [vmem:[%s6 + $0x198] sm:$0xff]
    %v3576 = vld [vmem:[%s6 + $0x1a0] sm:$0xff]
    %v3577 = vld [vmem:[%s6 + $0x1a8] sm:$0xff]
    %v3578 = vld [vmem:[%s6 + $0x1b0] sm:$0xff]
    %v3579 = vld [vmem:[%s6 + $0x1b8] sm:$0xff]
    %v3580 = vld [vmem:[%s6 + $0x1c0] sm:$0xff]
    %v3581 = vld [vmem:[%s6 + $0x1c8] sm:$0xff]
    %v3582 = vld [vmem:[%s6 + $0x1d0] sm:$0xff]
    %v3583 = vld [vmem:[%s6 + $0x1d8] sm:$0xff]
    %v3584 = vld [vmem:[%s6 + $0x1e0] sm:$0xff]
    %v3585 = vld [vmem:[%s6 + $0x1e8] sm:$0xff]
    %v3586 = vld [vmem:[%s6 + $0x1f0] sm:$0xff]
    %v3587 = vld [vmem:[%s6 + $0x1f8] sm:$0xff]
    %v3588 = vld [vmem:[%s8] sm:$0x1]
    %v3590 = vlaneseq
    %v3591 = vshrl.u32 %v3590, 7
    %v3592 = vsub.s32 0, %v3591
    %v3593 = vrot.slane %v3588, %v3592
    %3595 = vmatprep.subr.mxu0 0.0
    %3596 = vmatpush1.msra.mxu0 %v3524
    %3597 = vmatprep.subr.mxu0 0.0
    %3598 = vmatpush1.msra.mxu0 %v3525
    %3599 = vmatprep.subr.mxu0 0.0
    %3600 = vmatpush1.msra.mxu0 %v3526
    %3601 = vmatprep.subr.mxu0 0.0
    %3602 = vmatpush1.msra.mxu0 %v3527
    %3603 = vmatprep.subr.mxu0 0.0
    %3604 = vmatpush1.msra.mxu0 %v3528
    %3605 = vmatprep.subr.mxu0 0.0
    %3606 = vmatpush1.msra.mxu0 %v3529
    %3607 = vmatprep.subr.mxu0 0.0
    %3608 = vmatpush1.msra.mxu0 %v3530
    %3609 = vmatprep.subr.mxu0 0.0
    %3610 = vmatpush1.msra.mxu0 %v3531
    %3611 = vmatprep.subr.mxu0 0.0
    %3612 = vmatpush1.msra.mxu0 %v3532
    %3613 = vmatprep.subr.mxu0 0.0
    %3614 = vmatpush1.msra.mxu0 %v3533
    %3615 = vmatprep.subr.mxu0 0.0
    %3616 = vmatpush1.msra.mxu0 %v3534
    %3617 = vmatprep.subr.mxu0 0.0
    %3618 = vmatpush1.msra.mxu0 %v3535
    %3619 = vmatprep.subr.mxu0 0.0
    %3620 = vmatpush1.msra.mxu0 %v3536
    %3621 = vmatprep.subr.mxu0 0.0
    %3622 = vmatpush1.msra.mxu0 %v3537
    %3623 = vmatprep.subr.mxu0 0.0
    %3624 = vmatpush1.msra.mxu0 %v3538
    %3625 = vmatprep.subr.mxu0 0.0
    %3626 = vmatpush1.msra.mxu0 %v3539
    %3627 = vmatprep.subr.mxu0 0.0
    %3628 = vmatpush1.msra.mxu0 %v3540
    %3629 = vmatprep.subr.mxu0 0.0
    %3630 = vmatpush1.msra.mxu0 %v3541
    %3631 = vmatprep.subr.mxu0 0.0
    %3632 = vmatpush1.msra.mxu0 %v3542
    %3633 = vmatprep.subr.mxu0 0.0
    %3634 = vmatpush1.msra.mxu0 %v3543
    %3635 = vmatprep.subr.mxu0 0.0
    %3636 = vmatpush1.msra.mxu0 %v3544
    %3637 = vmatprep.subr.mxu0 0.0
    %3638 = vmatpush1.msra.mxu0 %v3545
    %3639 = vmatprep.subr.mxu0 0.0
    %3640 = vmatpush1.msra.mxu0 %v3546
    %3641 = vmatprep.subr.mxu0 0.0
    %3642 = vmatpush1.msra.mxu0 %v3547
    %3643 = vmatprep.subr.mxu0 0.0
    %3644 = vmatpush1.msra.mxu0 %v3548
    %3645 = vmatprep.subr.mxu0 0.0
    %3646 = vmatpush1.msra.mxu0 %v3549
    %3647 = vmatprep.subr.mxu0 0.0
    %3648 = vmatpush1.msra.mxu0 %v3550
    %3649 = vmatprep.subr.mxu0 0.0
    %3650 = vmatpush1.msra.mxu0 %v3551
    %3651 = vmatprep.subr.mxu0 0.0
    %3652 = vmatpush1.msra.mxu0 %v3552
    %3653 = vmatprep.subr.mxu0 0.0
    %3654 = vmatpush1.msra.mxu0 %v3553
    %3655 = vmatprep.subr.mxu0 0.0
    %3656 = vmatpush1.msra.mxu0 %v3554
    %3657 = vmatprep.subr.mxu0 0.0
    %3658 = vmatpush1.msra.mxu0 %v3555
    %3659 = vmatprep.mubr.f32.mxu0 %v3521
    %3660 = vmatmul.mubr.f32.gmra.mrb[0].mxu0 %v3520
    %v3661 = vpop.f32.mrb[0].mxu0
    %v3662 = vadd.f32 %v3593, %v3661
    %v3663 = vpop.f32.mrb[0].mxu0
    %3664 = vdwg.mxu0
    %3665 = vmatprep.subr.mxu0 0.0
    %3666 = vmatpush1.msra.mxu0 %v3556
    %3667 = vmatprep.subr.mxu0 0.0
    %3668 = vmatpush1.msra.mxu0 %v3557
    %3669 = vmatprep.subr.mxu0 0.0
    %3670 = vmatpush1.msra.mxu0 %v3558
    %3671 = vmatprep.subr.mxu0 0.0
    %3672 = vmatpush1.msra.mxu0 %v3559
    %3673 = vmatprep.subr.mxu0 0.0
    %3674 = vmatpush1.msra.mxu0 %v3560
    %3675 = vmatprep.subr.mxu0 0.0
    %3676 = vmatpush1.msra.mxu0 %v3561
    %3677 = vmatprep.subr.mxu0 0.0
    %3678 = vmatpush1.msra.mxu0 %v3562
    %3679 = vmatprep.subr.mxu0 0.0
    %3680 = vmatpush1.msra.mxu0 %v3563
    %3681 = vmatprep.subr.mxu0 0.0
    %3682 = vmatpush1.msra.mxu0 %v3564
    %3683 = vmatprep.subr.mxu0 0.0
    %3684 = vmatpush1.msra.mxu0 %v3565
    %3685 = vmatprep.subr.mxu0 0.0
    %3686 = vmatpush1.msra.mxu0 %v3566
    %3687 = vmatprep.subr.mxu0 0.0
    %3688 = vmatpush1.msra.mxu0 %v3567
    %3689 = vmatprep.subr.mxu0 0.0
    %3690 = vmatpush1.msra.mxu0 %v3568
    %3691 = vmatprep.subr.mxu0 0.0
    %3692 = vmatpush1.msra.mxu0 %v3569
    %3693 = vmatprep.subr.mxu0 0.0
    %3694 = vmatpush1.msra.mxu0 %v3570
    %3695 = vmatprep.subr.mxu0 0.0
    %3696 = vmatpush1.msra.mxu0 %v3571
    %3697 = vmatprep.subr.mxu0 0.0
    %3698 = vmatpush1.msra.mxu0 %v3572
    %3699 = vmatprep.subr.mxu0 0.0
    %3700 = vmatpush1.msra.mxu0 %v3573
    %3701 = vmatprep.subr.mxu0 0.0
    %3702 = vmatpush1.msra.mxu0 %v3574
    %3703 = vmatprep.subr.mxu0 0.0
    %3704 = vmatpush1.msra.mxu0 %v3575
    %3705 = vmatprep.subr.mxu0 0.0
    %3706 = vmatpush1.msra.mxu0 %v3576
    %3707 = vmatprep.subr.mxu0 0.0
    %3708 = vmatpush1.msra.mxu0 %v3577
    %3709 = vmatprep.subr.mxu0 0.0
    %3710 = vmatpush1.msra.mxu0 %v3578
    %3711 = vmatprep.subr.mxu0 0.0
    %3712 = vmatpush1.msra.mxu0 %v3579
    %3713 = vmatprep.subr.mxu0 0.0
    %3714 = vmatpush1.msra.mxu0 %v3580
    %3715 = vmatprep.subr.mxu0 0.0
    %3716 = vmatpush1.msra.mxu0 %v3581
    %3717 = vmatprep.subr.mxu0 0.0
    %3718 = vmatpush1.msra.mxu0 %v3582
    %3719 = vmatprep.subr.mxu0 0.0
    %3720 = vmatpush1.msra.mxu0 %v3583
    %3721 = vmatprep.subr.mxu0 0.0
    %3722 = vmatpush1.msra.mxu0 %v3584
    %3723 = vmatprep.subr.mxu0 0.0
    %3724 = vmatpush1.msra.mxu0 %v3585
    %3725 = vmatprep.subr.mxu0 0.0
    %3726 = vmatpush1.msra.mxu0 %v3586
    %3727 = vmatprep.subr.mxu0 0.0
    %3728 = vmatpush1.msra.mxu0 %v3587
    %3729 = vmatprep.mubr.f32.mxu0 %v3523
    %3730 = vmatmul.mubr.f32.gmra.mrb[0].mxu0 %v3522
    %v3731 = vpop.f32.mrb[0].mxu0
    %v3732 = vadd.f32 %v3662, %v3731
    %v3733 = vpop.f32.mrb[0].mxu0
    %3734 = vdwg.mxu0
    %vm3735 = vcmask 58368
    %3736 = vst.msk [vmem:[#allocation5] sm:$0x3] %vm3735, %v3732
    // Predicated region
    $region42: #{tpu_custom_call.1} parent=1 // pred_check
      _
    $region43: #{tpu_custom_call.1} parent=1 // pred_check_branch
      %3738 = sbr.rel (0) target = $region45
    $region44: #{tpu_custom_call.1} parent=1 // pred_region
      %s3740 = ssub.s32 32, 32
      %3741 = vsyncadd [#allocation4], %s3740
      %s3743 = sshll.u32 [#allocation5], 4
      %s3744 = int_to_ptr.vmem [resolvable:$true] %s3743
      %3746 = dma.vmem_to_hbm [thread:$0]  %s3744, 32, %s9, [#allocation4]
    $region45: #{tpu_custom_call.1} parent=1 // pred_fallthru
      _
    // Predicated region
    $region46: #{tpu_custom_call.1} parent=1 // pred_check
      _
    $region47: #{tpu_custom_call.1} parent=1 // pred_check_branch
      %3748 = sbr.rel (0) target = $region49
    $region48: #{tpu_custom_call.1} parent=1 // pred_region
      %3749 = dma.done [#allocation4], 32
    $region49: #{tpu_custom_call.1} parent=1 // pred_fallthru
      _
    %3750 = vsyncpa [#allocation3], 1
    %3751 = vsyncpa [#allocation4], 1

</llo_original>
